<compile_context>
chip_gen: v7x
topology: tpu7x:2x2x1
jax: 0.10.0
libtpu: 0.0.40
codegen_flags: <defaults>
</compile_context>

<pallas_src>
import functools
import numpy as np
import jax
import jax.numpy as jnp
from jax.experimental import pallas as pl
from jax.experimental.pallas import tpu as pltpu

# ---- config (stands in for args.num_layer / args.input_dim / args.hidden_dim) ----
NUM_LAYER = 2
INPUT_DIM = 8
HIDDEN_DIM = 20   # must be divisible by towers=5 (PNAConv assert)

_NEG = -1e30
_POS = 1e30


# ----------------------------- fused layer kernel ---------------------------------

def _pna_layer_kernel(avg_log,
                      x_ref, sdst_ref, ssrc_ref, a_ref, deg_ref,
                      wpi_ref, wpj_ref, bpre_ref,
                      wpost_ref, bpost_ref, wlin_ref, blin_ref,
                      *args):
    # args = ([wgru, bgru, bn_gamma, bn_beta,] out_ref, acc, mn, mx, xwi, xwj)
    n_scratch = 5
    if len(args) == 4 + 1 + n_scratch:
        (wgru_ref, bgru_ref, bng_ref, bnb_ref,
         o_ref, acc_ref, mn_ref, mx_ref, xwi_ref, xwj_ref) = args
        has_gru = True
    else:
        (o_ref, acc_ref, mn_ref, mx_ref, xwi_ref, xwj_ref) = args
        has_gru = False

    k = pl.program_id(0)
    nk = pl.num_programs(0)
    tf = mn_ref.shape[-1]          # towers * F_in

    @pl.when(k == 0)
    def _init():
        acc_ref[...] = jnp.zeros(acc_ref.shape, jnp.float32)
        mn_ref[...] = jnp.full(mn_ref.shape, _POS, jnp.float32)
        mx_ref[...] = jnp.full(mx_ref.shape, _NEG, jnp.float32)
        # per-node pre-linear projections, computed once and kept resident in VMEM
        xwi_ref[...] = jnp.dot(x_ref[...], wpi_ref[...],
                               preferred_element_type=jnp.float32)
        xwj_ref[...] = jnp.dot(x_ref[...], wpj_ref[...],
                               preferred_element_type=jnp.float32)

    # ---- per-edge messages for this E block, all towers at once -------------------
    # msg[e] = x[dst[e]] @ Wpre_i + x[src[e]] @ Wpre_j + b ; the row gather is the
    # one-hot matmul S @ (x @ W) so it stays on the MXU inside the kernel.
    msg = (jnp.dot(sdst_ref[...], xwi_ref[...], preferred_element_type=jnp.float32)
           + jnp.dot(ssrc_ref[...], xwj_ref[...], preferred_element_type=jnp.float32)
           + bpre_ref[...])                                        # [E_BLK, TF]

    A = a_ref[...]                                                 # [N, E_BLK]
    # fused sum and sum-of-squares: one MXU pass over [msg | msg*msg]
    m2 = jnp.concatenate([msg, msg * msg], axis=-1)                # [E_BLK, 2*TF]
    acc_ref[...] += jnp.dot(A, m2, preferred_element_type=jnp.float32)

    # running min/max over this E block only (bounded [N, E_BLK, TF] temporaries)
    mask = A[:, :, None] > 0.0                                     # [N, E_BLK, 1]
    mb = msg[None, :, :]                                           # [1, E_BLK, TF]
    mx_ref[...] = jnp.maximum(mx_ref[...],
                              jnp.max(jnp.where(mask, mb, _NEG), axis=1))
    mn_ref[...] = jnp.minimum(mn_ref[...],
                              jnp.min(jnp.where(mask, mb, _POS), axis=1))

    @pl.when(k == nk - 1)
    def _finalize():
        deg = deg_ref[...]                                         # [N, 1], clamped >= 1
        acc = acc_ref[...]
        mean = acc[:, :tf] / deg
        var = acc[:, tf:] / deg - mean * mean
        std = jnp.sqrt(jnp.maximum(var, 0.0) + 1e-5)
        # [mean | min | max | std], each block tower-major -> [N, 4*TF]
        agg = jnp.concatenate([mean, mn_ref[...], mx_ref[...], std], axis=-1)
        logd = jnp.log(deg + 1.0)
        amp = logd * (1.0 / avg_log)                               # amplification
        att = avg_log / logd                                       # attenuation
        x = x_ref[...]
        # post-linear input for all towers at once; weight rows were re-ordered at
        # init time to match this layout, so one wide matmul replaces the per-tower
        # [x || agg_t] concats + 5 narrow matmuls.
        big = jnp.concatenate([x, agg, agg * amp, agg * att], axis=-1)
        out_ch = bpost_ref.shape[1]
        if out_ch == 1:
            # width-1 output: lane reduction instead of a 1-column MXU matmul
            post = (jnp.sum(big * wpost_ref[...], axis=-1, keepdims=True)
                    + bpost_ref[...])
            y = post * wlin_ref[...] + blin_ref[...]               # Linear(1, 1)
        else:
            post = (jnp.dot(big, wpost_ref[...], preferred_element_type=jnp.float32)
                    + bpost_ref[...])
            y = (jnp.dot(post, wlin_ref[...], preferred_element_type=jnp.float32)
                 + blin_ref[...])                                  # self.lin

        if not has_gru:
            o_ref[...] = y.astype(o_ref.dtype)                     # readout conv
        else:
            H = out_ch
            # GRUCell(input=x, hidden=y): single matmul against block_diag(Wi, Wh)
            xh = jnp.concatenate([x, y], axis=-1)                  # [N, F_in + H]
            g = (jnp.dot(xh, wgru_ref[...], preferred_element_type=jnp.float32)
                 + bgru_ref[...])                                  # [N, 6H] = [gi | gh]
            gi = g[:, :3 * H]
            gh = g[:, 3 * H:]
            r = jax.nn.sigmoid(gi[:, 0:H] + gh[:, 0:H])
            z = jax.nn.sigmoid(gi[:, H:2 * H] + gh[:, H:2 * H])
            n = jnp.tanh(gi[:, 2 * H:3 * H] + r * gh[:, 2 * H:3 * H])
            hy = (1.0 - z) * n + z * y
            # BatchNorm1d (training-mode batch stats, biased var, eps=1e-5) + ReLU
            mu = jnp.mean(hy, axis=0, keepdims=True)
            var_b = jnp.mean((hy - mu) ** 2, axis=0, keepdims=True)
            xn = (hy - mu) * jax.lax.rsqrt(var_b + 1e-5)
            o_ref[...] = jnp.maximum(xn * bng_ref[...] + bnb_ref[...], 0.0
                                     ).astype(o_ref.dtype)


def pna_layer_call(x, graph, conv, gru=None, bn=None, *, avg_log, e_blk=128):
    """One PNAConv (+ optional GRU+BN+ReLU) as a single pallas_call.

    graph = (s_dst [E_pad, N], s_src [E_pad, N], onehot [N, E_pad], deg [N, 1]).
    The E axis is tiled with the grid ('arbitrary' reduction axis); padded edge
    columns of onehot are zero so they contribute nothing.
    """
    s_dst, s_src, onehot, deg = graph
    N, _ = x.shape
    E_pad = s_dst.shape[0]
    assert E_pad % e_blk == 0
    TF = conv['w_pre_i'].shape[1]
    out_ch = conv['b_post'].shape[0]
    nblk = E_pad // e_blk

    def _rep(a):  # full-array block, resident across the whole grid
        return pl.BlockSpec(a.shape, lambda e: (0, 0))

    inputs = [x, s_dst, s_src, onehot, deg,
              conv['w_pre_i'], conv['w_pre_j'], conv['b_pre'].reshape(1, -1),
              conv['w_post'], conv['b_post'].reshape(1, -1),
              conv['w_lin'], conv['b_lin'].reshape(1, -1)]
    in_specs = [
        _rep(x),
        pl.BlockSpec((e_blk, N), lambda e: (e, 0)),     # s_dst block
        pl.BlockSpec((e_blk, N), lambda e: (e, 0)),     # s_src block
        pl.BlockSpec((N, e_blk), lambda e: (0, e)),     # onehot block
        _rep(deg),
    ] + [_rep(a) for a in inputs[5:]]

    if gru is not None:
        extra = [gru['w'], gru['b'].reshape(1, -1),
                 bn['gamma'].reshape(1, -1), bn['beta'].reshape(1, -1)]
        inputs += extra
        in_specs += [_rep(a) for a in extra]

    return pl.pallas_call(
        functools.partial(_pna_layer_kernel, avg_log),
        out_shape=jax.ShapeDtypeStruct((N, out_ch), jnp.float32),
        grid_spec=pltpu.PrefetchScalarGridSpec(
            num_scalar_prefetch=0,
            grid=(nblk,),
            in_specs=in_specs,
            out_specs=pl.BlockSpec((N, out_ch), lambda e: (0, 0)),
            scratch_shapes=[pltpu.VMEM((N, 2 * TF), jnp.float32),   # sum | sum-sq
                            pltpu.VMEM((N, TF), jnp.float32),       # running min
                            pltpu.VMEM((N, TF), jnp.float32),       # running max
                            pltpu.VMEM((N, TF), jnp.float32),       # x @ Wpre_i
                            pltpu.VMEM((N, TF), jnp.float32)]),     # x @ Wpre_j
        compiler_params=pltpu.CompilerParams(
            dimension_semantics=("arbitrary",)),
    )(*inputs)


# ------------------------------- parameter init ------------------------------------

def _init_linear(key, fan_in, fan_out):
    k1, k2 = jax.random.split(key)
    lim = 1.0 / np.sqrt(fan_in)
    w = jax.random.uniform(k1, (fan_in, fan_out), jnp.float32, -lim, lim)
    b = jax.random.uniform(k2, (fan_out,), jnp.float32, -lim, lim)
    return w, b


def init_pna_conv(key, in_ch, out_ch, towers):
    """PNAConv params, with the post weights pre-packed for the fused kernel layout:
       rows = [x (F)] + 12 blocks (scaler-major, aggregator-minor) of width towers*F,
       each block tower-major; columns = per-tower F_out blocks (block structure)."""
    f_in = in_ch                      # divide_input=False
    f_out = out_ch // towers
    keys = jax.random.split(key, 2 * towers + 1)
    wpre_i, wpre_j, bpre, bpost = [], [], [], []
    w_big = jnp.zeros((f_in + 12 * towers * f_in, out_ch), jnp.float32)
    for t in range(towers):
        w, b = _init_linear(keys[2 * t], 2 * f_in, f_in)          # pre_layers=1
        wpre_i.append(w[:f_in])       # rows acting on x_i (target)
        wpre_j.append(w[f_in:])       # rows acting on x_j (source)
        bpre.append(b)
        w, b = _init_linear(keys[2 * t + 1], 13 * f_in, f_out)    # post_layers=1
        bpost.append(b)
        cs = slice(t * f_out, (t + 1) * f_out)
        w_big = w_big.at[0:f_in, cs].set(w[0:f_in])               # x rows
        for s in range(12):           # (scaler, aggregator) row blocks
            rs = slice(f_in + s * towers * f_in + t * f_in,
                       f_in + s * towers * f_in + (t + 1) * f_in)
            w_big = w_big.at[rs, cs].set(w[f_in + s * f_in: f_in + (s + 1) * f_in])
    lin_w, lin_b = _init_linear(keys[-1], out_ch, out_ch)
    if out_ch == 1:
        w_big = w_big.T               # [1, K] mat-vec form for the width-1 readout
    return dict(
        w_pre_i=jnp.concatenate(wpre_i, axis=1),      # [F_in, towers*F_in]
        w_pre_j=jnp.concatenate(wpre_j, axis=1),
        b_pre=jnp.concatenate(bpre, axis=0),
        w_post=w_big,
        b_post=jnp.concatenate(bpost, axis=0),
        w_lin=lin_w, b_lin=lin_b,
    )


def init_gru(key, in_dim, hid):
    k = 1.0 / np.sqrt(hid)
    k1, k2, k3, k4 = jax.random.split(key, 4)
    wi = jax.random.uniform(k1, (in_dim, 3 * hid), jnp.float32, -k, k)
    wh = jax.random.uniform(k2, (hid, 3 * hid), jnp.float32, -k, k)
    bi = jax.random.uniform(k3, (3 * hid,), jnp.float32, -k, k)
    bh = jax.random.uniform(k4, (3 * hid,), jnp.float32, -k, k)
    w = jax.scipy.linalg.block_diag(wi, wh)           # [in+hid, 6*hid] -> [gi | gh]
    b = jnp.concatenate([bi, bh], axis=0)             # [6*hid]
    return dict(w=w, b=b)


def pna_net_apply(params, x, graph, avg_log, e_blk):
    for layer in params['layers']:
        x = pna_layer_call(x, graph, layer['conv'], layer['gru'], layer['bn'],
                           avg_log=avg_log, e_blk=e_blk)
    return pna_layer_call(x, graph, params['readout'], avg_log=avg_log, e_blk=e_blk)


# ------------------------------------ main ----------------------------------------

if __name__ == "__main__":
    key = jax.random.PRNGKey(0)
    N = 8
    # small directed graph (ring + ring-of-2 + a few extras); every node has in-edges
    src_np = np.array([0, 1, 2, 3, 4, 5, 6, 7, 0, 1, 2, 3, 4, 5, 6, 7, 0, 1, 4, 6],
                      dtype=np.int32)
    dst_np = np.array([1, 2, 3, 4, 5, 6, 7, 0, 2, 3, 4, 5, 6, 7, 0, 1, 3, 5, 7, 2],
                      dtype=np.int32)
    E = int(src_np.shape[0])

    # degree histogram -> avg_deg['log'] exactly as PNAConv.__init__ computes it
    in_deg = np.bincount(dst_np, minlength=N)
    hist = np.bincount(in_deg)
    bins = np.arange(len(hist), dtype=np.float64)
    avg_log = float((np.log(bins + 1.0) * hist).sum() / hist.sum())

    # dense one-hot gather/scatter matrices, edge axis padded to a 128 multiple so
    # it can be tiled by the reduction grid.  Padded edges have all-zero one-hot
    # rows/columns -> they contribute nothing to sum/min/max.
    # TODO(synk): for realistic graph sizes replace these O(N*E) dense matrices with
    # scalar-prefetched, destination-sorted edge segments (streaming O(E*F) reduce).
    E_BLK = 128
    E_pad = ((E + E_BLK - 1) // E_BLK) * E_BLK
    s_dst_np = np.zeros((E_pad, N), np.float32)
    s_src_np = np.zeros((E_pad, N), np.float32)
    s_dst_np[np.arange(E), dst_np] = 1.0
    s_src_np[np.arange(E), src_np] = 1.0
    s_dst = jnp.asarray(s_dst_np)
    s_src = jnp.asarray(s_src_np)
    onehot = jnp.asarray(np.ascontiguousarray(s_dst_np.T))          # [N, E_pad]
    deg = jnp.asarray(np.maximum(in_deg, 1).astype(np.float32).reshape(N, 1))
    graph = (s_dst, s_src, onehot, deg)

    kx, kp = jax.random.split(key)
    x = jax.random.normal(kx, (N, INPUT_DIM), jnp.float32)

    keys = jax.random.split(kp, 2 * NUM_LAYER + 1)
    layers = []
    for i in range(NUM_LAYER):
        in_ch = INPUT_DIM if i == 0 else HIDDEN_DIM
        towers = 1 if i == 0 else 5
        conv = init_pna_conv(keys[2 * i], in_ch, HIDDEN_DIM, towers)
        gru = init_gru(keys[2 * i + 1], in_ch, HIDDEN_DIM)
        layers.append(dict(conv=conv, gru=gru,
                           bn=dict(gamma=jnp.ones((HIDDEN_DIM,), jnp.float32),
                                   beta=jnp.zeros((HIDDEN_DIM,), jnp.float32))))
    readout = init_pna_conv(keys[-1], HIDDEN_DIM, 1, 1)
    params = dict(layers=layers, readout=readout)

    out = pna_net_apply(params, x, graph, avg_log, E_BLK)
    out = jax.block_until_ready(out)
    assert out.shape == (N, 1) and bool(jnp.all(jnp.isfinite(out)))
    print("KERNEL_OK")
</pallas_src>

<mosaic_0001>
module attributes {stable_mosaic.version = 11 : i64} {
  func.func @_pna_layer_kernel(%arg0: i32, %arg1: memref<8x8xf32, #tpu.memory_space<vmem>>, %arg2: memref<128x8xf32, #tpu.memory_space<vmem>>, %arg3: memref<128x8xf32, #tpu.memory_space<vmem>>, %arg4: memref<8x128xf32, #tpu.memory_space<vmem>>, %arg5: memref<8x1xf32, #tpu.memory_space<vmem>>, %arg6: memref<8x8xf32, #tpu.memory_space<vmem>>, %arg7: memref<8x8xf32, #tpu.memory_space<vmem>>, %arg8: memref<1x8xf32, #tpu.memory_space<vmem>>, %arg9: memref<104x20xf32, #tpu.memory_space<vmem>>, %arg10: memref<1x20xf32, #tpu.memory_space<vmem>>, %arg11: memref<20x20xf32, #tpu.memory_space<vmem>>, %arg12: memref<1x20xf32, #tpu.memory_space<vmem>>, %arg13: memref<28x120xf32, #tpu.memory_space<vmem>>, %arg14: memref<1x120xf32, #tpu.memory_space<vmem>>, %arg15: memref<1x20xf32, #tpu.memory_space<vmem>>, %arg16: memref<1x20xf32, #tpu.memory_space<vmem>>, %arg17: memref<8x20xf32, #tpu.memory_space<vmem>>, %arg18: memref<8x16xf32, #tpu.memory_space<vmem>>, %arg19: memref<8x8xf32, #tpu.memory_space<vmem>>, %arg20: memref<8x8xf32, #tpu.memory_space<vmem>>, %arg21: memref<8x8xf32, #tpu.memory_space<vmem>>, %arg22: memref<8x8xf32, #tpu.memory_space<vmem>>) attributes {dimension_semantics = [#tpu.dimension_semantics<arbitrary>], iteration_bounds = array<i64: 1>, scalar_prefetch = 0 : i64, scratch_operands = 5 : i64, tpu.core_type = #tpu.core_type<tc>, window_params = [{pipeline_mode = #tpu.pipeline_mode<synchronous>, transform_indices = @transform_0, window_bounds = array<i64: 8, 8>}, {transform_indices = @transform_1, window_bounds = array<i64: 128, 8>}, {transform_indices = @transform_2, window_bounds = array<i64: 128, 8>}, {transform_indices = @transform_3, window_bounds = array<i64: 8, 128>}, {pipeline_mode = #tpu.pipeline_mode<synchronous>, transform_indices = @transform_4, window_bounds = array<i64: 8, 1>}, {pipeline_mode = #tpu.pipeline_mode<synchronous>, transform_indices = @transform_5, window_bounds = array<i64: 8, 8>}, {pipeline_mode = #tpu.pipeline_mode<synchronous>, transform_indices = @transform_6, window_bounds = array<i64: 8, 8>}, {pipeline_mode = #tpu.pipeline_mode<synchronous>, transform_indices = @transform_7, window_bounds = array<i64: 1, 8>}, {pipeline_mode = #tpu.pipeline_mode<synchronous>, transform_indices = @transform_8, window_bounds = array<i64: 104, 20>}, {pipeline_mode = #tpu.pipeline_mode<synchronous>, transform_indices = @transform_9, window_bounds = array<i64: 1, 20>}, {pipeline_mode = #tpu.pipeline_mode<synchronous>, transform_indices = @transform_10, window_bounds = array<i64: 20, 20>}, {pipeline_mode = #tpu.pipeline_mode<synchronous>, transform_indices = @transform_11, window_bounds = array<i64: 1, 20>}, {pipeline_mode = #tpu.pipeline_mode<synchronous>, transform_indices = @transform_12, window_bounds = array<i64: 28, 120>}, {pipeline_mode = #tpu.pipeline_mode<synchronous>, transform_indices = @transform_13, window_bounds = array<i64: 1, 120>}, {pipeline_mode = #tpu.pipeline_mode<synchronous>, transform_indices = @transform_14, window_bounds = array<i64: 1, 20>}, {pipeline_mode = #tpu.pipeline_mode<synchronous>, transform_indices = @transform_15, window_bounds = array<i64: 1, 20>}, {pipeline_mode = #tpu.pipeline_mode<synchronous>, transform_indices = @transform_16, window_bounds = array<i64: 8, 20>}]} {
    %c0_i32 = arith.constant 0 : i32
    %0 = arith.cmpi eq, %arg0, %c0_i32 : i32
    %1 = arith.extui %0 : i1 to i32
    %c0_i32_0 = arith.constant 0 : i32
    %2 = arith.cmpi ne, %1, %c0_i32_0 : i32
    scf.if %2 {
      %cst_33 = arith.constant 0.000000e+00 : f32
      %47 = vector.broadcast %cst_33 : f32 to vector<8x16xf32>
      %c0_34 = arith.constant 0 : index
      %c0_35 = arith.constant 0 : index
      %48 = vector.load %arg18[%c0_34, %c0_35] : memref<8x16xf32, #tpu.memory_space<vmem>>, vector<8x16xf32>
      tpu.vector_store %arg18[%c0_34, %c0_35], %47 {strides = array<i32>} : memref<8x16xf32, #tpu.memory_space<vmem>>, vector<8x16xf32>,
      %cst_36 = arith.constant 1.000000e+30 : f32
      %49 = vector.broadcast %cst_36 : f32 to vector<8x8xf32>
      %c0_37 = arith.constant 0 : index
      %c0_38 = arith.constant 0 : index
      %50 = vector.load %arg19[%c0_37, %c0_38] : memref<8x8xf32, #tpu.memory_space<vmem>>, vector<8x8xf32>
      tpu.vector_store %arg19[%c0_37, %c0_38], %49 {strides = array<i32>} : memref<8x8xf32, #tpu.memory_space<vmem>>, vector<8x8xf32>,
      %cst_39 = arith.constant -1.000000e+30 : f32
      %51 = vector.broadcast %cst_39 : f32 to vector<8x8xf32>
      %c0_40 = arith.constant 0 : index
      %c0_41 = arith.constant 0 : index
      %52 = vector.load %arg20[%c0_40, %c0_41] : memref<8x8xf32, #tpu.memory_space<vmem>>, vector<8x8xf32>
      tpu.vector_store %arg20[%c0_40, %c0_41], %51 {strides = array<i32>} : memref<8x8xf32, #tpu.memory_space<vmem>>, vector<8x8xf32>,
      %c0_42 = arith.constant 0 : index
      %c0_43 = arith.constant 0 : index
      %53 = vector.load %arg1[%c0_42, %c0_43] : memref<8x8xf32, #tpu.memory_space<vmem>>, vector<8x8xf32>
      %c0_44 = arith.constant 0 : index
      %c0_45 = arith.constant 0 : index
      %54 = vector.load %arg6[%c0_44, %c0_45] : memref<8x8xf32, #tpu.memory_space<vmem>>, vector<8x8xf32>
      %cst_46 = arith.constant dense<0.000000e+00> : vector<8x8xf32>
      %55 = tpu.matmul %53, %54, %cst_46 {dimension_numbers = #tpu.dot_dimension_numbers<[1], [0], [0], [1], [0, 0, 1, 1], [], []>} : vector<8x8xf32>, vector<8x8xf32>, vector<8x8xf32> -> vector<8x8xf32>
      %c0_47 = arith.constant 0 : index
      %c0_48 = arith.constant 0 : index
      %56 = vector.load %arg21[%c0_47, %c0_48] : memref<8x8xf32, #tpu.memory_space<vmem>>, vector<8x8xf32>
      tpu.vector_store %arg21[%c0_47, %c0_48], %55 {strides = array<i32>} : memref<8x8xf32, #tpu.memory_space<vmem>>, vector<8x8xf32>,
      %c0_49 = arith.constant 0 : index
      %c0_50 = arith.constant 0 : index
      %57 = vector.load %arg1[%c0_49, %c0_50] : memref<8x8xf32, #tpu.memory_space<vmem>>, vector<8x8xf32>
      %c0_51 = arith.constant 0 : index
      %c0_52 = arith.constant 0 : index
      %58 = vector.load %arg7[%c0_51, %c0_52] : memref<8x8xf32, #tpu.memory_space<vmem>>, vector<8x8xf32>
      %cst_53 = arith.constant dense<0.000000e+00> : vector<8x8xf32>
      %59 = tpu.matmul %57, %58, %cst_53 {dimension_numbers = #tpu.dot_dimension_numbers<[1], [0], [0], [1], [0, 0, 1, 1], [], []>} : vector<8x8xf32>, vector<8x8xf32>, vector<8x8xf32> -> vector<8x8xf32>
      %c0_54 = arith.constant 0 : index
      %c0_55 = arith.constant 0 : index
      %60 = vector.load %arg22[%c0_54, %c0_55] : memref<8x8xf32, #tpu.memory_space<vmem>>, vector<8x8xf32>
      tpu.vector_store %arg22[%c0_54, %c0_55], %59 {strides = array<i32>} : memref<8x8xf32, #tpu.memory_space<vmem>>, vector<8x8xf32>,
    } else {
    }
    %c0 = arith.constant 0 : index
    %c0_1 = arith.constant 0 : index
    %3 = vector.load %arg2[%c0, %c0_1] : memref<128x8xf32, #tpu.memory_space<vmem>>, vector<128x8xf32>
    %c0_2 = arith.constant 0 : index
    %c0_3 = arith.constant 0 : index
    %4 = vector.load %arg21[%c0_2, %c0_3] : memref<8x8xf32, #tpu.memory_space<vmem>>, vector<8x8xf32>
    %cst = arith.constant dense<0.000000e+00> : vector<128x8xf32>
    %5 = tpu.matmul %3, %4, %cst {dimension_numbers = #tpu.dot_dimension_numbers<[1], [0], [0], [1], [0, 0, 1, 1], [], []>} : vector<128x8xf32>, vector<8x8xf32>, vector<128x8xf32> -> vector<128x8xf32>
    %c0_4 = arith.constant 0 : index
    %c0_5 = arith.constant 0 : index
    %6 = vector.load %arg3[%c0_4, %c0_5] : memref<128x8xf32, #tpu.memory_space<vmem>>, vector<128x8xf32>
    %c0_6 = arith.constant 0 : index
    %c0_7 = arith.constant 0 : index
    %7 = vector.load %arg22[%c0_6, %c0_7] : memref<8x8xf32, #tpu.memory_space<vmem>>, vector<8x8xf32>
    %cst_8 = arith.constant dense<0.000000e+00> : vector<128x8xf32>
    %8 = tpu.matmul %6, %7, %cst_8 {dimension_numbers = #tpu.dot_dimension_numbers<[1], [0], [0], [1], [0, 0, 1, 1], [], []>} : vector<128x8xf32>, vector<8x8xf32>, vector<128x8xf32> -> vector<128x8xf32>
    %9 = arith.addf %5, %8 : vector<128x8xf32>
    %c0_9 = arith.constant 0 : index
    %c0_10 = arith.constant 0 : index
    %10 = vector.load %arg8[%c0_9, %c0_10] : memref<1x8xf32, #tpu.memory_space<vmem>>, vector<1x8xf32>
    %11 = vector.broadcast %10 : vector<1x8xf32> to vector<128x8xf32>
    %12 = arith.addf %9, %11 : vector<128x8xf32>
    %c0_11 = arith.constant 0 : index
    %c0_12 = arith.constant 0 : index
    %13 = vector.load %arg4[%c0_11, %c0_12] : memref<8x128xf32, #tpu.memory_space<vmem>>, vector<8x128xf32>
    %14 = arith.mulf %12, %12 : vector<128x8xf32>
    %15 = tpu.concatenate %12, %14 in 1 : vector<128x8xf32>, vector<128x8xf32> -> vector<128x16xf32>
    %c0_13 = arith.constant 0 : index
    %c0_14 = arith.constant 0 : index
    %16 = vector.load %arg18[%c0_13, %c0_14] : memref<8x16xf32, #tpu.memory_space<vmem>>, vector<8x16xf32>
    %cst_15 = arith.constant dense<0.000000e+00> : vector<8x16xf32>
    %17 = tpu.matmul %13, %15, %cst_15 {dimension_numbers = #tpu.dot_dimension_numbers<[1], [0], [0], [1], [0, 0, 1, 1], [], []>} : vector<8x128xf32>, vector<128x16xf32>, vector<8x16xf32> -> vector<8x16xf32>
    %18 = arith.addf %16, %17 : vector<8x16xf32>
    %c0_16 = arith.constant 0 : index
    %c0_17 = arith.constant 0 : index
    %19 = vector.load %arg18[%c0_16, %c0_17] : memref<8x16xf32, #tpu.memory_space<vmem>>, vector<8x16xf32>
    tpu.vector_store %arg18[%c0_16, %c0_17], %18 {strides = array<i32>} : memref<8x16xf32, #tpu.memory_space<vmem>>, vector<8x16xf32>,
    %20 = vector.shape_cast %13 : vector<8x128xf32> to vector<8x128x1xf32>
    %cst_18 = arith.constant 0.000000e+00 : f32
    %21 = vector.broadcast %cst_18 : f32 to vector<8x128x1xf32>
    %22 = arith.cmpf ogt, %20, %21 : vector<8x128x1xf32>
    %23 = vector.shape_cast %12 : vector<128x8xf32> to vector<1x128x8xf32>
    %c0_19 = arith.constant 0 : index
    %c0_20 = arith.constant 0 : index
    %24 = vector.load %arg20[%c0_19, %c0_20] : memref<8x8xf32, #tpu.memory_space<vmem>>, vector<8x8xf32>
    %cst_21 = arith.constant -1.000000e+30 : f32
    %25 = vector.shape_cast %22 : vector<8x128x1xi1> to vector<8x128x1xi1>
    %26 = vector.broadcast %25 : vector<8x128x1xi1> to vector<8x128x8xi1>
    %27 = vector.shape_cast %23 : vector<1x128x8xf32> to vector<1x128x8xf32>
    %28 = vector.broadcast %27 : vector<1x128x8xf32> to vector<8x128x8xf32>
    %29 = vector.broadcast %cst_21 : f32 to vector<8x128x8xf32>
    %30 = arith.select %26, %28, %29 : vector<8x128x8xi1>, vector<8x128x8xf32>
    %cst_22 = arith.constant dense<0xFF800000> : vector<8x8xf32>
    %31 = vector.multi_reduction <maximumf>, %30, %cst_22 [1] : vector<8x128x8xf32> to vector<8x8xf32>
    %32 = arith.maximumf %24, %31 : vector<8x8xf32>
    %c0_23 = arith.constant 0 : index
    %c0_24 = arith.constant 0 : index
    %33 = vector.load %arg20[%c0_23, %c0_24] : memref<8x8xf32, #tpu.memory_space<vmem>>, vector<8x8xf32>
    tpu.vector_store %arg20[%c0_23, %c0_24], %32 {strides = array<i32>} : memref<8x8xf32, #tpu.memory_space<vmem>>, vector<8x8xf32>,
    %c0_25 = arith.constant 0 : index
    %c0_26 = arith.constant 0 : index
    %34 = vector.load %arg19[%c0_25, %c0_26] : memref<8x8xf32, #tpu.memory_space<vmem>>, vector<8x8xf32>
    %cst_27 = arith.constant 1.000000e+30 : f32
    %35 = vector.shape_cast %22 : vector<8x128x1xi1> to vector<8x128x1xi1>
    %36 = vector.broadcast %35 : vector<8x128x1xi1> to vector<8x128x8xi1>
    %37 = vector.shape_cast %23 : vector<1x128x8xf32> to vector<1x128x8xf32>
    %38 = vector.broadcast %37 : vector<1x128x8xf32> to vector<8x128x8xf32>
    %39 = vector.broadcast %cst_27 : f32 to vector<8x128x8xf32>
    %40 = arith.select %36, %38, %39 : vector<8x128x8xi1>, vector<8x128x8xf32>
    %cst_28 = arith.constant dense<0x7F800000> : vector<8x8xf32>
    %41 = vector.multi_reduction <minimumf>, %40, %cst_28 [1] : vector<8x128x8xf32> to vector<8x8xf32>
    %42 = arith.minimumf %34, %41 : vector<8x8xf32>
    %c0_29 = arith.constant 0 : index
    %c0_30 = arith.constant 0 : index
    %43 = vector.load %arg19[%c0_29, %c0_30] : memref<8x8xf32, #tpu.memory_space<vmem>>, vector<8x8xf32>
    tpu.vector_store %arg19[%c0_29, %c0_30], %42 {strides = array<i32>} : memref<8x8xf32, #tpu.memory_space<vmem>>, vector<8x8xf32>,
    %c0_i32_31 = arith.constant 0 : i32
    %44 = arith.cmpi eq, %arg0, %c0_i32_31 : i32
    %45 = arith.extui %44 : i1 to i32
    %c0_i32_32 = arith.constant 0 : i32
    %46 = arith.cmpi ne, %45, %c0_i32_32 : i32
    scf.if %46 {
      %c0_33 = arith.constant 0 : index
      %c0_34 = arith.constant 0 : index
      %47 = vector.load %arg5[%c0_33, %c0_34] : memref<8x1xf32, #tpu.memory_space<vmem>>, vector<8x1xf32>
      %c0_35 = arith.constant 0 : index
      %c0_36 = arith.constant 0 : index
      %48 = vector.load %arg18[%c0_35, %c0_36] : memref<8x16xf32, #tpu.memory_space<vmem>>, vector<8x16xf32>
      %49 = vector.extract_strided_slice %48 {offsets = [0, 0], sizes = [8, 8], strides = [1, 1]} : vector<8x16xf32> to vector<8x8xf32>
      %50 = vector.broadcast %47 : vector<8x1xf32> to vector<8x8xf32>
      %51 = arith.divf %49, %50 : vector<8x8xf32>
      %52 = vector.extract_strided_slice %48 {offsets = [0, 8], sizes = [8, 8], strides = [1, 1]} : vector<8x16xf32> to vector<8x8xf32>
      %53 = vector.broadcast %47 : vector<8x1xf32> to vector<8x8xf32>
      %54 = arith.divf %52, %53 : vector<8x8xf32>
      %55 = arith.mulf %51, %51 : vector<8x8xf32>
      %56 = arith.subf %54, %55 : vector<8x8xf32>
      %cst_37 = arith.constant 0.000000e+00 : f32
      %57 = vector.broadcast %cst_37 : f32 to vector<8x8xf32>
      %58 = arith.maximumf %56, %57 : vector<8x8xf32>
      %cst_38 = arith.constant 9.99999974E-6 : f32
      %59 = vector.broadcast %cst_38 : f32 to vector<8x8xf32>
      %60 = arith.addf %58, %59 : vector<8x8xf32>
      %61 = math.sqrt %60 : vector<8x8xf32>
      %c0_39 = arith.constant 0 : index
      %c0_40 = arith.constant 0 : index
      %62 = vector.load %arg19[%c0_39, %c0_40] : memref<8x8xf32, #tpu.memory_space<vmem>>, vector<8x8xf32>
      %c0_41 = arith.constant 0 : index
      %c0_42 = arith.constant 0 : index
      %63 = vector.load %arg20[%c0_41, %c0_42] : memref<8x8xf32, #tpu.memory_space<vmem>>, vector<8x8xf32>
      %64 = tpu.concatenate %51, %62, %63, %61 in 1 : vector<8x8xf32>, vector<8x8xf32>, vector<8x8xf32>, vector<8x8xf32> -> vector<8x32xf32>
      %cst_43 = arith.constant 1.000000e+00 : f32
      %65 = vector.broadcast %cst_43 : f32 to vector<8x1xf32>
      %66 = arith.addf %47, %65 : vector<8x1xf32>
      %67 = math.log %66 : vector<8x1xf32>
      %cst_44 = arith.constant 0.80485922 : f32
      %68 = vector.broadcast %cst_44 : f32 to vector<8x1xf32>
      %69 = arith.mulf %67, %68 : vector<8x1xf32>
      %cst_45 = arith.constant 1.24245334 : f32
      %70 = vector.broadcast %cst_45 : f32 to vector<8x1xf32>
      %71 = arith.divf %70, %67 : vector<8x1xf32>
      %c0_46 = arith.constant 0 : index
      %c0_47 = arith.constant 0 : index
      %72 = vector.load %arg1[%c0_46, %c0_47] : memref<8x8xf32, #tpu.memory_space<vmem>>, vector<8x8xf32>
      %73 = vector.broadcast %69 : vector<8x1xf32> to vector<8x32xf32>
      %74 = arith.mulf %64, %73 : vector<8x32xf32>
      %75 = vector.broadcast %71 : vector<8x1xf32> to vector<8x32xf32>
      %76 = arith.mulf %64, %75 : vector<8x32xf32>
      %77 = tpu.concatenate %72, %64, %74, %76 in 1 : vector<8x8xf32>, vector<8x32xf32>, vector<8x32xf32>, vector<8x32xf32> -> vector<8x104xf32>
      %c0_48 = arith.constant 0 : index
      %c0_49 = arith.constant 0 : index
      %78 = vector.load %arg9[%c0_48, %c0_49] : memref<104x20xf32, #tpu.memory_space<vmem>>, vector<104x20xf32>
      %cst_50 = arith.constant dense<0.000000e+00> : vector<8x20xf32>
      %79 = tpu.matmul %77, %78, %cst_50 {dimension_numbers = #tpu.dot_dimension_numbers<[1], [0], [0], [1], [0, 0, 1, 1], [], []>} : vector<8x104xf32>, vector<104x20xf32>, vector<8x20xf32> -> vector<8x20xf32>
      %c0_51 = arith.constant 0 : index
      %c0_52 = arith.constant 0 : index
      %80 = vector.load %arg10[%c0_51, %c0_52] : memref<1x20xf32, #tpu.memory_space<vmem>>, vector<1x20xf32>
      %81 = vector.broadcast %80 : vector<1x20xf32> to vector<8x20xf32>
      %82 = arith.addf %79, %81 : vector<8x20xf32>
      %c0_53 = arith.constant 0 : index
      %c0_54 = arith.constant 0 : index
      %83 = vector.load %arg11[%c0_53, %c0_54] : memref<20x20xf32, #tpu.memory_space<vmem>>, vector<20x20xf32>
      %cst_55 = arith.constant dense<0.000000e+00> : vector<8x20xf32>
      %84 = tpu.matmul %82, %83, %cst_55 {dimension_numbers = #tpu.dot_dimension_numbers<[1], [0], [0], [1], [0, 0, 1, 1], [], []>} : vector<8x20xf32>, vector<20x20xf32>, vector<8x20xf32> -> vector<8x20xf32>
      %c0_56 = arith.constant 0 : index
      %c0_57 = arith.constant 0 : index
      %85 = vector.load %arg12[%c0_56, %c0_57] : memref<1x20xf32, #tpu.memory_space<vmem>>, vector<1x20xf32>
      %86 = vector.broadcast %85 : vector<1x20xf32> to vector<8x20xf32>
      %87 = arith.addf %84, %86 : vector<8x20xf32>
      %88 = tpu.concatenate %72, %87 in 1 : vector<8x8xf32>, vector<8x20xf32> -> vector<8x28xf32>
      %c0_58 = arith.constant 0 : index
      %c0_59 = arith.constant 0 : index
      %89 = vector.load %arg13[%c0_58, %c0_59] : memref<28x120xf32, #tpu.memory_space<vmem>>, vector<28x120xf32>
      %cst_60 = arith.constant dense<0.000000e+00> : vector<8x120xf32>
      %90 = tpu.matmul %88, %89, %cst_60 {dimension_numbers = #tpu.dot_dimension_numbers<[1], [0], [0], [1], [0, 0, 1, 1], [], []>} : vector<8x28xf32>, vector<28x120xf32>, vector<8x120xf32> -> vector<8x120xf32>
      %c0_61 = arith.constant 0 : index
      %c0_62 = arith.constant 0 : index
      %91 = vector.load %arg14[%c0_61, %c0_62] : memref<1x120xf32, #tpu.memory_space<vmem>>, vector<1x120xf32>
      %92 = vector.broadcast %91 : vector<1x120xf32> to vector<8x120xf32>
      %93 = arith.addf %90, %92 : vector<8x120xf32>
      %94 = vector.extract_strided_slice %93 {offsets = [0, 0], sizes = [8, 60], strides = [1, 1]} : vector<8x120xf32> to vector<8x60xf32>
      %95 = vector.extract_strided_slice %93 {offsets = [0, 60], sizes = [8, 60], strides = [1, 1]} : vector<8x120xf32> to vector<8x60xf32>
      %96 = vector.extract_strided_slice %94 {offsets = [0, 0], sizes = [8, 20], strides = [1, 1]} : vector<8x60xf32> to vector<8x20xf32>
      %97 = vector.extract_strided_slice %95 {offsets = [0, 0], sizes = [8, 20], strides = [1, 1]} : vector<8x60xf32> to vector<8x20xf32>
      %98 = arith.addf %96, %97 : vector<8x20xf32>
      %99 = arith.negf %98 : vector<8x20xf32>
      %100 = math.exp %99 : vector<8x20xf32>
      %cst_63 = arith.constant 1.000000e+00 : f32
      %101 = vector.broadcast %cst_63 : f32 to vector<8x20xf32>
      %102 = arith.addf %101, %100 : vector<8x20xf32>
      %103 = arith.divf %101, %102 : vector<8x20xf32>
      %104 = vector.extract_strided_slice %94 {offsets = [0, 20], sizes = [8, 20], strides = [1, 1]} : vector<8x60xf32> to vector<8x20xf32>
      %105 = vector.extract_strided_slice %95 {offsets = [0, 20], sizes = [8, 20], strides = [1, 1]} : vector<8x60xf32> to vector<8x20xf32>
      %106 = arith.addf %104, %105 : vector<8x20xf32>
      %107 = arith.negf %106 : vector<8x20xf32>
      %108 = math.exp %107 : vector<8x20xf32>
      %cst_64 = arith.constant 1.000000e+00 : f32
      %109 = vector.broadcast %cst_64 : f32 to vector<8x20xf32>
      %110 = arith.addf %109, %108 : vector<8x20xf32>
      %111 = arith.divf %109, %110 : vector<8x20xf32>
      %112 = vector.extract_strided_slice %94 {offsets = [0, 40], sizes = [8, 20], strides = [1, 1]} : vector<8x60xf32> to vector<8x20xf32>
      %113 = vector.extract_strided_slice %95 {offsets = [0, 40], sizes = [8, 20], strides = [1, 1]} : vector<8x60xf32> to vector<8x20xf32>
      %114 = arith.mulf %103, %113 : vector<8x20xf32>
      %115 = arith.addf %112, %114 : vector<8x20xf32>
      %116 = math.tanh %115 : vector<8x20xf32>
      %cst_65 = arith.constant 1.000000e+00 : f32
      %117 = vector.broadcast %cst_65 : f32 to vector<8x20xf32>
      %118 = arith.subf %117, %111 : vector<8x20xf32>
      %119 = arith.mulf %118, %116 : vector<8x20xf32>
      %120 = arith.mulf %111, %87 : vector<8x20xf32>
      %121 = arith.addf %119, %120 : vector<8x20xf32>
      %cst_66 = arith.constant dense<0.000000e+00> : vector<20xf32>
      %122 = vector.multi_reduction <add>, %121, %cst_66 [0] : vector<8x20xf32> to vector<20xf32>
      %123 = vector.shape_cast %122 : vector<20xf32> to vector<1x20xf32>
      %cst_67 = arith.constant 8.000000e+00 : f32
      %124 = vector.broadcast %cst_67 : f32 to vector<1x20xf32>
      %125 = arith.divf %123, %124 : vector<1x20xf32>
      %126 = vector.broadcast %125 : vector<1x20xf32> to vector<8x20xf32>
      %127 = arith.subf %121, %126 : vector<8x20xf32>
      %128 = arith.mulf %127, %127 : vector<8x20xf32>
      %cst_68 = arith.constant dense<0.000000e+00> : vector<20xf32>
      %129 = vector.multi_reduction <add>, %128, %cst_68 [0] : vector<8x20xf32> to vector<20xf32>
      %130 = vector.shape_cast %129 : vector<20xf32> to vector<1x20xf32>
      %cst_69 = arith.constant 8.000000e+00 : f32
      %131 = vector.broadcast %cst_69 : f32 to vector<1x20xf32>
      %132 = arith.divf %130, %131 : vector<1x20xf32>
      %133 = vector.broadcast %125 : vector<1x20xf32> to vector<8x20xf32>
      %134 = arith.subf %121, %133 : vector<8x20xf32>
      %cst_70 = arith.constant 9.99999974E-6 : f32
      %135 = vector.broadcast %cst_70 : f32 to vector<1x20xf32>
      %136 = arith.addf %132, %135 : vector<1x20xf32>
      %137 = math.rsqrt %136 : vector<1x20xf32>
      %138 = vector.broadcast %137 : vector<1x20xf32> to vector<8x20xf32>
      %139 = arith.mulf %134, %138 : vector<8x20xf32>
      %c0_71 = arith.constant 0 : index
      %c0_72 = arith.constant 0 : index
      %140 = vector.load %arg15[%c0_71, %c0_72] : memref<1x20xf32, #tpu.memory_space<vmem>>, vector<1x20xf32>
      %141 = vector.broadcast %140 : vector<1x20xf32> to vector<8x20xf32>
      %142 = arith.mulf %139, %141 : vector<8x20xf32>
      %c0_73 = arith.constant 0 : index
      %c0_74 = arith.constant 0 : index
      %143 = vector.load %arg16[%c0_73, %c0_74] : memref<1x20xf32, #tpu.memory_space<vmem>>, vector<1x20xf32>
      %144 = vector.broadcast %143 : vector<1x20xf32> to vector<8x20xf32>
      %145 = arith.addf %142, %144 : vector<8x20xf32>
      %cst_75 = arith.constant 0.000000e+00 : f32
      %146 = vector.broadcast %cst_75 : f32 to vector<8x20xf32>
      %147 = arith.maximumf %145, %146 : vector<8x20xf32>
      %c0_76 = arith.constant 0 : index
      %c0_77 = arith.constant 0 : index
      %148 = vector.load %arg17[%c0_76, %c0_77] : memref<8x20xf32, #tpu.memory_space<vmem>>, vector<8x20xf32>
      tpu.vector_store %arg17[%c0_76, %c0_77], %147 {strides = array<i32>} : memref<8x20xf32, #tpu.memory_space<vmem>>, vector<8x20xf32>,
    } else {
    }
    return
  }
  func.func @transform_0(%arg0: i32) -> (i32, i32) {
    %c0_i32 = arith.constant 0 : i32
    %c0_i32_0 = arith.constant 0 : i32
    %c0_i32_1 = arith.constant 0 : i32
    return %c0_i32, %c0_i32_0 : i32, i32
  }
  func.func @transform_1(%arg0: i32) -> (i32, i32) {
    %c0_i32 = arith.constant 0 : i32
    %c0_i32_0 = arith.constant 0 : i32
    return %arg0, %c0_i32 : i32, i32
  }
  func.func @transform_2(%arg0: i32) -> (i32, i32) {
    %c0_i32 = arith.constant 0 : i32
    %c0_i32_0 = arith.constant 0 : i32
    return %arg0, %c0_i32 : i32, i32
  }
  func.func @transform_3(%arg0: i32) -> (i32, i32) {
    %c0_i32 = arith.constant 0 : i32
    %c0_i32_0 = arith.constant 0 : i32
    return %c0_i32, %arg0 : i32, i32
  }
  func.func @transform_4(%arg0: i32) -> (i32, i32) {
    %c0_i32 = arith.constant 0 : i32
    %c0_i32_0 = arith.constant 0 : i32
    %c0_i32_1 = arith.constant 0 : i32
    return %c0_i32, %c0_i32_0 : i32, i32
  }
  func.func @transform_5(%arg0: i32) -> (i32, i32) {
    %c0_i32 = arith.constant 0 : i32
    %c0_i32_0 = arith.constant 0 : i32
    %c0_i32_1 = arith.constant 0 : i32
    return %c0_i32, %c0_i32_0 : i32, i32
  }
  func.func @transform_6(%arg0: i32) -> (i32, i32) {
    %c0_i32 = arith.constant 0 : i32
    %c0_i32_0 = arith.constant 0 : i32
    %c0_i32_1 = arith.constant 0 : i32
    return %c0_i32, %c0_i32_0 : i32, i32
  }
  func.func @transform_7(%arg0: i32) -> (i32, i32) {
    %c0_i32 = arith.constant 0 : i32
    %c0_i32_0 = arith.constant 0 : i32
    %c0_i32_1 = arith.constant 0 : i32
    return %c0_i32, %c0_i32_0 : i32, i32
  }
  func.func @transform_8(%arg0: i32) -> (i32, i32) {
    %c0_i32 = arith.constant 0 : i32
    %c0_i32_0 = arith.constant 0 : i32
    %c0_i32_1 = arith.constant 0 : i32
    return %c0_i32, %c0_i32_0 : i32, i32
  }
  func.func @transform_9(%arg0: i32) -> (i32, i32) {
    %c0_i32 = arith.constant 0 : i32
    %c0_i32_0 = arith.constant 0 : i32
    %c0_i32_1 = arith.constant 0 : i32
    return %c0_i32, %c0_i32_0 : i32, i32
  }
  func.func @transform_10(%arg0: i32) -> (i32, i32) {
    %c0_i32 = arith.constant 0 : i32
    %c0_i32_0 = arith.constant 0 : i32
    %c0_i32_1 = arith.constant 0 : i32
    return %c0_i32, %c0_i32_0 : i32, i32
  }
  func.func @transform_11(%arg0: i32) -> (i32, i32) {
    %c0_i32 = arith.constant 0 : i32
    %c0_i32_0 = arith.constant 0 : i32
    %c0_i32_1 = arith.constant 0 : i32
    return %c0_i32, %c0_i32_0 : i32, i32
  }
  func.func @transform_12(%arg0: i32) -> (i32, i32) {
    %c0_i32 = arith.constant 0 : i32
    %c0_i32_0 = arith.constant 0 : i32
    %c0_i32_1 = arith.constant 0 : i32
    return %c0_i32, %c0_i32_0 : i32, i32
  }
  func.func @transform_13(%arg0: i32) -> (i32, i32) {
    %c0_i32 = arith.constant 0 : i32
    %c0_i32_0 = arith.constant 0 : i32
    %c0_i32_1 = arith.constant 0 : i32
    return %c0_i32, %c0_i32_0 : i32, i32
  }
  func.func @transform_14(%arg0: i32) -> (i32, i32) {
    %c0_i32 = arith.constant 0 : i32
    %c0_i32_0 = arith.constant 0 : i32
    %c0_i32_1 = arith.constant 0 : i32
    return %c0_i32, %c0_i32_0 : i32, i32
  }
  func.func @transform_15(%arg0: i32) -> (i32, i32) {
    %c0_i32 = arith.constant 0 : i32
    %c0_i32_0 = arith.constant 0 : i32
    %c0_i32_1 = arith.constant 0 : i32
    return %c0_i32, %c0_i32_0 : i32, i32
  }
  func.func @transform_16(%arg0: i32) -> (i32, i32) {
    %c0_i32 = arith.constant 0 : i32
    %c0_i32_0 = arith.constant 0 : i32
    %c0_i32_1 = arith.constant 0 : i32
    return %c0_i32, %c0_i32_0 : i32, i32
  }
}

</mosaic_0001>

<llo_original>
// kernel: tpu_custom_call.1
$region0: #{tpu_custom_call.1}
  #allocation0 [shape = 'u32[]', space=smem, size = 0x4, offset = 0x4, fixed_abs, tag = 'smem constant byte address 0x4 - core index']
  #allocation1 [shape = 'u32[144,128]{1,0:T(1,128)}', space=vmem, size = 0x12000, scoped, tag = 'internal scratch']
  #allocation2 [shape = 'f32[8,16]{1,0:T(8,128)}', space=vmem, size = 0x1000, scoped, tag = 'scratch operand']
  #allocation3 [shape = 'f32[8,8]{1,0:T(8,128)}', space=vmem, size = 0x1000, scoped, tag = 'scratch operand']
  #allocation4 [shape = 'f32[8,8]{1,0:T(8,128)}', space=vmem, size = 0x1000, scoped, tag = 'scratch operand']
  #allocation5 [shape = 'f32[8,8]{1,0:T(8,128)}', space=vmem, size = 0x1000, scoped, tag = 'scratch operand']
  #allocation6 [shape = 'f32[8,8]{1,0:T(8,128)}', space=vmem, size = 0x1000, scoped, tag = 'scratch operand']
  %s0 = inlined_call_operand.vmem [shape: f32[8,8], index: 0, kind: input, shape index: {}]
  %s1 = inlined_call_operand.vmem [shape: f32[128,8], index: 1, kind: input, shape index: {}]
  %s2 = inlined_call_operand.vmem [shape: f32[128,8], index: 2, kind: input, shape index: {}]
  %s3 = inlined_call_operand.vmem [shape: f32[8,128], index: 3, kind: input, shape index: {}]
  %s4 = inlined_call_operand.vmem [shape: f32[8,1], index: 4, kind: input, shape index: {}]
  %s5 = inlined_call_operand.vmem [shape: f32[8,8], index: 5, kind: input, shape index: {}]
  %s6 = inlined_call_operand.vmem [shape: f32[8,8], index: 6, kind: input, shape index: {}]
  %s7 = inlined_call_operand.vmem [shape: f32[1,8], index: 7, kind: input, shape index: {}]
  %s8 = inlined_call_operand.vmem [shape: f32[104,20], index: 8, kind: input, shape index: {}]
  %s9 = inlined_call_operand.vmem [shape: f32[1,20], index: 9, kind: input, shape index: {}]
  %s10 = inlined_call_operand.vmem [shape: f32[20,20], index: 10, kind: input, shape index: {}]
  %s11 = inlined_call_operand.vmem [shape: f32[1,20], index: 11, kind: input, shape index: {}]
  %s12 = inlined_call_operand.vmem [shape: f32[28,120], index: 12, kind: input, shape index: {}]
  %s13 = inlined_call_operand.vmem [shape: f32[1,120], index: 13, kind: input, shape index: {}]
  %s14 = inlined_call_operand.vmem [shape: f32[1,20], index: 14, kind: input, shape index: {}]
  %s15 = inlined_call_operand.vmem [shape: f32[1,20], index: 15, kind: input, shape index: {}]
  %s16 = inlined_call_operand.hbm [shape: f32[8,20], index: 16, kind: output, shape index: {}]
  %s17 = sld [smem:[#allocation0]]
  $region82: #{tpu_custom_call.1} parent=0
    _
  %s19 = ssub.s32 1, %s17
  %s20 = scalar_select 0, %s19, %s17
  $region1: #{tpu_custom_call.1} parent=0
    #allocation7 [shape = 'u8[4096]{0}', space=vmem, size = 0x1000, scoped, tag = 'output window, operand 0, single buffered']
    #allocation8 [shape = 's32[1]{0}', space=sflag, size = 0x4, scoped, tag = 'scoped memory for tpu_custom_call.1']
    %21 = vsyncpa [#allocation8], 0
    // Predicated region
    $region2: #{tpu_custom_call.1} parent=1 // pred_check
      _
    $region3: #{tpu_custom_call.1} parent=1 // pred_check_branch
      %23 = sbr.rel (0) target = $region5
    $region4: #{tpu_custom_call.1} parent=1 // pred_region
      _
    $region5: #{tpu_custom_call.1} parent=1 // pred_fallthru
      _
    // Predicated region
    $region6: #{tpu_custom_call.1} parent=1 // pred_check
      _
    $region7: #{tpu_custom_call.1} parent=1 // pred_check_branch
      %25 = sbr.rel (0) target = $region9
    $region8: #{tpu_custom_call.1} parent=1 // pred_region
      _
    $region9: #{tpu_custom_call.1} parent=1 // pred_fallthru
      _
    // Predicated region
    $region10: #{tpu_custom_call.1} parent=1 // pred_check
      _
    $region11: #{tpu_custom_call.1} parent=1 // pred_check_branch
      %27 = sbr.rel (0) target = $region13
    $region12: #{tpu_custom_call.1} parent=1 // pred_region
      _
    $region13: #{tpu_custom_call.1} parent=1 // pred_fallthru
      _
    // Predicated region
    $region14: #{tpu_custom_call.1} parent=1 // pred_check
      _
    $region15: #{tpu_custom_call.1} parent=1 // pred_check_branch
      %29 = sbr.rel (0) target = $region17
    $region16: #{tpu_custom_call.1} parent=1 // pred_region
      _
    $region17: #{tpu_custom_call.1} parent=1 // pred_fallthru
      _
    // Predicated region
    $region18: #{tpu_custom_call.1} parent=1 // pred_check
      _
    $region19: #{tpu_custom_call.1} parent=1 // pred_check_branch
      %31 = sbr.rel (0) target = $region21
    $region20: #{tpu_custom_call.1} parent=1 // pred_region
      _
    $region21: #{tpu_custom_call.1} parent=1 // pred_fallthru
      _
    // Predicated region
    $region22: #{tpu_custom_call.1} parent=1 // pred_check
      _
    $region23: #{tpu_custom_call.1} parent=1 // pred_check_branch
      %33 = sbr.rel (0) target = $region25
    $region24: #{tpu_custom_call.1} parent=1 // pred_region
      _
    $region25: #{tpu_custom_call.1} parent=1 // pred_fallthru
      _
    // Predicated region
    $region26: #{tpu_custom_call.1} parent=1 // pred_check
      _
    $region27: #{tpu_custom_call.1} parent=1 // pred_check_branch
      %35 = sbr.rel (0) target = $region29
    $region28: #{tpu_custom_call.1} parent=1 // pred_region
      _
    $region29: #{tpu_custom_call.1} parent=1 // pred_fallthru
      _
    // Predicated region
    $region30: #{tpu_custom_call.1} parent=1 // pred_check
      _
    $region31: #{tpu_custom_call.1} parent=1 // pred_check_branch
      %37 = sbr.rel (0) target = $region33
    $region32: #{tpu_custom_call.1} parent=1 // pred_region
      _
    $region33: #{tpu_custom_call.1} parent=1 // pred_fallthru
      _
    // Predicated region
    $region34: #{tpu_custom_call.1} parent=1 // pred_check
      _
    $region35: #{tpu_custom_call.1} parent=1 // pred_check_branch
      %39 = sbr.rel (0) target = $region37
    $region36: #{tpu_custom_call.1} parent=1 // pred_region
      _
    $region37: #{tpu_custom_call.1} parent=1 // pred_fallthru
      _
    // Predicated region
    $region38: #{tpu_custom_call.1} parent=1 // pred_check
      _
    $region39: #{tpu_custom_call.1} parent=1 // pred_check_branch
      %41 = sbr.rel (0) target = $region41
    $region40: #{tpu_custom_call.1} parent=1 // pred_region
      _
    $region41: #{tpu_custom_call.1} parent=1 // pred_fallthru
      _
    // Predicated region
    $region42: #{tpu_custom_call.1} parent=1 // pred_check
      _
    $region43: #{tpu_custom_call.1} parent=1 // pred_check_branch
      %43 = sbr.rel (0) target = $region45
    $region44: #{tpu_custom_call.1} parent=1 // pred_region
      _
    $region45: #{tpu_custom_call.1} parent=1 // pred_fallthru
      _
    // Predicated region
    $region46: #{tpu_custom_call.1} parent=1 // pred_check
      _
    $region47: #{tpu_custom_call.1} parent=1 // pred_check_branch
      %45 = sbr.rel (0) target = $region49
    $region48: #{tpu_custom_call.1} parent=1 // pred_region
      _
    $region49: #{tpu_custom_call.1} parent=1 // pred_fallthru
      _
    // Predicated region
    $region50: #{tpu_custom_call.1} parent=1 // pred_check
      _
    $region51: #{tpu_custom_call.1} parent=1 // pred_check_branch
      %47 = sbr.rel (0) target = $region53
    $region52: #{tpu_custom_call.1} parent=1 // pred_region
      _
    $region53: #{tpu_custom_call.1} parent=1 // pred_fallthru
      _
    // Predicated region
    $region54: #{tpu_custom_call.1} parent=1 // pred_check
      _
    $region55: #{tpu_custom_call.1} parent=1 // pred_check_branch
      %49 = sbr.rel (0) target = $region57
    $region56: #{tpu_custom_call.1} parent=1 // pred_region
      _
    $region57: #{tpu_custom_call.1} parent=1 // pred_fallthru
      _
    // Predicated region
    $region58: #{tpu_custom_call.1} parent=1 // pred_check
      _
    $region59: #{tpu_custom_call.1} parent=1 // pred_check_branch
      %51 = sbr.rel (0) target = $region61
    $region60: #{tpu_custom_call.1} parent=1 // pred_region
      _
    $region61: #{tpu_custom_call.1} parent=1 // pred_fallthru
      _
    // Predicated region
    $region62: #{tpu_custom_call.1} parent=1 // pred_check
      _
    $region63: #{tpu_custom_call.1} parent=1 // pred_check_branch
      %53 = sbr.rel (0) target = $region65
    $region64: #{tpu_custom_call.1} parent=1 // pred_region
      _
    $region65: #{tpu_custom_call.1} parent=1 // pred_fallthru
      _
    %p54 = scmp.eq.s32.totalorder 0, 0
    // Predicated region
    $region66: #{tpu_custom_call.1} parent=1 // pred_check
      %p55 = pneg %p54
    $region67: #{tpu_custom_call.1} parent=1 // pred_check_branch
      %57 = sbr.rel (%p55) target = $region69
    $region68: #{tpu_custom_call.1} parent=1 // pred_region
      %vm58 = vcmask 130048
      %59 = vst.msk [vmem:[#allocation2] sm:$0xff] %vm58, 0.0
      %vm60 = vcmask 64512
      %61 = vst.msk [vmem:[#allocation3] sm:$0xff] %vm60, 1e+30
      %62 = vst.msk [vmem:[#allocation4] sm:$0xff] %vm60, -1e+30
      %v63 = vld [vmem:[%s0] sm:$0xff]
      %v64 = vld [vmem:[%s5] sm:$0xff]
      %v66 = vsel %vm60, %v63, 0
      %68 = vmatprep.subr.mxu0 0.0
      %69 = vmatpush1.msra.mxu0 %v64
      %70 = vmatprep.subr.mxu0 0.0
      %71 = vmatpush1.msra.mxu0 0.0
      %72 = vmatprep.subr.mxu0 0.0
      %73 = vmatpush1.msra.mxu0 0.0
      %74 = vmatprep.subr.mxu0 0.0
      %75 = vmatpush1.msra.mxu0 0.0
      %76 = vmatprep.subr.mxu0 0.0
      %77 = vmatpush1.msra.mxu0 0.0
      %78 = vmatprep.subr.mxu0 0.0
      %79 = vmatpush1.msra.mxu0 0.0
      %80 = vmatprep.subr.mxu0 0.0
      %81 = vmatpush1.msra.mxu0 0.0
      %82 = vmatprep.subr.mxu0 0.0
      %83 = vmatpush1.msra.mxu0 0.0
      %84 = vmatprep.subr.mxu0 0.0
      %85 = vmatpush1.msra.mxu0 0.0
      %86 = vmatprep.subr.mxu0 0.0
      %87 = vmatpush1.msra.mxu0 0.0
      %88 = vmatprep.subr.mxu0 0.0
      %89 = vmatpush1.msra.mxu0 0.0
      %90 = vmatprep.subr.mxu0 0.0
      %91 = vmatpush1.msra.mxu0 0.0
      %92 = vmatprep.subr.mxu0 0.0
      %93 = vmatpush1.msra.mxu0 0.0
      %94 = vmatprep.subr.mxu0 0.0
      %95 = vmatpush1.msra.mxu0 0.0
      %96 = vmatprep.subr.mxu0 0.0
      %97 = vmatpush1.msra.mxu0 0.0
      %98 = vmatprep.subr.mxu0 0.0
      %99 = vmatpush1.msra.mxu0 0.0
      %100 = vmatprep.subr.mxu0 0.0
      %101 = vmatpush1.msra.mxu0 0.0
      %102 = vmatprep.subr.mxu0 0.0
      %103 = vmatpush1.msra.mxu0 0.0
      %104 = vmatprep.subr.mxu0 0.0
      %105 = vmatpush1.msra.mxu0 0.0
      %106 = vmatprep.subr.mxu0 0.0
      %107 = vmatpush1.msra.mxu0 0.0
      %108 = vmatprep.subr.mxu0 0.0
      %109 = vmatpush1.msra.mxu0 0.0
      %110 = vmatprep.subr.mxu0 0.0
      %111 = vmatpush1.msra.mxu0 0.0
      %112 = vmatprep.subr.mxu0 0.0
      %113 = vmatpush1.msra.mxu0 0.0
      %114 = vmatprep.subr.mxu0 0.0
      %115 = vmatpush1.msra.mxu0 0.0
      %116 = vmatprep.subr.mxu0 0.0
      %117 = vmatpush1.msra.mxu0 0.0
      %118 = vmatprep.subr.mxu0 0.0
      %119 = vmatpush1.msra.mxu0 0.0
      %120 = vmatprep.subr.mxu0 0.0
      %121 = vmatpush1.msra.mxu0 0.0
      %122 = vmatprep.subr.mxu0 0.0
      %123 = vmatpush1.msra.mxu0 0.0
      %124 = vmatprep.subr.mxu0 0.0
      %125 = vmatpush1.msra.mxu0 0.0
      %126 = vmatprep.subr.mxu0 0.0
      %127 = vmatpush1.msra.mxu0 0.0
      %128 = vmatprep.subr.mxu0 0.0
      %129 = vmatpush1.msra.mxu0 0.0
      %130 = vmatprep.subr.mxu0 0.0
      %131 = vmatpush1.msra.mxu0 0.0
      %132 = vmatprep.mubr.f32.mxu0 0.0
      %133 = vmatmul.mubr.f32.gmra.mrb[0].mxu0 %v66
      %v134 = vpop.f32.mrb[0].mxu0
      %v135 = vadd.f32 0.0, %v134
      %v136 = vpop.f32.mrb[0].mxu0
      %137 = vdwg.mxu0
      %138 = vst.msk [vmem:[#allocation5] sm:$0xff] %vm60, %v135
      %v139 = vld [vmem:[%s0] sm:$0xff]
      %v140 = vld [vmem:[%s6] sm:$0xff]
      %v142 = vsel %vm60, %v139, 0
      %144 = vmatprep.subr.mxu0 0.0
      %145 = vmatpush1.msra.mxu0 %v140
      %146 = vmatprep.subr.mxu0 0.0
      %147 = vmatpush1.msra.mxu0 0.0
      %148 = vmatprep.subr.mxu0 0.0
      %149 = vmatpush1.msra.mxu0 0.0
      %150 = vmatprep.subr.mxu0 0.0
      %151 = vmatpush1.msra.mxu0 0.0
      %152 = vmatprep.subr.mxu0 0.0
      %153 = vmatpush1.msra.mxu0 0.0
      %154 = vmatprep.subr.mxu0 0.0
      %155 = vmatpush1.msra.mxu0 0.0
      %156 = vmatprep.subr.mxu0 0.0
      %157 = vmatpush1.msra.mxu0 0.0
      %158 = vmatprep.subr.mxu0 0.0
      %159 = vmatpush1.msra.mxu0 0.0
      %160 = vmatprep.subr.mxu0 0.0
      %161 = vmatpush1.msra.mxu0 0.0
      %162 = vmatprep.subr.mxu0 0.0
      %163 = vmatpush1.msra.mxu0 0.0
      %164 = vmatprep.subr.mxu0 0.0
      %165 = vmatpush1.msra.mxu0 0.0
      %166 = vmatprep.subr.mxu0 0.0
      %167 = vmatpush1.msra.mxu0 0.0
      %168 = vmatprep.subr.mxu0 0.0
      %169 = vmatpush1.msra.mxu0 0.0
      %170 = vmatprep.subr.mxu0 0.0
      %171 = vmatpush1.msra.mxu0 0.0
      %172 = vmatprep.subr.mxu0 0.0
      %173 = vmatpush1.msra.mxu0 0.0
      %174 = vmatprep.subr.mxu0 0.0
      %175 = vmatpush1.msra.mxu0 0.0
      %176 = vmatprep.subr.mxu0 0.0
      %177 = vmatpush1.msra.mxu0 0.0
      %178 = vmatprep.subr.mxu0 0.0
      %179 = vmatpush1.msra.mxu0 0.0
      %180 = vmatprep.subr.mxu0 0.0
      %181 = vmatpush1.msra.mxu0 0.0
      %182 = vmatprep.subr.mxu0 0.0
      %183 = vmatpush1.msra.mxu0 0.0
      %184 = vmatprep.subr.mxu0 0.0
      %185 = vmatpush1.msra.mxu0 0.0
      %186 = vmatprep.subr.mxu0 0.0
      %187 = vmatpush1.msra.mxu0 0.0
      %188 = vmatprep.subr.mxu0 0.0
      %189 = vmatpush1.msra.mxu0 0.0
      %190 = vmatprep.subr.mxu0 0.0
      %191 = vmatpush1.msra.mxu0 0.0
      %192 = vmatprep.subr.mxu0 0.0
      %193 = vmatpush1.msra.mxu0 0.0
      %194 = vmatprep.subr.mxu0 0.0
      %195 = vmatpush1.msra.mxu0 0.0
      %196 = vmatprep.subr.mxu0 0.0
      %197 = vmatpush1.msra.mxu0 0.0
      %198 = vmatprep.subr.mxu0 0.0
      %199 = vmatpush1.msra.mxu0 0.0
      %200 = vmatprep.subr.mxu0 0.0
      %201 = vmatpush1.msra.mxu0 0.0
      %202 = vmatprep.subr.mxu0 0.0
      %203 = vmatpush1.msra.mxu0 0.0
      %204 = vmatprep.subr.mxu0 0.0
      %205 = vmatpush1.msra.mxu0 0.0
      %206 = vmatprep.subr.mxu0 0.0
      %207 = vmatpush1.msra.mxu0 0.0
      %208 = vmatprep.mubr.f32.mxu0 0.0
      %209 = vmatmul.mubr.f32.gmra.mrb[0].mxu0 %v142
      %v210 = vpop.f32.mrb[0].mxu0
      %v211 = vadd.f32 0.0, %v210
      %v212 = vpop.f32.mrb[0].mxu0
      %213 = vdwg.mxu0
      %214 = vst.msk [vmem:[#allocation6] sm:$0xff] %vm60, %v211
    $region69: #{tpu_custom_call.1} parent=1 // pred_fallthru
      _
    %v215 = vld [vmem:[%s1] sm:$0xff]
    %v216 = vld [vmem:[%s1 + $0x8] sm:$0xff]
    %v217 = vld [vmem:[%s1 + $0x10] sm:$0xff]
    %v218 = vld [vmem:[%s1 + $0x18] sm:$0xff]
    %v219 = vld [vmem:[%s1 + $0x20] sm:$0xff]
    %v220 = vld [vmem:[%s1 + $0x28] sm:$0xff]
    %v221 = vld [vmem:[%s1 + $0x30] sm:$0xff]
    %v222 = vld [vmem:[%s1 + $0x38] sm:$0xff]
    %v223 = vld [vmem:[%s1 + $0x40] sm:$0xff]
    %v224 = vld [vmem:[%s1 + $0x48] sm:$0xff]
    %v225 = vld [vmem:[%s1 + $0x50] sm:$0xff]
    %v226 = vld [vmem:[%s1 + $0x58] sm:$0xff]
    %v227 = vld [vmem:[%s1 + $0x60] sm:$0xff]
    %v228 = vld [vmem:[%s1 + $0x68] sm:$0xff]
    %v229 = vld [vmem:[%s1 + $0x70] sm:$0xff]
    %v230 = vld [vmem:[%s1 + $0x78] sm:$0xff]
    %v231 = vld [vmem:[#allocation5] sm:$0xff]
    %v232 = vld [vmem:[%s2] sm:$0xff]
    %v233 = vld [vmem:[%s2 + $0x8] sm:$0xff]
    %v234 = vld [vmem:[%s2 + $0x10] sm:$0xff]
    %v235 = vld [vmem:[%s2 + $0x18] sm:$0xff]
    %v236 = vld [vmem:[%s2 + $0x20] sm:$0xff]
    %v237 = vld [vmem:[%s2 + $0x28] sm:$0xff]
    %v238 = vld [vmem:[%s2 + $0x30] sm:$0xff]
    %v239 = vld [vmem:[%s2 + $0x38] sm:$0xff]
    %v240 = vld [vmem:[%s2 + $0x40] sm:$0xff]
    %v241 = vld [vmem:[%s2 + $0x48] sm:$0xff]
    %v242 = vld [vmem:[%s2 + $0x50] sm:$0xff]
    %v243 = vld [vmem:[%s2 + $0x58] sm:$0xff]
    %v244 = vld [vmem:[%s2 + $0x60] sm:$0xff]
    %v245 = vld [vmem:[%s2 + $0x68] sm:$0xff]
    %v246 = vld [vmem:[%s2 + $0x70] sm:$0xff]
    %v247 = vld [vmem:[%s2 + $0x78] sm:$0xff]
    %v248 = vld [vmem:[#allocation6] sm:$0xff]
    %vm249 = vcmask 64512
    %v251 = vsel %vm249, %v232, 0
    %v254 = vsel %vm249, %v233, 0
    %v257 = vsel %vm249, %v234, 0
    %v260 = vsel %vm249, %v235, 0
    %v263 = vsel %vm249, %v236, 0
    %v266 = vsel %vm249, %v237, 0
    %v269 = vsel %vm249, %v238, 0
    %v272 = vsel %vm249, %v239, 0
    %v275 = vsel %vm249, %v240, 0
    %v278 = vsel %vm249, %v241, 0
    %v281 = vsel %vm249, %v242, 0
    %v284 = vsel %vm249, %v243, 0
    %v287 = vsel %vm249, %v244, 0
    %v290 = vsel %vm249, %v245, 0
    %v293 = vsel %vm249, %v246, 0
    %v296 = vsel %vm249, %v247, 0
    %298 = vmatprep.subr.mxu0 0.0
    %299 = vmatpush1.msra.mxu0 %v248
    %300 = vmatprep.subr.mxu0 0.0
    %301 = vmatpush1.msra.mxu0 0.0
    %302 = vmatprep.subr.mxu0 0.0
    %303 = vmatpush1.msra.mxu0 0.0
    %304 = vmatprep.subr.mxu0 0.0
    %305 = vmatpush1.msra.mxu0 0.0
    %306 = vmatprep.subr.mxu0 0.0
    %307 = vmatpush1.msra.mxu0 0.0
    %308 = vmatprep.subr.mxu0 0.0
    %309 = vmatpush1.msra.mxu0 0.0
    %310 = vmatprep.subr.mxu0 0.0
    %311 = vmatpush1.msra.mxu0 0.0
    %312 = vmatprep.subr.mxu0 0.0
    %313 = vmatpush1.msra.mxu0 0.0
    %314 = vmatprep.subr.mxu0 0.0
    %315 = vmatpush1.msra.mxu0 0.0
    %316 = vmatprep.subr.mxu0 0.0
    %317 = vmatpush1.msra.mxu0 0.0
    %318 = vmatprep.subr.mxu0 0.0
    %319 = vmatpush1.msra.mxu0 0.0
    %320 = vmatprep.subr.mxu0 0.0
    %321 = vmatpush1.msra.mxu0 0.0
    %322 = vmatprep.subr.mxu0 0.0
    %323 = vmatpush1.msra.mxu0 0.0
    %324 = vmatprep.subr.mxu0 0.0
    %325 = vmatpush1.msra.mxu0 0.0
    %326 = vmatprep.subr.mxu0 0.0
    %327 = vmatpush1.msra.mxu0 0.0
    %328 = vmatprep.subr.mxu0 0.0
    %329 = vmatpush1.msra.mxu0 0.0
    %330 = vmatprep.subr.mxu0 0.0
    %331 = vmatpush1.msra.mxu0 0.0
    %332 = vmatprep.subr.mxu0 0.0
    %333 = vmatpush1.msra.mxu0 0.0
    %334 = vmatprep.subr.mxu0 0.0
    %335 = vmatpush1.msra.mxu0 0.0
    %336 = vmatprep.subr.mxu0 0.0
    %337 = vmatpush1.msra.mxu0 0.0
    %338 = vmatprep.subr.mxu0 0.0
    %339 = vmatpush1.msra.mxu0 0.0
    %340 = vmatprep.subr.mxu0 0.0
    %341 = vmatpush1.msra.mxu0 0.0
    %342 = vmatprep.subr.mxu0 0.0
    %343 = vmatpush1.msra.mxu0 0.0
    %344 = vmatprep.subr.mxu0 0.0
    %345 = vmatpush1.msra.mxu0 0.0
    %346 = vmatprep.subr.mxu0 0.0
    %347 = vmatpush1.msra.mxu0 0.0
    %348 = vmatprep.subr.mxu0 0.0
    %349 = vmatpush1.msra.mxu0 0.0
    %350 = vmatprep.subr.mxu0 0.0
    %351 = vmatpush1.msra.mxu0 0.0
    %352 = vmatprep.subr.mxu0 0.0
    %353 = vmatpush1.msra.mxu0 0.0
    %354 = vmatprep.subr.mxu0 0.0
    %355 = vmatpush1.msra.mxu0 0.0
    %356 = vmatprep.subr.mxu0 0.0
    %357 = vmatpush1.msra.mxu0 0.0
    %358 = vmatprep.subr.mxu0 0.0
    %359 = vmatpush1.msra.mxu0 0.0
    %360 = vmatprep.subr.mxu0 0.0
    %361 = vmatpush1.msra.mxu0 0.0
    %362 = vmatprep.mubr.f32.mxu0 0.0
    %363 = vmatmul.mubr.f32.gmra.mrb[0].mxu0 %v251
    %v364 = vpop.f32.mrb[0].mxu0
    %v365 = vadd.f32 0.0, %v364
    %v366 = vpop.f32.mrb[0].mxu0
    %367 = vmatprep.mubr.f32.mxu0 0.0
    %368 = vmatmul.mubr.f32.gmra.mrb[0].mxu0 %v254
    %v369 = vpop.f32.mrb[0].mxu0
    %v370 = vadd.f32 0.0, %v369
    %v371 = vpop.f32.mrb[0].mxu0
    %372 = vmatprep.mubr.f32.mxu0 0.0
    %373 = vmatmul.mubr.f32.gmra.mrb[0].mxu0 %v257
    %v374 = vpop.f32.mrb[0].mxu0
    %v375 = vadd.f32 0.0, %v374
    %v376 = vpop.f32.mrb[0].mxu0
    %377 = vmatprep.mubr.f32.mxu0 0.0
    %378 = vmatmul.mubr.f32.gmra.mrb[0].mxu0 %v260
    %v379 = vpop.f32.mrb[0].mxu0
    %v380 = vadd.f32 0.0, %v379
    %v381 = vpop.f32.mrb[0].mxu0
    %382 = vmatprep.mubr.f32.mxu0 0.0
    %383 = vmatmul.mubr.f32.gmra.mrb[0].mxu0 %v263
    %v384 = vpop.f32.mrb[0].mxu0
    %v385 = vadd.f32 0.0, %v384
    %v386 = vpop.f32.mrb[0].mxu0
    %387 = vmatprep.mubr.f32.mxu0 0.0
    %388 = vmatmul.mubr.f32.gmra.mrb[0].mxu0 %v266
    %v389 = vpop.f32.mrb[0].mxu0
    %v390 = vadd.f32 0.0, %v389
    %v391 = vpop.f32.mrb[0].mxu0
    %392 = vmatprep.mubr.f32.mxu0 0.0
    %393 = vmatmul.mubr.f32.gmra.mrb[0].mxu0 %v269
    %v394 = vpop.f32.mrb[0].mxu0
    %v395 = vadd.f32 0.0, %v394
    %v396 = vpop.f32.mrb[0].mxu0
    %397 = vmatprep.mubr.f32.mxu0 0.0
    %398 = vmatmul.mubr.f32.gmra.mrb[0].mxu0 %v272
    %v399 = vpop.f32.mrb[0].mxu0
    %v400 = vadd.f32 0.0, %v399
    %v401 = vpop.f32.mrb[0].mxu0
    %402 = vmatprep.mubr.f32.mxu0 0.0
    %403 = vmatmul.mubr.f32.gmra.mrb[0].mxu0 %v275
    %v404 = vpop.f32.mrb[0].mxu0
    %v405 = vadd.f32 0.0, %v404
    %v406 = vpop.f32.mrb[0].mxu0
    %407 = vmatprep.mubr.f32.mxu0 0.0
    %408 = vmatmul.mubr.f32.gmra.mrb[0].mxu0 %v278
    %v409 = vpop.f32.mrb[0].mxu0
    %v410 = vadd.f32 0.0, %v409
    %v411 = vpop.f32.mrb[0].mxu0
    %412 = vmatprep.mubr.f32.mxu0 0.0
    %413 = vmatmul.mubr.f32.gmra.mrb[0].mxu0 %v281
    %v414 = vpop.f32.mrb[0].mxu0
    %v415 = vadd.f32 0.0, %v414
    %v416 = vpop.f32.mrb[0].mxu0
    %417 = vmatprep.mubr.f32.mxu0 0.0
    %418 = vmatmul.mubr.f32.gmra.mrb[0].mxu0 %v284
    %v419 = vpop.f32.mrb[0].mxu0
    %v420 = vadd.f32 0.0, %v419
    %v421 = vpop.f32.mrb[0].mxu0
    %422 = vmatprep.mubr.f32.mxu0 0.0
    %423 = vmatmul.mubr.f32.gmra.mrb[0].mxu0 %v287
    %v424 = vpop.f32.mrb[0].mxu0
    %v425 = vadd.f32 0.0, %v424
    %v426 = vpop.f32.mrb[0].mxu0
    %427 = vmatprep.mubr.f32.mxu0 0.0
    %428 = vmatmul.mubr.f32.gmra.mrb[0].mxu0 %v290
    %v429 = vpop.f32.mrb[0].mxu0
    %v430 = vadd.f32 0.0, %v429
    %v431 = vpop.f32.mrb[0].mxu0
    %432 = vmatprep.mubr.f32.mxu0 0.0
    %433 = vmatmul.mubr.f32.gmra.mrb[0].mxu0 %v293
    %v434 = vpop.f32.mrb[0].mxu0
    %v435 = vadd.f32 0.0, %v434
    %v436 = vpop.f32.mrb[0].mxu0
    %437 = vmatprep.mubr.f32.mxu0 0.0
    %438 = vmatmul.mubr.f32.gmra.mrb[0].mxu0 %v296
    %v439 = vpop.f32.mrb[0].mxu0
    %v440 = vadd.f32 0.0, %v439
    %v441 = vpop.f32.mrb[0].mxu0
    %442 = vdwg.mxu0
    %v444 = vsel %vm249, %v215, 0
    %v447 = vsel %vm249, %v216, 0
    %v450 = vsel %vm249, %v217, 0
    %v453 = vsel %vm249, %v218, 0
    %v456 = vsel %vm249, %v219, 0
    %v459 = vsel %vm249, %v220, 0
    %v462 = vsel %vm249, %v221, 0
    %v465 = vsel %vm249, %v222, 0
    %v468 = vsel %vm249, %v223, 0
    %v471 = vsel %vm249, %v224, 0
    %v474 = vsel %vm249, %v225, 0
    %v477 = vsel %vm249, %v226, 0
    %v480 = vsel %vm249, %v227, 0
    %v483 = vsel %vm249, %v228, 0
    %v486 = vsel %vm249, %v229, 0
    %v489 = vsel %vm249, %v230, 0
    %491 = vmatprep.subr.mxu0 0.0
    %492 = vmatpush1.msra.mxu0 %v231
    %493 = vmatprep.subr.mxu0 0.0
    %494 = vmatpush1.msra.mxu0 0.0
    %495 = vmatprep.subr.mxu0 0.0
    %496 = vmatpush1.msra.mxu0 0.0
    %497 = vmatprep.subr.mxu0 0.0
    %498 = vmatpush1.msra.mxu0 0.0
    %499 = vmatprep.subr.mxu0 0.0
    %500 = vmatpush1.msra.mxu0 0.0
    %501 = vmatprep.subr.mxu0 0.0
    %502 = vmatpush1.msra.mxu0 0.0
    %503 = vmatprep.subr.mxu0 0.0
    %504 = vmatpush1.msra.mxu0 0.0
    %505 = vmatprep.subr.mxu0 0.0
    %506 = vmatpush1.msra.mxu0 0.0
    %507 = vmatprep.subr.mxu0 0.0
    %508 = vmatpush1.msra.mxu0 0.0
    %509 = vmatprep.subr.mxu0 0.0
    %510 = vmatpush1.msra.mxu0 0.0
    %511 = vmatprep.subr.mxu0 0.0
    %512 = vmatpush1.msra.mxu0 0.0
    %513 = vmatprep.subr.mxu0 0.0
    %514 = vmatpush1.msra.mxu0 0.0
    %515 = vmatprep.subr.mxu0 0.0
    %516 = vmatpush1.msra.mxu0 0.0
    %517 = vmatprep.subr.mxu0 0.0
    %518 = vmatpush1.msra.mxu0 0.0
    %519 = vmatprep.subr.mxu0 0.0
    %520 = vmatpush1.msra.mxu0 0.0
    %521 = vmatprep.subr.mxu0 0.0
    %522 = vmatpush1.msra.mxu0 0.0
    %523 = vmatprep.subr.mxu0 0.0
    %524 = vmatpush1.msra.mxu0 0.0
    %525 = vmatprep.subr.mxu0 0.0
    %526 = vmatpush1.msra.mxu0 0.0
    %527 = vmatprep.subr.mxu0 0.0
    %528 = vmatpush1.msra.mxu0 0.0
    %529 = vmatprep.subr.mxu0 0.0
    %530 = vmatpush1.msra.mxu0 0.0
    %531 = vmatprep.subr.mxu0 0.0
    %532 = vmatpush1.msra.mxu0 0.0
    %533 = vmatprep.subr.mxu0 0.0
    %534 = vmatpush1.msra.mxu0 0.0
    %535 = vmatprep.subr.mxu0 0.0
    %536 = vmatpush1.msra.mxu0 0.0
    %537 = vmatprep.subr.mxu0 0.0
    %538 = vmatpush1.msra.mxu0 0.0
    %539 = vmatprep.subr.mxu0 0.0
    %540 = vmatpush1.msra.mxu0 0.0
    %541 = vmatprep.subr.mxu0 0.0
    %542 = vmatpush1.msra.mxu0 0.0
    %543 = vmatprep.subr.mxu0 0.0
    %544 = vmatpush1.msra.mxu0 0.0
    %545 = vmatprep.subr.mxu0 0.0
    %546 = vmatpush1.msra.mxu0 0.0
    %547 = vmatprep.subr.mxu0 0.0
    %548 = vmatpush1.msra.mxu0 0.0
    %549 = vmatprep.subr.mxu0 0.0
    %550 = vmatpush1.msra.mxu0 0.0
    %551 = vmatprep.subr.mxu0 0.0
    %552 = vmatpush1.msra.mxu0 0.0
    %553 = vmatprep.subr.mxu0 0.0
    %554 = vmatpush1.msra.mxu0 0.0
    %555 = vmatprep.mubr.f32.mxu0 0.0
    %556 = vmatmul.mubr.f32.gmra.mrb[0].mxu0 %v444
    %v557 = vpop.f32.mrb[0].mxu0
    %v558 = vadd.f32 %v365, %v557
    %v559 = vpop.f32.mrb[0].mxu0
    %560 = vmatprep.mubr.f32.mxu0 0.0
    %561 = vmatmul.mubr.f32.gmra.mrb[0].mxu0 %v447
    %v562 = vpop.f32.mrb[0].mxu0
    %v563 = vadd.f32 %v370, %v562
    %v564 = vpop.f32.mrb[0].mxu0
    %565 = vmatprep.mubr.f32.mxu0 0.0
    %566 = vmatmul.mubr.f32.gmra.mrb[0].mxu0 %v450
    %v567 = vpop.f32.mrb[0].mxu0
    %v568 = vadd.f32 %v375, %v567
    %v569 = vpop.f32.mrb[0].mxu0
    %570 = vmatprep.mubr.f32.mxu0 0.0
    %571 = vmatmul.mubr.f32.gmra.mrb[0].mxu0 %v453
    %v572 = vpop.f32.mrb[0].mxu0
    %v573 = vadd.f32 %v380, %v572
    %v574 = vpop.f32.mrb[0].mxu0
    %575 = vmatprep.mubr.f32.mxu0 0.0
    %576 = vmatmul.mubr.f32.gmra.mrb[0].mxu0 %v456
    %v577 = vpop.f32.mrb[0].mxu0
    %v578 = vadd.f32 %v385, %v577
    %v579 = vpop.f32.mrb[0].mxu0
    %580 = vmatprep.mubr.f32.mxu0 0.0
    %581 = vmatmul.mubr.f32.gmra.mrb[0].mxu0 %v459
    %v582 = vpop.f32.mrb[0].mxu0
    %v583 = vadd.f32 %v390, %v582
    %v584 = vpop.f32.mrb[0].mxu0
    %585 = vmatprep.mubr.f32.mxu0 0.0
    %586 = vmatmul.mubr.f32.gmra.mrb[0].mxu0 %v462
    %v587 = vpop.f32.mrb[0].mxu0
    %v588 = vadd.f32 %v395, %v587
    %v589 = vpop.f32.mrb[0].mxu0
    %590 = vmatprep.mubr.f32.mxu0 0.0
    %591 = vmatmul.mubr.f32.gmra.mrb[0].mxu0 %v465
    %v592 = vpop.f32.mrb[0].mxu0
    %v593 = vadd.f32 %v400, %v592
    %v594 = vpop.f32.mrb[0].mxu0
    %595 = vmatprep.mubr.f32.mxu0 0.0
    %596 = vmatmul.mubr.f32.gmra.mrb[0].mxu0 %v468
    %v597 = vpop.f32.mrb[0].mxu0
    %v598 = vadd.f32 %v405, %v597
    %v599 = vpop.f32.mrb[0].mxu0
    %600 = vmatprep.mubr.f32.mxu0 0.0
    %601 = vmatmul.mubr.f32.gmra.mrb[0].mxu0 %v471
    %v602 = vpop.f32.mrb[0].mxu0
    %v603 = vadd.f32 %v410, %v602
    %v604 = vpop.f32.mrb[0].mxu0
    %605 = vmatprep.mubr.f32.mxu0 0.0
    %606 = vmatmul.mubr.f32.gmra.mrb[0].mxu0 %v474
    %v607 = vpop.f32.mrb[0].mxu0
    %v608 = vadd.f32 %v415, %v607
    %v609 = vpop.f32.mrb[0].mxu0
    %610 = vmatprep.mubr.f32.mxu0 0.0
    %611 = vmatmul.mubr.f32.gmra.mrb[0].mxu0 %v477
    %v612 = vpop.f32.mrb[0].mxu0
    %v613 = vadd.f32 %v420, %v612
    %v614 = vpop.f32.mrb[0].mxu0
    %615 = vmatprep.mubr.f32.mxu0 0.0
    %616 = vmatmul.mubr.f32.gmra.mrb[0].mxu0 %v480
    %v617 = vpop.f32.mrb[0].mxu0
    %v618 = vadd.f32 %v425, %v617
    %v619 = vpop.f32.mrb[0].mxu0
    %620 = vmatprep.mubr.f32.mxu0 0.0
    %621 = vmatmul.mubr.f32.gmra.mrb[0].mxu0 %v483
    %v622 = vpop.f32.mrb[0].mxu0
    %v623 = vadd.f32 %v430, %v622
    %v624 = vpop.f32.mrb[0].mxu0
    %625 = vmatprep.mubr.f32.mxu0 0.0
    %626 = vmatmul.mubr.f32.gmra.mrb[0].mxu0 %v486
    %v627 = vpop.f32.mrb[0].mxu0
    %v628 = vadd.f32 %v435, %v627
    %v629 = vpop.f32.mrb[0].mxu0
    %630 = vmatprep.mubr.f32.mxu0 0.0
    %631 = vmatmul.mubr.f32.gmra.mrb[0].mxu0 %v489
    %v632 = vpop.f32.mrb[0].mxu0
    %v633 = vadd.f32 %v440, %v632
    %v634 = vpop.f32.mrb[0].mxu0
    %635 = vdwg.mxu0
    %v636 = vld [vmem:[%s7] sm:$0x1]
    %v638 = vlaneseq
    %v639 = vshrl.u32 %v638, 7
    %v640 = vsub.s32 0, %v639
    %v641 = vrot.slane %v636, %v640
    %v643 = vadd.f32 %v558, %v641
    %v644 = vadd.f32 %v563, %v641
    %v645 = vadd.f32 %v568, %v641
    %v646 = vadd.f32 %v573, %v641
    %v647 = vadd.f32 %v578, %v641
    %v648 = vadd.f32 %v583, %v641
    %v649 = vadd.f32 %v588, %v641
    %v650 = vadd.f32 %v593, %v641
    %v651 = vadd.f32 %v598, %v641
    %v652 = vadd.f32 %v603, %v641
    %v653 = vadd.f32 %v608, %v641
    %v654 = vadd.f32 %v613, %v641
    %v655 = vadd.f32 %v618, %v641
    %v656 = vadd.f32 %v623, %v641
    %v657 = vadd.f32 %v628, %v641
    %v658 = vadd.f32 %v633, %v641
    %v659 = vld [vmem:[%s3] sm:$0xff]
    %v660 = vmul.f32 %v643, %v643
    %v661 = vmul.f32 %v644, %v644
    %v662 = vmul.f32 %v645, %v645
    %v663 = vmul.f32 %v646, %v646
    %v664 = vmul.f32 %v647, %v647
    %v665 = vmul.f32 %v648, %v648
    %v666 = vmul.f32 %v649, %v649
    %v667 = vmul.f32 %v650, %v650
    %v668 = vmul.f32 %v651, %v651
    %v669 = vmul.f32 %v652, %v652
    %v670 = vmul.f32 %v653, %v653
    %v671 = vmul.f32 %v654, %v654
    %v672 = vmul.f32 %v655, %v655
    %v673 = vmul.f32 %v656, %v656
    %v674 = vmul.f32 %v657, %v657
    %v675 = vmul.f32 %v658, %v658
    %692 = vrot.lane.b32.xlu0 %v660, 8
    %v693 = vpop.permute.xlu0 %692
    %694 = vrot.lane.b32.xlu0 %v661, 8
    %v695 = vpop.permute.xlu0 %694
    %696 = vrot.lane.b32.xlu0 %v662, 8
    %v697 = vpop.permute.xlu0 %696
    %698 = vrot.lane.b32.xlu0 %v663, 8
    %v699 = vpop.permute.xlu0 %698
    %700 = vrot.lane.b32.xlu0 %v664, 8
    %v701 = vpop.permute.xlu0 %700
    %702 = vrot.lane.b32.xlu0 %v665, 8
    %v703 = vpop.permute.xlu0 %702
    %704 = vrot.lane.b32.xlu0 %v666, 8
    %v705 = vpop.permute.xlu0 %704
    %706 = vrot.lane.b32.xlu0 %v667, 8
    %v707 = vpop.permute.xlu0 %706
    %708 = vrot.lane.b32.xlu0 %v668, 8
    %v709 = vpop.permute.xlu0 %708
    %710 = vrot.lane.b32.xlu0 %v669, 8
    %v711 = vpop.permute.xlu0 %710
    %712 = vrot.lane.b32.xlu0 %v670, 8
    %v713 = vpop.permute.xlu0 %712
    %714 = vrot.lane.b32.xlu0 %v671, 8
    %v715 = vpop.permute.xlu0 %714
    %716 = vrot.lane.b32.xlu0 %v672, 8
    %v717 = vpop.permute.xlu0 %716
    %718 = vrot.lane.b32.xlu0 %v673, 8
    %v719 = vpop.permute.xlu0 %718
    %720 = vrot.lane.b32.xlu0 %v674, 8
    %v721 = vpop.permute.xlu0 %720
    %722 = vrot.lane.b32.xlu0 %v675, 8
    %v723 = vpop.permute.xlu0 %722
    %v740 = vsel %vm249, %v643, %v693
    %v741 = vsel %vm249, %v644, %v695
    %v742 = vsel %vm249, %v645, %v697
    %v743 = vsel %vm249, %v646, %v699
    %v744 = vsel %vm249, %v647, %v701
    %v745 = vsel %vm249, %v648, %v703
    %v746 = vsel %vm249, %v649, %v705
    %v747 = vsel %vm249, %v650, %v707
    %v748 = vsel %vm249, %v651, %v709
    %v749 = vsel %vm249, %v652, %v711
    %v750 = vsel %vm249, %v653, %v713
    %v751 = vsel %vm249, %v654, %v715
    %v752 = vsel %vm249, %v655, %v717
    %v753 = vsel %vm249, %v656, %v719
    %v754 = vsel %vm249, %v657, %v721
    %v755 = vsel %vm249, %v658, %v723
    %v756 = vld [vmem:[#allocation2] sm:$0xff]
    %757 = vmatprep.subr.mxu0 0.0
    %758 = vmatpush1.msra.mxu0 %v740
    %759 = vmatprep.subr.mxu0 0.0
    %760 = vmatpush1.msra.mxu0 %v741
    %761 = vmatprep.subr.mxu0 0.0
    %762 = vmatpush1.msra.mxu0 %v742
    %763 = vmatprep.subr.mxu0 0.0
    %764 = vmatpush1.msra.mxu0 %v743
    %765 = vmatprep.subr.mxu0 0.0
    %766 = vmatpush1.msra.mxu0 %v744
    %767 = vmatprep.subr.mxu0 0.0
    %768 = vmatpush1.msra.mxu0 %v745
    %769 = vmatprep.subr.mxu0 0.0
    %770 = vmatpush1.msra.mxu0 %v746
    %771 = vmatprep.subr.mxu0 0.0
    %772 = vmatpush1.msra.mxu0 %v747
    %773 = vmatprep.subr.mxu0 0.0
    %774 = vmatpush1.msra.mxu0 %v748
    %775 = vmatprep.subr.mxu0 0.0
    %776 = vmatpush1.msra.mxu0 %v749
    %777 = vmatprep.subr.mxu0 0.0
    %778 = vmatpush1.msra.mxu0 %v750
    %779 = vmatprep.subr.mxu0 0.0
    %780 = vmatpush1.msra.mxu0 %v751
    %781 = vmatprep.subr.mxu0 0.0
    %782 = vmatpush1.msra.mxu0 %v752
    %783 = vmatprep.subr.mxu0 0.0
    %784 = vmatpush1.msra.mxu0 %v753
    %785 = vmatprep.subr.mxu0 0.0
    %786 = vmatpush1.msra.mxu0 %v754
    %787 = vmatprep.subr.mxu0 0.0
    %788 = vmatpush1.msra.mxu0 %v755
    %789 = vmatprep.subr.mxu0 0.0
    %790 = vmatpush1.msra.mxu0 0.0
    %791 = vmatprep.subr.mxu0 0.0
    %792 = vmatpush1.msra.mxu0 0.0
    %793 = vmatprep.subr.mxu0 0.0
    %794 = vmatpush1.msra.mxu0 0.0
    %795 = vmatprep.subr.mxu0 0.0
    %796 = vmatpush1.msra.mxu0 0.0
    %797 = vmatprep.subr.mxu0 0.0
    %798 = vmatpush1.msra.mxu0 0.0
    %799 = vmatprep.subr.mxu0 0.0
    %800 = vmatpush1.msra.mxu0 0.0
    %801 = vmatprep.subr.mxu0 0.0
    %802 = vmatpush1.msra.mxu0 0.0
    %803 = vmatprep.subr.mxu0 0.0
    %804 = vmatpush1.msra.mxu0 0.0
    %805 = vmatprep.subr.mxu0 0.0
    %806 = vmatpush1.msra.mxu0 0.0
    %807 = vmatprep.subr.mxu0 0.0
    %808 = vmatpush1.msra.mxu0 0.0
    %809 = vmatprep.subr.mxu0 0.0
    %810 = vmatpush1.msra.mxu0 0.0
    %811 = vmatprep.subr.mxu0 0.0
    %812 = vmatpush1.msra.mxu0 0.0
    %813 = vmatprep.subr.mxu0 0.0
    %814 = vmatpush1.msra.mxu0 0.0
    %815 = vmatprep.subr.mxu0 0.0
    %816 = vmatpush1.msra.mxu0 0.0
    %817 = vmatprep.subr.mxu0 0.0
    %818 = vmatpush1.msra.mxu0 0.0
    %819 = vmatprep.subr.mxu0 0.0
    %820 = vmatpush1.msra.mxu0 0.0
    %821 = vmatprep.mubr.f32.mxu0 0.0
    %822 = vmatmul.mubr.f32.gmra.mrb[0].mxu0 %v659
    %v823 = vpop.f32.mrb[0].mxu0
    %v824 = vadd.f32 0.0, %v823
    %v825 = vpop.f32.mrb[0].mxu0
    %826 = vdwg.mxu0
    %v827 = vadd.f32 %v756, %v824
    %vm828 = vcmask 130048
    %829 = vst.msk [vmem:[#allocation2] sm:$0xff] %vm828, %v827
    %v830 = vlaneseq
    %v831 = vshrl.u32 %v830, 7
    %v832 = vsub.s32 0, %v831
    %v833 = vrot.slane %v659, %v832
    %835 = vbcast.lane.b32.xlu0 %v833, 256
    %v836 = vpop.permute.xlu0 %835
    %s838 = sor.u32 256, 8
    %839 = vbcast.lane.b32.xlu0 %v833, %s838
    %v840 = vpop.permute.xlu0 %839
    %s842 = sor.u32 256, 16
    %843 = vbcast.lane.b32.xlu0 %v833, %s842
    %v844 = vpop.permute.xlu0 %843
    %s846 = sor.u32 256, 24
    %847 = vbcast.lane.b32.xlu0 %v833, %s846
    %v848 = vpop.permute.xlu0 %847
    %s850 = sor.u32 256, 32
    %851 = vbcast.lane.b32.xlu0 %v833, %s850
    %v852 = vpop.permute.xlu0 %851
    %s854 = sor.u32 256, 40
    %855 = vbcast.lane.b32.xlu0 %v833, %s854
    %v856 = vpop.permute.xlu0 %855
    %s858 = sor.u32 256, 48
    %859 = vbcast.lane.b32.xlu0 %v833, %s858
    %v860 = vpop.permute.xlu0 %859
    %s862 = sor.u32 256, 56
    %863 = vbcast.lane.b32.xlu0 %v833, %s862
    %v864 = vpop.permute.xlu0 %863
    %s866 = sor.u32 256, 64
    %867 = vbcast.lane.b32.xlu0 %v833, %s866
    %v868 = vpop.permute.xlu0 %867
    %s870 = sor.u32 256, 72
    %871 = vbcast.lane.b32.xlu0 %v833, %s870
    %v872 = vpop.permute.xlu0 %871
    %s874 = sor.u32 256, 80
    %875 = vbcast.lane.b32.xlu0 %v833, %s874
    %v876 = vpop.permute.xlu0 %875
    %s878 = sor.u32 256, 88
    %879 = vbcast.lane.b32.xlu0 %v833, %s878
    %v880 = vpop.permute.xlu0 %879
    %s882 = sor.u32 256, 96
    %883 = vbcast.lane.b32.xlu0 %v833, %s882
    %v884 = vpop.permute.xlu0 %883
    %s886 = sor.u32 256, 104
    %887 = vbcast.lane.b32.xlu0 %v833, %s886
    %v888 = vpop.permute.xlu0 %887
    %s890 = sor.u32 256, 112
    %891 = vbcast.lane.b32.xlu0 %v833, %s890
    %v892 = vpop.permute.xlu0 %891
    %s894 = sor.u32 256, 120
    %895 = vbcast.lane.b32.xlu0 %v833, %s894
    %v896 = vpop.permute.xlu0 %895
    %v897 = vlaneseq
    %v898 = vshrl.u32 %v897, 7
    %v899 = vsub.s32 1, %v898
    %v900 = vrot.slane %v659, %v899
    %902 = vbcast.lane.b32.xlu0 %v900, 256
    %v903 = vpop.permute.xlu0 %902
    %s905 = sor.u32 256, 8
    %906 = vbcast.lane.b32.xlu0 %v900, %s905
    %v907 = vpop.permute.xlu0 %906
    %s909 = sor.u32 256, 16
    %910 = vbcast.lane.b32.xlu0 %v900, %s909
    %v911 = vpop.permute.xlu0 %910
    %s913 = sor.u32 256, 24
    %914 = vbcast.lane.b32.xlu0 %v900, %s913
    %v915 = vpop.permute.xlu0 %914
    %s917 = sor.u32 256, 32
    %918 = vbcast.lane.b32.xlu0 %v900, %s917
    %v919 = vpop.permute.xlu0 %918
    %s921 = sor.u32 256, 40
    %922 = vbcast.lane.b32.xlu0 %v900, %s921
    %v923 = vpop.permute.xlu0 %922
    %s925 = sor.u32 256, 48
    %926 = vbcast.lane.b32.xlu0 %v900, %s925
    %v927 = vpop.permute.xlu0 %926
    %s929 = sor.u32 256, 56
    %930 = vbcast.lane.b32.xlu0 %v900, %s929
    %v931 = vpop.permute.xlu0 %930
    %s933 = sor.u32 256, 64
    %934 = vbcast.lane.b32.xlu0 %v900, %s933
    %v935 = vpop.permute.xlu0 %934
    %s937 = sor.u32 256, 72
    %938 = vbcast.lane.b32.xlu0 %v900, %s937
    %v939 = vpop.permute.xlu0 %938
    %s941 = sor.u32 256, 80
    %942 = vbcast.lane.b32.xlu0 %v900, %s941
    %v943 = vpop.permute.xlu0 %942
    %s945 = sor.u32 256, 88
    %946 = vbcast.lane.b32.xlu0 %v900, %s945
    %v947 = vpop.permute.xlu0 %946
    %s949 = sor.u32 256, 96
    %950 = vbcast.lane.b32.xlu0 %v900, %s949
    %v951 = vpop.permute.xlu0 %950
    %s953 = sor.u32 256, 104
    %954 = vbcast.lane.b32.xlu0 %v900, %s953
    %v955 = vpop.permute.xlu0 %954
    %s957 = sor.u32 256, 112
    %958 = vbcast.lane.b32.xlu0 %v900, %s957
    %v959 = vpop.permute.xlu0 %958
    %s961 = sor.u32 256, 120
    %962 = vbcast.lane.b32.xlu0 %v900, %s961
    %v963 = vpop.permute.xlu0 %962
    %v964 = vlaneseq
    %v965 = vshrl.u32 %v964, 7
    %v966 = vsub.s32 2, %v965
    %v967 = vrot.slane %v659, %v966
    %969 = vbcast.lane.b32.xlu0 %v967, 256
    %v970 = vpop.permute.xlu0 %969
    %s972 = sor.u32 256, 8
    %973 = vbcast.lane.b32.xlu0 %v967, %s972
    %v974 = vpop.permute.xlu0 %973
    %s976 = sor.u32 256, 16
    %977 = vbcast.lane.b32.xlu0 %v967, %s976
    %v978 = vpop.permute.xlu0 %977
    %s980 = sor.u32 256, 24
    %981 = vbcast.lane.b32.xlu0 %v967, %s980
    %v982 = vpop.permute.xlu0 %981
    %s984 = sor.u32 256, 32
    %985 = vbcast.lane.b32.xlu0 %v967, %s984
    %v986 = vpop.permute.xlu0 %985
    %s988 = sor.u32 256, 40
    %989 = vbcast.lane.b32.xlu0 %v967, %s988
    %v990 = vpop.permute.xlu0 %989
    %s992 = sor.u32 256, 48
    %993 = vbcast.lane.b32.xlu0 %v967, %s992
    %v994 = vpop.permute.xlu0 %993
    %s996 = sor.u32 256, 56
    %997 = vbcast.lane.b32.xlu0 %v967, %s996
    %v998 = vpop.permute.xlu0 %997
    %s1000 = sor.u32 256, 64
    %1001 = vbcast.lane.b32.xlu0 %v967, %s1000
    %v1002 = vpop.permute.xlu0 %1001
    %s1004 = sor.u32 256, 72
    %1005 = vbcast.lane.b32.xlu0 %v967, %s1004
    %v1006 = vpop.permute.xlu0 %1005
    %s1008 = sor.u32 256, 80
    %1009 = vbcast.lane.b32.xlu0 %v967, %s1008
    %v1010 = vpop.permute.xlu0 %1009
    %s1012 = sor.u32 256, 88
    %1013 = vbcast.lane.b32.xlu0 %v967, %s1012
    %v1014 = vpop.permute.xlu0 %1013
    %s1016 = sor.u32 256, 96
    %1017 = vbcast.lane.b32.xlu0 %v967, %s1016
    %v1018 = vpop.permute.xlu0 %1017
    %s1020 = sor.u32 256, 104
    %1021 = vbcast.lane.b32.xlu0 %v967, %s1020
    %v1022 = vpop.permute.xlu0 %1021
    %s1024 = sor.u32 256, 112
    %1025 = vbcast.lane.b32.xlu0 %v967, %s1024
    %v1026 = vpop.permute.xlu0 %1025
    %s1028 = sor.u32 256, 120
    %1029 = vbcast.lane.b32.xlu0 %v967, %s1028
    %v1030 = vpop.permute.xlu0 %1029
    %v1031 = vlaneseq
    %v1032 = vshrl.u32 %v1031, 7
    %v1033 = vsub.s32 3, %v1032
    %v1034 = vrot.slane %v659, %v1033
    %1036 = vbcast.lane.b32.xlu0 %v1034, 256
    %v1037 = vpop.permute.xlu0 %1036
    %s1039 = sor.u32 256, 8
    %1040 = vbcast.lane.b32.xlu0 %v1034, %s1039
    %v1041 = vpop.permute.xlu0 %1040
    %s1043 = sor.u32 256, 16
    %1044 = vbcast.lane.b32.xlu0 %v1034, %s1043
    %v1045 = vpop.permute.xlu0 %1044
    %s1047 = sor.u32 256, 24
    %1048 = vbcast.lane.b32.xlu0 %v1034, %s1047
    %v1049 = vpop.permute.xlu0 %1048
    %s1051 = sor.u32 256, 32
    %1052 = vbcast.lane.b32.xlu0 %v1034, %s1051
    %v1053 = vpop.permute.xlu0 %1052
    %s1055 = sor.u32 256, 40
    %1056 = vbcast.lane.b32.xlu0 %v1034, %s1055
    %v1057 = vpop.permute.xlu0 %1056
    %s1059 = sor.u32 256, 48
    %1060 = vbcast.lane.b32.xlu0 %v1034, %s1059
    %v1061 = vpop.permute.xlu0 %1060
    %s1063 = sor.u32 256, 56
    %1064 = vbcast.lane.b32.xlu0 %v1034, %s1063
    %v1065 = vpop.permute.xlu0 %1064
    %s1067 = sor.u32 256, 64
    %1068 = vbcast.lane.b32.xlu0 %v1034, %s1067
    %v1069 = vpop.permute.xlu0 %1068
    %s1071 = sor.u32 256, 72
    %1072 = vbcast.lane.b32.xlu0 %v1034, %s1071
    %v1073 = vpop.permute.xlu0 %1072
    %s1075 = sor.u32 256, 80
    %1076 = vbcast.lane.b32.xlu0 %v1034, %s1075
    %v1077 = vpop.permute.xlu0 %1076
    %s1079 = sor.u32 256, 88
    %1080 = vbcast.lane.b32.xlu0 %v1034, %s1079
    %v1081 = vpop.permute.xlu0 %1080
    %s1083 = sor.u32 256, 96
    %1084 = vbcast.lane.b32.xlu0 %v1034, %s1083
    %v1085 = vpop.permute.xlu0 %1084
    %s1087 = sor.u32 256, 104
    %1088 = vbcast.lane.b32.xlu0 %v1034, %s1087
    %v1089 = vpop.permute.xlu0 %1088
    %s1091 = sor.u32 256, 112
    %1092 = vbcast.lane.b32.xlu0 %v1034, %s1091
    %v1093 = vpop.permute.xlu0 %1092
    %s1095 = sor.u32 256, 120
    %1096 = vbcast.lane.b32.xlu0 %v1034, %s1095
    %v1097 = vpop.permute.xlu0 %1096
    %v1098 = vlaneseq
    %v1099 = vshrl.u32 %v1098, 7
    %v1100 = vsub.s32 4, %v1099
    %v1101 = vrot.slane %v659, %v1100
    %1103 = vbcast.lane.b32.xlu0 %v1101, 256
    %v1104 = vpop.permute.xlu0 %1103
    %s1106 = sor.u32 256, 8
    %1107 = vbcast.lane.b32.xlu0 %v1101, %s1106
    %v1108 = vpop.permute.xlu0 %1107
    %s1110 = sor.u32 256, 16
    %1111 = vbcast.lane.b32.xlu0 %v1101, %s1110
    %v1112 = vpop.permute.xlu0 %1111
    %s1114 = sor.u32 256, 24
    %1115 = vbcast.lane.b32.xlu0 %v1101, %s1114
    %v1116 = vpop.permute.xlu0 %1115
    %s1118 = sor.u32 256, 32
    %1119 = vbcast.lane.b32.xlu0 %v1101, %s1118
    %v1120 = vpop.permute.xlu0 %1119
    %s1122 = sor.u32 256, 40
    %1123 = vbcast.lane.b32.xlu0 %v1101, %s1122
    %v1124 = vpop.permute.xlu0 %1123
    %s1126 = sor.u32 256, 48
    %1127 = vbcast.lane.b32.xlu0 %v1101, %s1126
    %v1128 = vpop.permute.xlu0 %1127
    %s1130 = sor.u32 256, 56
    %1131 = vbcast.lane.b32.xlu0 %v1101, %s1130
    %v1132 = vpop.permute.xlu0 %1131
    %s1134 = sor.u32 256, 64
    %1135 = vbcast.lane.b32.xlu0 %v1101, %s1134
    %v1136 = vpop.permute.xlu0 %1135
    %s1138 = sor.u32 256, 72
    %1139 = vbcast.lane.b32.xlu0 %v1101, %s1138
    %v1140 = vpop.permute.xlu0 %1139
    %s1142 = sor.u32 256, 80
    %1143 = vbcast.lane.b32.xlu0 %v1101, %s1142
    %v1144 = vpop.permute.xlu0 %1143
    %s1146 = sor.u32 256, 88
    %1147 = vbcast.lane.b32.xlu0 %v1101, %s1146
    %v1148 = vpop.permute.xlu0 %1147
    %s1150 = sor.u32 256, 96
    %1151 = vbcast.lane.b32.xlu0 %v1101, %s1150
    %v1152 = vpop.permute.xlu0 %1151
    %s1154 = sor.u32 256, 104
    %1155 = vbcast.lane.b32.xlu0 %v1101, %s1154
    %v1156 = vpop.permute.xlu0 %1155
    %s1158 = sor.u32 256, 112
    %1159 = vbcast.lane.b32.xlu0 %v1101, %s1158
    %v1160 = vpop.permute.xlu0 %1159
    %s1162 = sor.u32 256, 120
    %1163 = vbcast.lane.b32.xlu0 %v1101, %s1162
    %v1164 = vpop.permute.xlu0 %1163
    %v1165 = vlaneseq
    %v1166 = vshrl.u32 %v1165, 7
    %v1167 = vsub.s32 5, %v1166
    %v1168 = vrot.slane %v659, %v1167
    %1170 = vbcast.lane.b32.xlu0 %v1168, 256
    %v1171 = vpop.permute.xlu0 %1170
    %s1173 = sor.u32 256, 8
    %1174 = vbcast.lane.b32.xlu0 %v1168, %s1173
    %v1175 = vpop.permute.xlu0 %1174
    %s1177 = sor.u32 256, 16
    %1178 = vbcast.lane.b32.xlu0 %v1168, %s1177
    %v1179 = vpop.permute.xlu0 %1178
    %s1181 = sor.u32 256, 24
    %1182 = vbcast.lane.b32.xlu0 %v1168, %s1181
    %v1183 = vpop.permute.xlu0 %1182
    %s1185 = sor.u32 256, 32
    %1186 = vbcast.lane.b32.xlu0 %v1168, %s1185
    %v1187 = vpop.permute.xlu0 %1186
    %s1189 = sor.u32 256, 40
    %1190 = vbcast.lane.b32.xlu0 %v1168, %s1189
    %v1191 = vpop.permute.xlu0 %1190
    %s1193 = sor.u32 256, 48
    %1194 = vbcast.lane.b32.xlu0 %v1168, %s1193
    %v1195 = vpop.permute.xlu0 %1194
    %s1197 = sor.u32 256, 56
    %1198 = vbcast.lane.b32.xlu0 %v1168, %s1197
    %v1199 = vpop.permute.xlu0 %1198
    %s1201 = sor.u32 256, 64
    %1202 = vbcast.lane.b32.xlu0 %v1168, %s1201
    %v1203 = vpop.permute.xlu0 %1202
    %s1205 = sor.u32 256, 72
    %1206 = vbcast.lane.b32.xlu0 %v1168, %s1205
    %v1207 = vpop.permute.xlu0 %1206
    %s1209 = sor.u32 256, 80
    %1210 = vbcast.lane.b32.xlu0 %v1168, %s1209
    %v1211 = vpop.permute.xlu0 %1210
    %s1213 = sor.u32 256, 88
    %1214 = vbcast.lane.b32.xlu0 %v1168, %s1213
    %v1215 = vpop.permute.xlu0 %1214
    %s1217 = sor.u32 256, 96
    %1218 = vbcast.lane.b32.xlu0 %v1168, %s1217
    %v1219 = vpop.permute.xlu0 %1218
    %s1221 = sor.u32 256, 104
    %1222 = vbcast.lane.b32.xlu0 %v1168, %s1221
    %v1223 = vpop.permute.xlu0 %1222
    %s1225 = sor.u32 256, 112
    %1226 = vbcast.lane.b32.xlu0 %v1168, %s1225
    %v1227 = vpop.permute.xlu0 %1226
    %s1229 = sor.u32 256, 120
    %1230 = vbcast.lane.b32.xlu0 %v1168, %s1229
    %v1231 = vpop.permute.xlu0 %1230
    %v1232 = vlaneseq
    %v1233 = vshrl.u32 %v1232, 7
    %v1234 = vsub.s32 6, %v1233
    %v1235 = vrot.slane %v659, %v1234
    %1237 = vbcast.lane.b32.xlu0 %v1235, 256
    %v1238 = vpop.permute.xlu0 %1237
    %s1240 = sor.u32 256, 8
    %1241 = vbcast.lane.b32.xlu0 %v1235, %s1240
    %v1242 = vpop.permute.xlu0 %1241
    %s1244 = sor.u32 256, 16
    %1245 = vbcast.lane.b32.xlu0 %v1235, %s1244
    %v1246 = vpop.permute.xlu0 %1245
    %s1248 = sor.u32 256, 24
    %1249 = vbcast.lane.b32.xlu0 %v1235, %s1248
    %v1250 = vpop.permute.xlu0 %1249
    %s1252 = sor.u32 256, 32
    %1253 = vbcast.lane.b32.xlu0 %v1235, %s1252
    %v1254 = vpop.permute.xlu0 %1253
    %s1256 = sor.u32 256, 40
    %1257 = vbcast.lane.b32.xlu0 %v1235, %s1256
    %v1258 = vpop.permute.xlu0 %1257
    %s1260 = sor.u32 256, 48
    %1261 = vbcast.lane.b32.xlu0 %v1235, %s1260
    %v1262 = vpop.permute.xlu0 %1261
    %s1264 = sor.u32 256, 56
    %1265 = vbcast.lane.b32.xlu0 %v1235, %s1264
    %v1266 = vpop.permute.xlu0 %1265
    %s1268 = sor.u32 256, 64
    %1269 = vbcast.lane.b32.xlu0 %v1235, %s1268
    %v1270 = vpop.permute.xlu0 %1269
    %s1272 = sor.u32 256, 72
    %1273 = vbcast.lane.b32.xlu0 %v1235, %s1272
    %v1274 = vpop.permute.xlu0 %1273
    %s1276 = sor.u32 256, 80
    %1277 = vbcast.lane.b32.xlu0 %v1235, %s1276
    %v1278 = vpop.permute.xlu0 %1277
    %s1280 = sor.u32 256, 88
    %1281 = vbcast.lane.b32.xlu0 %v1235, %s1280
    %v1282 = vpop.permute.xlu0 %1281
    %s1284 = sor.u32 256, 96
    %1285 = vbcast.lane.b32.xlu0 %v1235, %s1284
    %v1286 = vpop.permute.xlu0 %1285
    %s1288 = sor.u32 256, 104
    %1289 = vbcast.lane.b32.xlu0 %v1235, %s1288
    %v1290 = vpop.permute.xlu0 %1289
    %s1292 = sor.u32 256, 112
    %1293 = vbcast.lane.b32.xlu0 %v1235, %s1292
    %v1294 = vpop.permute.xlu0 %1293
    %s1296 = sor.u32 256, 120
    %1297 = vbcast.lane.b32.xlu0 %v1235, %s1296
    %v1298 = vpop.permute.xlu0 %1297
    %v1299 = vlaneseq
    %v1300 = vshrl.u32 %v1299, 7
    %v1301 = vsub.s32 7, %v1300
    %v1302 = vrot.slane %v659, %v1301
    %1304 = vbcast.lane.b32.xlu0 %v1302, 256
    %v1305 = vpop.permute.xlu0 %1304
    %s1307 = sor.u32 256, 8
    %1308 = vbcast.lane.b32.xlu0 %v1302, %s1307
    %v1309 = vpop.permute.xlu0 %1308
    %s1311 = sor.u32 256, 16
    %1312 = vbcast.lane.b32.xlu0 %v1302, %s1311
    %v1313 = vpop.permute.xlu0 %1312
    %s1315 = sor.u32 256, 24
    %1316 = vbcast.lane.b32.xlu0 %v1302, %s1315
    %v1317 = vpop.permute.xlu0 %1316
    %s1319 = sor.u32 256, 32
    %1320 = vbcast.lane.b32.xlu0 %v1302, %s1319
    %v1321 = vpop.permute.xlu0 %1320
    %s1323 = sor.u32 256, 40
    %1324 = vbcast.lane.b32.xlu0 %v1302, %s1323
    %v1325 = vpop.permute.xlu0 %1324
    %s1327 = sor.u32 256, 48
    %1328 = vbcast.lane.b32.xlu0 %v1302, %s1327
    %v1329 = vpop.permute.xlu0 %1328
    %s1331 = sor.u32 256, 56
    %1332 = vbcast.lane.b32.xlu0 %v1302, %s1331
    %v1333 = vpop.permute.xlu0 %1332
    %s1335 = sor.u32 256, 64
    %1336 = vbcast.lane.b32.xlu0 %v1302, %s1335
    %v1337 = vpop.permute.xlu0 %1336
    %s1339 = sor.u32 256, 72
    %1340 = vbcast.lane.b32.xlu0 %v1302, %s1339
    %v1341 = vpop.permute.xlu0 %1340
    %s1343 = sor.u32 256, 80
    %1344 = vbcast.lane.b32.xlu0 %v1302, %s1343
    %v1345 = vpop.permute.xlu0 %1344
    %s1347 = sor.u32 256, 88
    %1348 = vbcast.lane.b32.xlu0 %v1302, %s1347
    %v1349 = vpop.permute.xlu0 %1348
    %s1351 = sor.u32 256, 96
    %1352 = vbcast.lane.b32.xlu0 %v1302, %s1351
    %v1353 = vpop.permute.xlu0 %1352
    %s1355 = sor.u32 256, 104
    %1356 = vbcast.lane.b32.xlu0 %v1302, %s1355
    %v1357 = vpop.permute.xlu0 %1356
    %s1359 = sor.u32 256, 112
    %1360 = vbcast.lane.b32.xlu0 %v1302, %s1359
    %v1361 = vpop.permute.xlu0 %1360
    %s1363 = sor.u32 256, 120
    %1364 = vbcast.lane.b32.xlu0 %v1302, %s1363
    %v1365 = vpop.permute.xlu0 %1364
    %vm1366 = vcmp.gt.f32.partialorder %v836, 0.0
    %vm1367 = vcmp.gt.f32.partialorder %v840, 0.0
    %vm1368 = vcmp.gt.f32.partialorder %v844, 0.0
    %vm1369 = vcmp.gt.f32.partialorder %v848, 0.0
    %vm1370 = vcmp.gt.f32.partialorder %v852, 0.0
    %vm1371 = vcmp.gt.f32.partialorder %v856, 0.0
    %vm1372 = vcmp.gt.f32.partialorder %v860, 0.0
    %vm1373 = vcmp.gt.f32.partialorder %v864, 0.0
    %vm1374 = vcmp.gt.f32.partialorder %v868, 0.0
    %vm1375 = vcmp.gt.f32.partialorder %v872, 0.0
    %vm1376 = vcmp.gt.f32.partialorder %v876, 0.0
    %vm1377 = vcmp.gt.f32.partialorder %v880, 0.0
    %vm1378 = vcmp.gt.f32.partialorder %v884, 0.0
    %vm1379 = vcmp.gt.f32.partialorder %v888, 0.0
    %vm1380 = vcmp.gt.f32.partialorder %v892, 0.0
    %vm1381 = vcmp.gt.f32.partialorder %v896, 0.0
    %vm1382 = vcmp.gt.f32.partialorder %v903, 0.0
    %vm1383 = vcmp.gt.f32.partialorder %v907, 0.0
    %vm1384 = vcmp.gt.f32.partialorder %v911, 0.0
    %vm1385 = vcmp.gt.f32.partialorder %v915, 0.0
    %vm1386 = vcmp.gt.f32.partialorder %v919, 0.0
    %vm1387 = vcmp.gt.f32.partialorder %v923, 0.0
    %vm1388 = vcmp.gt.f32.partialorder %v927, 0.0
    %vm1389 = vcmp.gt.f32.partialorder %v931, 0.0
    %vm1390 = vcmp.gt.f32.partialorder %v935, 0.0
    %vm1391 = vcmp.gt.f32.partialorder %v939, 0.0
    %vm1392 = vcmp.gt.f32.partialorder %v943, 0.0
    %vm1393 = vcmp.gt.f32.partialorder %v947, 0.0
    %vm1394 = vcmp.gt.f32.partialorder %v951, 0.0
    %vm1395 = vcmp.gt.f32.partialorder %v955, 0.0
    %vm1396 = vcmp.gt.f32.partialorder %v959, 0.0
    %vm1397 = vcmp.gt.f32.partialorder %v963, 0.0
    %vm1398 = vcmp.gt.f32.partialorder %v970, 0.0
    %vm1399 = vcmp.gt.f32.partialorder %v974, 0.0
    %vm1400 = vcmp.gt.f32.partialorder %v978, 0.0
    %vm1401 = vcmp.gt.f32.partialorder %v982, 0.0
    %vm1402 = vcmp.gt.f32.partialorder %v986, 0.0
    %vm1403 = vcmp.gt.f32.partialorder %v990, 0.0
    %vm1404 = vcmp.gt.f32.partialorder %v994, 0.0
    %vm1405 = vcmp.gt.f32.partialorder %v998, 0.0
    %vm1406 = vcmp.gt.f32.partialorder %v1002, 0.0
    %vm1407 = vcmp.gt.f32.partialorder %v1006, 0.0
    %vm1408 = vcmp.gt.f32.partialorder %v1010, 0.0
    %vm1409 = vcmp.gt.f32.partialorder %v1014, 0.0
    %vm1410 = vcmp.gt.f32.partialorder %v1018, 0.0
    %vm1411 = vcmp.gt.f32.partialorder %v1022, 0.0
    %vm1412 = vcmp.gt.f32.partialorder %v1026, 0.0
    %vm1413 = vcmp.gt.f32.partialorder %v1030, 0.0
    %vm1414 = vcmp.gt.f32.partialorder %v1037, 0.0
    %vm1415 = vcmp.gt.f32.partialorder %v1041, 0.0
    %vm1416 = vcmp.gt.f32.partialorder %v1045, 0.0
    %vm1417 = vcmp.gt.f32.partialorder %v1049, 0.0
    %vm1418 = vcmp.gt.f32.partialorder %v1053, 0.0
    %vm1419 = vcmp.gt.f32.partialorder %v1057, 0.0
    %vm1420 = vcmp.gt.f32.partialorder %v1061, 0.0
    %vm1421 = vcmp.gt.f32.partialorder %v1065, 0.0
    %vm1422 = vcmp.gt.f32.partialorder %v1069, 0.0
    %vm1423 = vcmp.gt.f32.partialorder %v1073, 0.0
    %vm1424 = vcmp.gt.f32.partialorder %v1077, 0.0
    %vm1425 = vcmp.gt.f32.partialorder %v1081, 0.0
    %vm1426 = vcmp.gt.f32.partialorder %v1085, 0.0
    %vm1427 = vcmp.gt.f32.partialorder %v1089, 0.0
    %vm1428 = vcmp.gt.f32.partialorder %v1093, 0.0
    %vm1429 = vcmp.gt.f32.partialorder %v1097, 0.0
    %vm1430 = vcmp.gt.f32.partialorder %v1104, 0.0
    %vm1431 = vcmp.gt.f32.partialorder %v1108, 0.0
    %vm1432 = vcmp.gt.f32.partialorder %v1112, 0.0
    %vm1433 = vcmp.gt.f32.partialorder %v1116, 0.0
    %vm1434 = vcmp.gt.f32.partialorder %v1120, 0.0
    %vm1435 = vcmp.gt.f32.partialorder %v1124, 0.0
    %vm1436 = vcmp.gt.f32.partialorder %v1128, 0.0
    %vm1437 = vcmp.gt.f32.partialorder %v1132, 0.0
    %vm1438 = vcmp.gt.f32.partialorder %v1136, 0.0
    %vm1439 = vcmp.gt.f32.partialorder %v1140, 0.0
    %vm1440 = vcmp.gt.f32.partialorder %v1144, 0.0
    %vm1441 = vcmp.gt.f32.partialorder %v1148, 0.0
    %vm1442 = vcmp.gt.f32.partialorder %v1152, 0.0
    %vm1443 = vcmp.gt.f32.partialorder %v1156, 0.0
    %vm1444 = vcmp.gt.f32.partialorder %v1160, 0.0
    %vm1445 = vcmp.gt.f32.partialorder %v1164, 0.0
    %vm1446 = vcmp.gt.f32.partialorder %v1171, 0.0
    %vm1447 = vcmp.gt.f32.partialorder %v1175, 0.0
    %vm1448 = vcmp.gt.f32.partialorder %v1179, 0.0
    %vm1449 = vcmp.gt.f32.partialorder %v1183, 0.0
    %vm1450 = vcmp.gt.f32.partialorder %v1187, 0.0
    %vm1451 = vcmp.gt.f32.partialorder %v1191, 0.0
    %vm1452 = vcmp.gt.f32.partialorder %v1195, 0.0
    %vm1453 = vcmp.gt.f32.partialorder %v1199, 0.0
    %vm1454 = vcmp.gt.f32.partialorder %v1203, 0.0
    %vm1455 = vcmp.gt.f32.partialorder %v1207, 0.0
    %vm1456 = vcmp.gt.f32.partialorder %v1211, 0.0
    %vm1457 = vcmp.gt.f32.partialorder %v1215, 0.0
    %vm1458 = vcmp.gt.f32.partialorder %v1219, 0.0
    %vm1459 = vcmp.gt.f32.partialorder %v1223, 0.0
    %vm1460 = vcmp.gt.f32.partialorder %v1227, 0.0
    %vm1461 = vcmp.gt.f32.partialorder %v1231, 0.0
    %vm1462 = vcmp.gt.f32.partialorder %v1238, 0.0
    %vm1463 = vcmp.gt.f32.partialorder %v1242, 0.0
    %vm1464 = vcmp.gt.f32.partialorder %v1246, 0.0
    %vm1465 = vcmp.gt.f32.partialorder %v1250, 0.0
    %vm1466 = vcmp.gt.f32.partialorder %v1254, 0.0
    %vm1467 = vcmp.gt.f32.partialorder %v1258, 0.0
    %vm1468 = vcmp.gt.f32.partialorder %v1262, 0.0
    %vm1469 = vcmp.gt.f32.partialorder %v1266, 0.0
    %vm1470 = vcmp.gt.f32.partialorder %v1270, 0.0
    %vm1471 = vcmp.gt.f32.partialorder %v1274, 0.0
    %vm1472 = vcmp.gt.f32.partialorder %v1278, 0.0
    %vm1473 = vcmp.gt.f32.partialorder %v1282, 0.0
    %vm1474 = vcmp.gt.f32.partialorder %v1286, 0.0
    %vm1475 = vcmp.gt.f32.partialorder %v1290, 0.0
    %vm1476 = vcmp.gt.f32.partialorder %v1294, 0.0
    %vm1477 = vcmp.gt.f32.partialorder %v1298, 0.0
    %vm1478 = vcmp.gt.f32.partialorder %v1305, 0.0
    %vm1479 = vcmp.gt.f32.partialorder %v1309, 0.0
    %vm1480 = vcmp.gt.f32.partialorder %v1313, 0.0
    %vm1481 = vcmp.gt.f32.partialorder %v1317, 0.0
    %vm1482 = vcmp.gt.f32.partialorder %v1321, 0.0
    %vm1483 = vcmp.gt.f32.partialorder %v1325, 0.0
    %vm1484 = vcmp.gt.f32.partialorder %v1329, 0.0
    %vm1485 = vcmp.gt.f32.partialorder %v1333, 0.0
    %vm1486 = vcmp.gt.f32.partialorder %v1337, 0.0
    %vm1487 = vcmp.gt.f32.partialorder %v1341, 0.0
    %vm1488 = vcmp.gt.f32.partialorder %v1345, 0.0
    %vm1489 = vcmp.gt.f32.partialorder %v1349, 0.0
    %vm1490 = vcmp.gt.f32.partialorder %v1353, 0.0
    %vm1491 = vcmp.gt.f32.partialorder %v1357, 0.0
    %vm1492 = vcmp.gt.f32.partialorder %v1361, 0.0
    %vm1493 = vcmp.gt.f32.partialorder %v1365, 0.0
    %v1494 = vld [vmem:[#allocation4] sm:$0xff]
    %v1495 = vsel %vm1366, 1, 0
    %v1496 = vsel %vm1367, 1, 0
    %v1497 = vsel %vm1368, 1, 0
    %v1498 = vsel %vm1369, 1, 0
    %v1499 = vsel %vm1370, 1, 0
    %v1500 = vsel %vm1371, 1, 0
    %v1501 = vsel %vm1372, 1, 0
    %v1502 = vsel %vm1373, 1, 0
    %v1503 = vsel %vm1374, 1, 0
    %v1504 = vsel %vm1375, 1, 0
    %v1505 = vsel %vm1376, 1, 0
    %v1506 = vsel %vm1377, 1, 0
    %v1507 = vsel %vm1378, 1, 0
    %v1508 = vsel %vm1379, 1, 0
    %v1509 = vsel %vm1380, 1, 0
    %v1510 = vsel %vm1381, 1, 0
    %v1511 = vsel %vm1382, 1, 0
    %v1512 = vsel %vm1383, 1, 0
    %v1513 = vsel %vm1384, 1, 0
    %v1514 = vsel %vm1385, 1, 0
    %v1515 = vsel %vm1386, 1, 0
    %v1516 = vsel %vm1387, 1, 0
    %v1517 = vsel %vm1388, 1, 0
    %v1518 = vsel %vm1389, 1, 0
    %v1519 = vsel %vm1390, 1, 0
    %v1520 = vsel %vm1391, 1, 0
    %v1521 = vsel %vm1392, 1, 0
    %v1522 = vsel %vm1393, 1, 0
    %v1523 = vsel %vm1394, 1, 0
    %v1524 = vsel %vm1395, 1, 0
    %v1525 = vsel %vm1396, 1, 0
    %v1526 = vsel %vm1397, 1, 0
    %v1527 = vsel %vm1398, 1, 0
    %v1528 = vsel %vm1399, 1, 0
    %v1529 = vsel %vm1400, 1, 0
    %v1530 = vsel %vm1401, 1, 0
    %v1531 = vsel %vm1402, 1, 0
    %v1532 = vsel %vm1403, 1, 0
    %v1533 = vsel %vm1404, 1, 0
    %v1534 = vsel %vm1405, 1, 0
    %v1535 = vsel %vm1406, 1, 0
    %v1536 = vsel %vm1407, 1, 0
    %v1537 = vsel %vm1408, 1, 0
    %v1538 = vsel %vm1409, 1, 0
    %v1539 = vsel %vm1410, 1, 0
    %v1540 = vsel %vm1411, 1, 0
    %v1541 = vsel %vm1412, 1, 0
    %v1542 = vsel %vm1413, 1, 0
    %v1543 = vsel %vm1414, 1, 0
    %v1544 = vsel %vm1415, 1, 0
    %v1545 = vsel %vm1416, 1, 0
    %v1546 = vsel %vm1417, 1, 0
    %v1547 = vsel %vm1418, 1, 0
    %v1548 = vsel %vm1419, 1, 0
    %v1549 = vsel %vm1420, 1, 0
    %v1550 = vsel %vm1421, 1, 0
    %v1551 = vsel %vm1422, 1, 0
    %v1552 = vsel %vm1423, 1, 0
    %v1553 = vsel %vm1424, 1, 0
    %v1554 = vsel %vm1425, 1, 0
    %v1555 = vsel %vm1426, 1, 0
    %v1556 = vsel %vm1427, 1, 0
    %v1557 = vsel %vm1428, 1, 0
    %v1558 = vsel %vm1429, 1, 0
    %v1559 = vsel %vm1430, 1, 0
    %v1560 = vsel %vm1431, 1, 0
    %v1561 = vsel %vm1432, 1, 0
    %v1562 = vsel %vm1433, 1, 0
    %v1563 = vsel %vm1434, 1, 0
    %v1564 = vsel %vm1435, 1, 0
    %v1565 = vsel %vm1436, 1, 0
    %v1566 = vsel %vm1437, 1, 0
    %v1567 = vsel %vm1438, 1, 0
    %v1568 = vsel %vm1439, 1, 0
    %v1569 = vsel %vm1440, 1, 0
    %v1570 = vsel %vm1441, 1, 0
    %v1571 = vsel %vm1442, 1, 0
    %v1572 = vsel %vm1443, 1, 0
    %v1573 = vsel %vm1444, 1, 0
    %v1574 = vsel %vm1445, 1, 0
    %v1575 = vsel %vm1446, 1, 0
    %v1576 = vsel %vm1447, 1, 0
    %v1577 = vsel %vm1448, 1, 0
    %v1578 = vsel %vm1449, 1, 0
    %v1579 = vsel %vm1450, 1, 0
    %v1580 = vsel %vm1451, 1, 0
    %v1581 = vsel %vm1452, 1, 0
    %v1582 = vsel %vm1453, 1, 0
    %v1583 = vsel %vm1454, 1, 0
    %v1584 = vsel %vm1455, 1, 0
    %v1585 = vsel %vm1456, 1, 0
    %v1586 = vsel %vm1457, 1, 0
    %v1587 = vsel %vm1458, 1, 0
    %v1588 = vsel %vm1459, 1, 0
    %v1589 = vsel %vm1460, 1, 0
    %v1590 = vsel %vm1461, 1, 0
    %v1591 = vsel %vm1462, 1, 0
    %v1592 = vsel %vm1463, 1, 0
    %v1593 = vsel %vm1464, 1, 0
    %v1594 = vsel %vm1465, 1, 0
    %v1595 = vsel %vm1466, 1, 0
    %v1596 = vsel %vm1467, 1, 0
    %v1597 = vsel %vm1468, 1, 0
    %v1598 = vsel %vm1469, 1, 0
    %v1599 = vsel %vm1470, 1, 0
    %v1600 = vsel %vm1471, 1, 0
    %v1601 = vsel %vm1472, 1, 0
    %v1602 = vsel %vm1473, 1, 0
    %v1603 = vsel %vm1474, 1, 0
    %v1604 = vsel %vm1475, 1, 0
    %v1605 = vsel %vm1476, 1, 0
    %v1606 = vsel %vm1477, 1, 0
    %v1607 = vsel %vm1478, 1, 0
    %v1608 = vsel %vm1479, 1, 0
    %v1609 = vsel %vm1480, 1, 0
    %v1610 = vsel %vm1481, 1, 0
    %v1611 = vsel %vm1482, 1, 0
    %v1612 = vsel %vm1483, 1, 0
    %v1613 = vsel %vm1484, 1, 0
    %v1614 = vsel %vm1485, 1, 0
    %v1615 = vsel %vm1486, 1, 0
    %v1616 = vsel %vm1487, 1, 0
    %v1617 = vsel %vm1488, 1, 0
    %v1618 = vsel %vm1489, 1, 0
    %v1619 = vsel %vm1490, 1, 0
    %v1620 = vsel %vm1491, 1, 0
    %v1621 = vsel %vm1492, 1, 0
    %v1622 = vsel %vm1493, 1, 0
    %vm1623 = vcmp.eq.s32.totalorder %v1495, 1
    %vm1624 = vcmp.eq.s32.totalorder %v1496, 1
    %vm1625 = vcmp.eq.s32.totalorder %v1497, 1
    %vm1626 = vcmp.eq.s32.totalorder %v1498, 1
    %vm1627 = vcmp.eq.s32.totalorder %v1499, 1
    %vm1628 = vcmp.eq.s32.totalorder %v1500, 1
    %vm1629 = vcmp.eq.s32.totalorder %v1501, 1
    %vm1630 = vcmp.eq.s32.totalorder %v1502, 1
    %vm1631 = vcmp.eq.s32.totalorder %v1503, 1
    %vm1632 = vcmp.eq.s32.totalorder %v1504, 1
    %vm1633 = vcmp.eq.s32.totalorder %v1505, 1
    %vm1634 = vcmp.eq.s32.totalorder %v1506, 1
    %vm1635 = vcmp.eq.s32.totalorder %v1507, 1
    %vm1636 = vcmp.eq.s32.totalorder %v1508, 1
    %vm1637 = vcmp.eq.s32.totalorder %v1509, 1
    %vm1638 = vcmp.eq.s32.totalorder %v1510, 1
    %vm1639 = vcmp.eq.s32.totalorder %v1511, 1
    %vm1640 = vcmp.eq.s32.totalorder %v1512, 1
    %vm1641 = vcmp.eq.s32.totalorder %v1513, 1
    %vm1642 = vcmp.eq.s32.totalorder %v1514, 1
    %vm1643 = vcmp.eq.s32.totalorder %v1515, 1
    %vm1644 = vcmp.eq.s32.totalorder %v1516, 1
    %vm1645 = vcmp.eq.s32.totalorder %v1517, 1
    %vm1646 = vcmp.eq.s32.totalorder %v1518, 1
    %vm1647 = vcmp.eq.s32.totalorder %v1519, 1
    %vm1648 = vcmp.eq.s32.totalorder %v1520, 1
    %vm1649 = vcmp.eq.s32.totalorder %v1521, 1
    %vm1650 = vcmp.eq.s32.totalorder %v1522, 1
    %vm1651 = vcmp.eq.s32.totalorder %v1523, 1
    %vm1652 = vcmp.eq.s32.totalorder %v1524, 1
    %vm1653 = vcmp.eq.s32.totalorder %v1525, 1
    %vm1654 = vcmp.eq.s32.totalorder %v1526, 1
    %vm1655 = vcmp.eq.s32.totalorder %v1527, 1
    %vm1656 = vcmp.eq.s32.totalorder %v1528, 1
    %vm1657 = vcmp.eq.s32.totalorder %v1529, 1
    %vm1658 = vcmp.eq.s32.totalorder %v1530, 1
    %vm1659 = vcmp.eq.s32.totalorder %v1531, 1
    %vm1660 = vcmp.eq.s32.totalorder %v1532, 1
    %vm1661 = vcmp.eq.s32.totalorder %v1533, 1
    %vm1662 = vcmp.eq.s32.totalorder %v1534, 1
    %vm1663 = vcmp.eq.s32.totalorder %v1535, 1
    %vm1664 = vcmp.eq.s32.totalorder %v1536, 1
    %vm1665 = vcmp.eq.s32.totalorder %v1537, 1
    %vm1666 = vcmp.eq.s32.totalorder %v1538, 1
    %vm1667 = vcmp.eq.s32.totalorder %v1539, 1
    %vm1668 = vcmp.eq.s32.totalorder %v1540, 1
    %vm1669 = vcmp.eq.s32.totalorder %v1541, 1
    %vm1670 = vcmp.eq.s32.totalorder %v1542, 1
    %vm1671 = vcmp.eq.s32.totalorder %v1543, 1
    %vm1672 = vcmp.eq.s32.totalorder %v1544, 1
    %vm1673 = vcmp.eq.s32.totalorder %v1545, 1
    %vm1674 = vcmp.eq.s32.totalorder %v1546, 1
    %vm1675 = vcmp.eq.s32.totalorder %v1547, 1
    %vm1676 = vcmp.eq.s32.totalorder %v1548, 1
    %vm1677 = vcmp.eq.s32.totalorder %v1549, 1
    %vm1678 = vcmp.eq.s32.totalorder %v1550, 1
    %vm1679 = vcmp.eq.s32.totalorder %v1551, 1
    %vm1680 = vcmp.eq.s32.totalorder %v1552, 1
    %vm1681 = vcmp.eq.s32.totalorder %v1553, 1
    %vm1682 = vcmp.eq.s32.totalorder %v1554, 1
    %vm1683 = vcmp.eq.s32.totalorder %v1555, 1
    %vm1684 = vcmp.eq.s32.totalorder %v1556, 1
    %vm1685 = vcmp.eq.s32.totalorder %v1557, 1
    %vm1686 = vcmp.eq.s32.totalorder %v1558, 1
    %vm1687 = vcmp.eq.s32.totalorder %v1559, 1
    %vm1688 = vcmp.eq.s32.totalorder %v1560, 1
    %vm1689 = vcmp.eq.s32.totalorder %v1561, 1
    %vm1690 = vcmp.eq.s32.totalorder %v1562, 1
    %vm1691 = vcmp.eq.s32.totalorder %v1563, 1
    %vm1692 = vcmp.eq.s32.totalorder %v1564, 1
    %vm1693 = vcmp.eq.s32.totalorder %v1565, 1
    %vm1694 = vcmp.eq.s32.totalorder %v1566, 1
    %vm1695 = vcmp.eq.s32.totalorder %v1567, 1
    %vm1696 = vcmp.eq.s32.totalorder %v1568, 1
    %vm1697 = vcmp.eq.s32.totalorder %v1569, 1
    %vm1698 = vcmp.eq.s32.totalorder %v1570, 1
    %vm1699 = vcmp.eq.s32.totalorder %v1571, 1
    %vm1700 = vcmp.eq.s32.totalorder %v1572, 1
    %vm1701 = vcmp.eq.s32.totalorder %v1573, 1
    %vm1702 = vcmp.eq.s32.totalorder %v1574, 1
    %vm1703 = vcmp.eq.s32.totalorder %v1575, 1
    %vm1704 = vcmp.eq.s32.totalorder %v1576, 1
    %vm1705 = vcmp.eq.s32.totalorder %v1577, 1
    %vm1706 = vcmp.eq.s32.totalorder %v1578, 1
    %vm1707 = vcmp.eq.s32.totalorder %v1579, 1
    %vm1708 = vcmp.eq.s32.totalorder %v1580, 1
    %vm1709 = vcmp.eq.s32.totalorder %v1581, 1
    %vm1710 = vcmp.eq.s32.totalorder %v1582, 1
    %vm1711 = vcmp.eq.s32.totalorder %v1583, 1
    %vm1712 = vcmp.eq.s32.totalorder %v1584, 1
    %vm1713 = vcmp.eq.s32.totalorder %v1585, 1
    %vm1714 = vcmp.eq.s32.totalorder %v1586, 1
    %vm1715 = vcmp.eq.s32.totalorder %v1587, 1
    %vm1716 = vcmp.eq.s32.totalorder %v1588, 1
    %vm1717 = vcmp.eq.s32.totalorder %v1589, 1
    %vm1718 = vcmp.eq.s32.totalorder %v1590, 1
    %vm1719 = vcmp.eq.s32.totalorder %v1591, 1
    %vm1720 = vcmp.eq.s32.totalorder %v1592, 1
    %vm1721 = vcmp.eq.s32.totalorder %v1593, 1
    %vm1722 = vcmp.eq.s32.totalorder %v1594, 1
    %vm1723 = vcmp.eq.s32.totalorder %v1595, 1
    %vm1724 = vcmp.eq.s32.totalorder %v1596, 1
    %vm1725 = vcmp.eq.s32.totalorder %v1597, 1
    %vm1726 = vcmp.eq.s32.totalorder %v1598, 1
    %vm1727 = vcmp.eq.s32.totalorder %v1599, 1
    %vm1728 = vcmp.eq.s32.totalorder %v1600, 1
    %vm1729 = vcmp.eq.s32.totalorder %v1601, 1
    %vm1730 = vcmp.eq.s32.totalorder %v1602, 1
    %vm1731 = vcmp.eq.s32.totalorder %v1603, 1
    %vm1732 = vcmp.eq.s32.totalorder %v1604, 1
    %vm1733 = vcmp.eq.s32.totalorder %v1605, 1
    %vm1734 = vcmp.eq.s32.totalorder %v1606, 1
    %vm1735 = vcmp.eq.s32.totalorder %v1607, 1
    %vm1736 = vcmp.eq.s32.totalorder %v1608, 1
    %vm1737 = vcmp.eq.s32.totalorder %v1609, 1
    %vm1738 = vcmp.eq.s32.totalorder %v1610, 1
    %vm1739 = vcmp.eq.s32.totalorder %v1611, 1
    %vm1740 = vcmp.eq.s32.totalorder %v1612, 1
    %vm1741 = vcmp.eq.s32.totalorder %v1613, 1
    %vm1742 = vcmp.eq.s32.totalorder %v1614, 1
    %vm1743 = vcmp.eq.s32.totalorder %v1615, 1
    %vm1744 = vcmp.eq.s32.totalorder %v1616, 1
    %vm1745 = vcmp.eq.s32.totalorder %v1617, 1
    %vm1746 = vcmp.eq.s32.totalorder %v1618, 1
    %vm1747 = vcmp.eq.s32.totalorder %v1619, 1
    %vm1748 = vcmp.eq.s32.totalorder %v1620, 1
    %vm1749 = vcmp.eq.s32.totalorder %v1621, 1
    %vm1750 = vcmp.eq.s32.totalorder %v1622, 1
    %v1751 = vsel %vm1623, %v643, -1e+30
    %v1752 = vsel %vm1624, %v644, -1e+30
    %v1753 = vsel %vm1625, %v645, -1e+30
    %v1754 = vsel %vm1626, %v646, -1e+30
    %v1755 = vsel %vm1627, %v647, -1e+30
    %v1756 = vsel %vm1628, %v648, -1e+30
    %v1757 = vsel %vm1629, %v649, -1e+30
    %v1758 = vsel %vm1630, %v650, -1e+30
    %v1759 = vsel %vm1631, %v651, -1e+30
    %v1760 = vsel %vm1632, %v652, -1e+30
    %v1761 = vsel %vm1633, %v653, -1e+30
    %v1762 = vsel %vm1634, %v654, -1e+30
    %v1763 = vsel %vm1635, %v655, -1e+30
    %v1764 = vsel %vm1636, %v656, -1e+30
    %v1765 = vsel %vm1637, %v657, -1e+30
    %v1766 = vsel %vm1638, %v658, -1e+30
    %v1767 = vsel %vm1639, %v643, -1e+30
    %v1768 = vsel %vm1640, %v644, -1e+30
    %v1769 = vsel %vm1641, %v645, -1e+30
    %v1770 = vsel %vm1642, %v646, -1e+30
    %v1771 = vsel %vm1643, %v647, -1e+30
    %v1772 = vsel %vm1644, %v648, -1e+30
    %v1773 = vsel %vm1645, %v649, -1e+30
    %v1774 = vsel %vm1646, %v650, -1e+30
    %v1775 = vsel %vm1647, %v651, -1e+30
    %v1776 = vsel %vm1648, %v652, -1e+30
    %v1777 = vsel %vm1649, %v653, -1e+30
    %v1778 = vsel %vm1650, %v654, -1e+30
    %v1779 = vsel %vm1651, %v655, -1e+30
    %v1780 = vsel %vm1652, %v656, -1e+30
    %v1781 = vsel %vm1653, %v657, -1e+30
    %v1782 = vsel %vm1654, %v658, -1e+30
    %v1783 = vsel %vm1655, %v643, -1e+30
    %v1784 = vsel %vm1656, %v644, -1e+30
    %v1785 = vsel %vm1657, %v645, -1e+30
    %v1786 = vsel %vm1658, %v646, -1e+30
    %v1787 = vsel %vm1659, %v647, -1e+30
    %v1788 = vsel %vm1660, %v648, -1e+30
    %v1789 = vsel %vm1661, %v649, -1e+30
    %v1790 = vsel %vm1662, %v650, -1e+30
    %v1791 = vsel %vm1663, %v651, -1e+30
    %v1792 = vsel %vm1664, %v652, -1e+30
    %v1793 = vsel %vm1665, %v653, -1e+30
    %v1794 = vsel %vm1666, %v654, -1e+30
    %v1795 = vsel %vm1667, %v655, -1e+30
    %v1796 = vsel %vm1668, %v656, -1e+30
    %v1797 = vsel %vm1669, %v657, -1e+30
    %v1798 = vsel %vm1670, %v658, -1e+30
    %v1799 = vsel %vm1671, %v643, -1e+30
    %v1800 = vsel %vm1672, %v644, -1e+30
    %v1801 = vsel %vm1673, %v645, -1e+30
    %v1802 = vsel %vm1674, %v646, -1e+30
    %v1803 = vsel %vm1675, %v647, -1e+30
    %v1804 = vsel %vm1676, %v648, -1e+30
    %v1805 = vsel %vm1677, %v649, -1e+30
    %v1806 = vsel %vm1678, %v650, -1e+30
    %v1807 = vsel %vm1679, %v651, -1e+30
    %v1808 = vsel %vm1680, %v652, -1e+30
    %v1809 = vsel %vm1681, %v653, -1e+30
    %v1810 = vsel %vm1682, %v654, -1e+30
    %v1811 = vsel %vm1683, %v655, -1e+30
    %v1812 = vsel %vm1684, %v656, -1e+30
    %v1813 = vsel %vm1685, %v657, -1e+30
    %v1814 = vsel %vm1686, %v658, -1e+30
    %v1815 = vsel %vm1687, %v643, -1e+30
    %v1816 = vsel %vm1688, %v644, -1e+30
    %v1817 = vsel %vm1689, %v645, -1e+30
    %v1818 = vsel %vm1690, %v646, -1e+30
    %v1819 = vsel %vm1691, %v647, -1e+30
    %v1820 = vsel %vm1692, %v648, -1e+30
    %v1821 = vsel %vm1693, %v649, -1e+30
    %v1822 = vsel %vm1694, %v650, -1e+30
    %v1823 = vsel %vm1695, %v651, -1e+30
    %v1824 = vsel %vm1696, %v652, -1e+30
    %v1825 = vsel %vm1697, %v653, -1e+30
    %v1826 = vsel %vm1698, %v654, -1e+30
    %v1827 = vsel %vm1699, %v655, -1e+30
    %v1828 = vsel %vm1700, %v656, -1e+30
    %v1829 = vsel %vm1701, %v657, -1e+30
    %v1830 = vsel %vm1702, %v658, -1e+30
    %v1831 = vsel %vm1703, %v643, -1e+30
    %v1832 = vsel %vm1704, %v644, -1e+30
    %v1833 = vsel %vm1705, %v645, -1e+30
    %v1834 = vsel %vm1706, %v646, -1e+30
    %v1835 = vsel %vm1707, %v647, -1e+30
    %v1836 = vsel %vm1708, %v648, -1e+30
    %v1837 = vsel %vm1709, %v649, -1e+30
    %v1838 = vsel %vm1710, %v650, -1e+30
    %v1839 = vsel %vm1711, %v651, -1e+30
    %v1840 = vsel %vm1712, %v652, -1e+30
    %v1841 = vsel %vm1713, %v653, -1e+30
    %v1842 = vsel %vm1714, %v654, -1e+30
    %v1843 = vsel %vm1715, %v655, -1e+30
    %v1844 = vsel %vm1716, %v656, -1e+30
    %v1845 = vsel %vm1717, %v657, -1e+30
    %v1846 = vsel %vm1718, %v658, -1e+30
    %v1847 = vsel %vm1719, %v643, -1e+30
    %v1848 = vsel %vm1720, %v644, -1e+30
    %v1849 = vsel %vm1721, %v645, -1e+30
    %v1850 = vsel %vm1722, %v646, -1e+30
    %v1851 = vsel %vm1723, %v647, -1e+30
    %v1852 = vsel %vm1724, %v648, -1e+30
    %v1853 = vsel %vm1725, %v649, -1e+30
    %v1854 = vsel %vm1726, %v650, -1e+30
    %v1855 = vsel %vm1727, %v651, -1e+30
    %v1856 = vsel %vm1728, %v652, -1e+30
    %v1857 = vsel %vm1729, %v653, -1e+30
    %v1858 = vsel %vm1730, %v654, -1e+30
    %v1859 = vsel %vm1731, %v655, -1e+30
    %v1860 = vsel %vm1732, %v656, -1e+30
    %v1861 = vsel %vm1733, %v657, -1e+30
    %v1862 = vsel %vm1734, %v658, -1e+30
    %v1863 = vsel %vm1735, %v643, -1e+30
    %v1864 = vsel %vm1736, %v644, -1e+30
    %v1865 = vsel %vm1737, %v645, -1e+30
    %v1866 = vsel %vm1738, %v646, -1e+30
    %v1867 = vsel %vm1739, %v647, -1e+30
    %v1868 = vsel %vm1740, %v648, -1e+30
    %v1869 = vsel %vm1741, %v649, -1e+30
    %v1870 = vsel %vm1742, %v650, -1e+30
    %v1871 = vsel %vm1743, %v651, -1e+30
    %v1872 = vsel %vm1744, %v652, -1e+30
    %v1873 = vsel %vm1745, %v653, -1e+30
    %v1874 = vsel %vm1746, %v654, -1e+30
    %v1875 = vsel %vm1747, %v655, -1e+30
    %v1876 = vsel %vm1748, %v656, -1e+30
    %v1877 = vsel %vm1749, %v657, -1e+30
    %v1878 = vsel %vm1750, %v658, -1e+30
    %v1879 = vsel %vm249, %v1751, -inf
    %v1880 = vsel %vm249, %v1752, -inf
    %v1881 = vmax.f32 %v1879, %v1880
    %v1882 = vsel %vm249, %v1753, -inf
    %v1883 = vmax.f32 %v1881, %v1882
    %v1884 = vsel %vm249, %v1754, -inf
    %v1885 = vmax.f32 %v1883, %v1884
    %v1886 = vsel %vm249, %v1755, -inf
    %v1887 = vmax.f32 %v1885, %v1886
    %v1888 = vsel %vm249, %v1756, -inf
    %v1889 = vmax.f32 %v1887, %v1888
    %v1890 = vsel %vm249, %v1757, -inf
    %v1891 = vmax.f32 %v1889, %v1890
    %v1892 = vsel %vm249, %v1758, -inf
    %v1893 = vmax.f32 %v1891, %v1892
    %v1894 = vsel %vm249, %v1759, -inf
    %v1895 = vmax.f32 %v1893, %v1894
    %v1896 = vsel %vm249, %v1760, -inf
    %v1897 = vmax.f32 %v1895, %v1896
    %v1898 = vsel %vm249, %v1761, -inf
    %v1899 = vmax.f32 %v1897, %v1898
    %v1900 = vsel %vm249, %v1762, -inf
    %v1901 = vmax.f32 %v1899, %v1900
    %v1902 = vsel %vm249, %v1763, -inf
    %v1903 = vmax.f32 %v1901, %v1902
    %v1904 = vsel %vm249, %v1764, -inf
    %v1905 = vmax.f32 %v1903, %v1904
    %v1906 = vsel %vm249, %v1765, -inf
    %v1907 = vmax.f32 %v1905, %v1906
    %v1908 = vsel %vm249, %v1766, -inf
    %v1909 = vmax.f32 %v1907, %v1908
    %v1910 = vrot.slane %v1909, 4
    %v1911 = vmax.f32 %v1909, %v1910
    %v1912 = vrot.slane %v1911, 2
    %v1913 = vmax.f32 %v1911, %v1912
    %v1914 = vrot.slane %v1913, 1
    %v1915 = vmax.f32 %v1913, %v1914
    %v1916 = vsel %vm249, %v1767, -inf
    %v1917 = vsel %vm249, %v1768, -inf
    %v1918 = vmax.f32 %v1916, %v1917
    %v1919 = vsel %vm249, %v1769, -inf
    %v1920 = vmax.f32 %v1918, %v1919
    %v1921 = vsel %vm249, %v1770, -inf
    %v1922 = vmax.f32 %v1920, %v1921
    %v1923 = vsel %vm249, %v1771, -inf
    %v1924 = vmax.f32 %v1922, %v1923
    %v1925 = vsel %vm249, %v1772, -inf
    %v1926 = vmax.f32 %v1924, %v1925
    %v1927 = vsel %vm249, %v1773, -inf
    %v1928 = vmax.f32 %v1926, %v1927
    %v1929 = vsel %vm249, %v1774, -inf
    %v1930 = vmax.f32 %v1928, %v1929
    %v1931 = vsel %vm249, %v1775, -inf
    %v1932 = vmax.f32 %v1930, %v1931
    %v1933 = vsel %vm249, %v1776, -inf
    %v1934 = vmax.f32 %v1932, %v1933
    %v1935 = vsel %vm249, %v1777, -inf
    %v1936 = vmax.f32 %v1934, %v1935
    %v1937 = vsel %vm249, %v1778, -inf
    %v1938 = vmax.f32 %v1936, %v1937
    %v1939 = vsel %vm249, %v1779, -inf
    %v1940 = vmax.f32 %v1938, %v1939
    %v1941 = vsel %vm249, %v1780, -inf
    %v1942 = vmax.f32 %v1940, %v1941
    %v1943 = vsel %vm249, %v1781, -inf
    %v1944 = vmax.f32 %v1942, %v1943
    %v1945 = vsel %vm249, %v1782, -inf
    %v1946 = vmax.f32 %v1944, %v1945
    %v1947 = vrot.slane %v1946, 4
    %v1948 = vmax.f32 %v1946, %v1947
    %v1949 = vrot.slane %v1948, 2
    %v1950 = vmax.f32 %v1948, %v1949
    %v1951 = vrot.slane %v1950, 1
    %v1952 = vmax.f32 %v1950, %v1951
    %v1953 = vsel %vm249, %v1783, -inf
    %v1954 = vsel %vm249, %v1784, -inf
    %v1955 = vmax.f32 %v1953, %v1954
    %v1956 = vsel %vm249, %v1785, -inf
    %v1957 = vmax.f32 %v1955, %v1956
    %v1958 = vsel %vm249, %v1786, -inf
    %v1959 = vmax.f32 %v1957, %v1958
    %v1960 = vsel %vm249, %v1787, -inf
    %v1961 = vmax.f32 %v1959, %v1960
    %v1962 = vsel %vm249, %v1788, -inf
    %v1963 = vmax.f32 %v1961, %v1962
    %v1964 = vsel %vm249, %v1789, -inf
    %v1965 = vmax.f32 %v1963, %v1964
    %v1966 = vsel %vm249, %v1790, -inf
    %v1967 = vmax.f32 %v1965, %v1966
    %v1968 = vsel %vm249, %v1791, -inf
    %v1969 = vmax.f32 %v1967, %v1968
    %v1970 = vsel %vm249, %v1792, -inf
    %v1971 = vmax.f32 %v1969, %v1970
    %v1972 = vsel %vm249, %v1793, -inf
    %v1973 = vmax.f32 %v1971, %v1972
    %v1974 = vsel %vm249, %v1794, -inf
    %v1975 = vmax.f32 %v1973, %v1974
    %v1976 = vsel %vm249, %v1795, -inf
    %v1977 = vmax.f32 %v1975, %v1976
    %v1978 = vsel %vm249, %v1796, -inf
    %v1979 = vmax.f32 %v1977, %v1978
    %v1980 = vsel %vm249, %v1797, -inf
    %v1981 = vmax.f32 %v1979, %v1980
    %v1982 = vsel %vm249, %v1798, -inf
    %v1983 = vmax.f32 %v1981, %v1982
    %v1984 = vrot.slane %v1983, 4
    %v1985 = vmax.f32 %v1983, %v1984
    %v1986 = vrot.slane %v1985, 2
    %v1987 = vmax.f32 %v1985, %v1986
    %v1988 = vrot.slane %v1987, 1
    %v1989 = vmax.f32 %v1987, %v1988
    %v1990 = vsel %vm249, %v1799, -inf
    %v1991 = vsel %vm249, %v1800, -inf
    %v1992 = vmax.f32 %v1990, %v1991
    %v1993 = vsel %vm249, %v1801, -inf
    %v1994 = vmax.f32 %v1992, %v1993
    %v1995 = vsel %vm249, %v1802, -inf
    %v1996 = vmax.f32 %v1994, %v1995
    %v1997 = vsel %vm249, %v1803, -inf
    %v1998 = vmax.f32 %v1996, %v1997
    %v1999 = vsel %vm249, %v1804, -inf
    %v2000 = vmax.f32 %v1998, %v1999
    %v2001 = vsel %vm249, %v1805, -inf
    %v2002 = vmax.f32 %v2000, %v2001
    %v2003 = vsel %vm249, %v1806, -inf
    %v2004 = vmax.f32 %v2002, %v2003
    %v2005 = vsel %vm249, %v1807, -inf
    %v2006 = vmax.f32 %v2004, %v2005
    %v2007 = vsel %vm249, %v1808, -inf
    %v2008 = vmax.f32 %v2006, %v2007
    %v2009 = vsel %vm249, %v1809, -inf
    %v2010 = vmax.f32 %v2008, %v2009
    %v2011 = vsel %vm249, %v1810, -inf
    %v2012 = vmax.f32 %v2010, %v2011
    %v2013 = vsel %vm249, %v1811, -inf
    %v2014 = vmax.f32 %v2012, %v2013
    %v2015 = vsel %vm249, %v1812, -inf
    %v2016 = vmax.f32 %v2014, %v2015
    %v2017 = vsel %vm249, %v1813, -inf
    %v2018 = vmax.f32 %v2016, %v2017
    %v2019 = vsel %vm249, %v1814, -inf
    %v2020 = vmax.f32 %v2018, %v2019
    %v2021 = vrot.slane %v2020, 4
    %v2022 = vmax.f32 %v2020, %v2021
    %v2023 = vrot.slane %v2022, 2
    %v2024 = vmax.f32 %v2022, %v2023
    %v2025 = vrot.slane %v2024, 1
    %v2026 = vmax.f32 %v2024, %v2025
    %v2027 = vsel %vm249, %v1815, -inf
    %v2028 = vsel %vm249, %v1816, -inf
    %v2029 = vmax.f32 %v2027, %v2028
    %v2030 = vsel %vm249, %v1817, -inf
    %v2031 = vmax.f32 %v2029, %v2030
    %v2032 = vsel %vm249, %v1818, -inf
    %v2033 = vmax.f32 %v2031, %v2032
    %v2034 = vsel %vm249, %v1819, -inf
    %v2035 = vmax.f32 %v2033, %v2034
    %v2036 = vsel %vm249, %v1820, -inf
    %v2037 = vmax.f32 %v2035, %v2036
    %v2038 = vsel %vm249, %v1821, -inf
    %v2039 = vmax.f32 %v2037, %v2038
    %v2040 = vsel %vm249, %v1822, -inf
    %v2041 = vmax.f32 %v2039, %v2040
    %v2042 = vsel %vm249, %v1823, -inf
    %v2043 = vmax.f32 %v2041, %v2042
    %v2044 = vsel %vm249, %v1824, -inf
    %v2045 = vmax.f32 %v2043, %v2044
    %v2046 = vsel %vm249, %v1825, -inf
    %v2047 = vmax.f32 %v2045, %v2046
    %v2048 = vsel %vm249, %v1826, -inf
    %v2049 = vmax.f32 %v2047, %v2048
    %v2050 = vsel %vm249, %v1827, -inf
    %v2051 = vmax.f32 %v2049, %v2050
    %v2052 = vsel %vm249, %v1828, -inf
    %v2053 = vmax.f32 %v2051, %v2052
    %v2054 = vsel %vm249, %v1829, -inf
    %v2055 = vmax.f32 %v2053, %v2054
    %v2056 = vsel %vm249, %v1830, -inf
    %v2057 = vmax.f32 %v2055, %v2056
    %v2058 = vrot.slane %v2057, 4
    %v2059 = vmax.f32 %v2057, %v2058
    %v2060 = vrot.slane %v2059, 2
    %v2061 = vmax.f32 %v2059, %v2060
    %v2062 = vrot.slane %v2061, 1
    %v2063 = vmax.f32 %v2061, %v2062
    %v2064 = vsel %vm249, %v1831, -inf
    %v2065 = vsel %vm249, %v1832, -inf
    %v2066 = vmax.f32 %v2064, %v2065
    %v2067 = vsel %vm249, %v1833, -inf
    %v2068 = vmax.f32 %v2066, %v2067
    %v2069 = vsel %vm249, %v1834, -inf
    %v2070 = vmax.f32 %v2068, %v2069
    %v2071 = vsel %vm249, %v1835, -inf
    %v2072 = vmax.f32 %v2070, %v2071
    %v2073 = vsel %vm249, %v1836, -inf
    %v2074 = vmax.f32 %v2072, %v2073
    %v2075 = vsel %vm249, %v1837, -inf
    %v2076 = vmax.f32 %v2074, %v2075
    %v2077 = vsel %vm249, %v1838, -inf
    %v2078 = vmax.f32 %v2076, %v2077
    %v2079 = vsel %vm249, %v1839, -inf
    %v2080 = vmax.f32 %v2078, %v2079
    %v2081 = vsel %vm249, %v1840, -inf
    %v2082 = vmax.f32 %v2080, %v2081
    %v2083 = vsel %vm249, %v1841, -inf
    %v2084 = vmax.f32 %v2082, %v2083
    %v2085 = vsel %vm249, %v1842, -inf
    %v2086 = vmax.f32 %v2084, %v2085
    %v2087 = vsel %vm249, %v1843, -inf
    %v2088 = vmax.f32 %v2086, %v2087
    %v2089 = vsel %vm249, %v1844, -inf
    %v2090 = vmax.f32 %v2088, %v2089
    %v2091 = vsel %vm249, %v1845, -inf
    %v2092 = vmax.f32 %v2090, %v2091
    %v2093 = vsel %vm249, %v1846, -inf
    %v2094 = vmax.f32 %v2092, %v2093
    %v2095 = vrot.slane %v2094, 4
    %v2096 = vmax.f32 %v2094, %v2095
    %v2097 = vrot.slane %v2096, 2
    %v2098 = vmax.f32 %v2096, %v2097
    %v2099 = vrot.slane %v2098, 1
    %v2100 = vmax.f32 %v2098, %v2099
    %v2101 = vsel %vm249, %v1847, -inf
    %v2102 = vsel %vm249, %v1848, -inf
    %v2103 = vmax.f32 %v2101, %v2102
    %v2104 = vsel %vm249, %v1849, -inf
    %v2105 = vmax.f32 %v2103, %v2104
    %v2106 = vsel %vm249, %v1850, -inf
    %v2107 = vmax.f32 %v2105, %v2106
    %v2108 = vsel %vm249, %v1851, -inf
    %v2109 = vmax.f32 %v2107, %v2108
    %v2110 = vsel %vm249, %v1852, -inf
    %v2111 = vmax.f32 %v2109, %v2110
    %v2112 = vsel %vm249, %v1853, -inf
    %v2113 = vmax.f32 %v2111, %v2112
    %v2114 = vsel %vm249, %v1854, -inf
    %v2115 = vmax.f32 %v2113, %v2114
    %v2116 = vsel %vm249, %v1855, -inf
    %v2117 = vmax.f32 %v2115, %v2116
    %v2118 = vsel %vm249, %v1856, -inf
    %v2119 = vmax.f32 %v2117, %v2118
    %v2120 = vsel %vm249, %v1857, -inf
    %v2121 = vmax.f32 %v2119, %v2120
    %v2122 = vsel %vm249, %v1858, -inf
    %v2123 = vmax.f32 %v2121, %v2122
    %v2124 = vsel %vm249, %v1859, -inf
    %v2125 = vmax.f32 %v2123, %v2124
    %v2126 = vsel %vm249, %v1860, -inf
    %v2127 = vmax.f32 %v2125, %v2126
    %v2128 = vsel %vm249, %v1861, -inf
    %v2129 = vmax.f32 %v2127, %v2128
    %v2130 = vsel %vm249, %v1862, -inf
    %v2131 = vmax.f32 %v2129, %v2130
    %v2132 = vrot.slane %v2131, 4
    %v2133 = vmax.f32 %v2131, %v2132
    %v2134 = vrot.slane %v2133, 2
    %v2135 = vmax.f32 %v2133, %v2134
    %v2136 = vrot.slane %v2135, 1
    %v2137 = vmax.f32 %v2135, %v2136
    %v2138 = vsel %vm249, %v1863, -inf
    %v2139 = vsel %vm249, %v1864, -inf
    %v2140 = vmax.f32 %v2138, %v2139
    %v2141 = vsel %vm249, %v1865, -inf
    %v2142 = vmax.f32 %v2140, %v2141
    %v2143 = vsel %vm249, %v1866, -inf
    %v2144 = vmax.f32 %v2142, %v2143
    %v2145 = vsel %vm249, %v1867, -inf
    %v2146 = vmax.f32 %v2144, %v2145
    %v2147 = vsel %vm249, %v1868, -inf
    %v2148 = vmax.f32 %v2146, %v2147
    %v2149 = vsel %vm249, %v1869, -inf
    %v2150 = vmax.f32 %v2148, %v2149
    %v2151 = vsel %vm249, %v1870, -inf
    %v2152 = vmax.f32 %v2150, %v2151
    %v2153 = vsel %vm249, %v1871, -inf
    %v2154 = vmax.f32 %v2152, %v2153
    %v2155 = vsel %vm249, %v1872, -inf
    %v2156 = vmax.f32 %v2154, %v2155
    %v2157 = vsel %vm249, %v1873, -inf
    %v2158 = vmax.f32 %v2156, %v2157
    %v2159 = vsel %vm249, %v1874, -inf
    %v2160 = vmax.f32 %v2158, %v2159
    %v2161 = vsel %vm249, %v1875, -inf
    %v2162 = vmax.f32 %v2160, %v2161
    %v2163 = vsel %vm249, %v1876, -inf
    %v2164 = vmax.f32 %v2162, %v2163
    %v2165 = vsel %vm249, %v1877, -inf
    %v2166 = vmax.f32 %v2164, %v2165
    %v2167 = vsel %vm249, %v1878, -inf
    %v2168 = vmax.f32 %v2166, %v2167
    %v2169 = vrot.slane %v2168, 4
    %v2170 = vmax.f32 %v2168, %v2169
    %v2171 = vrot.slane %v2170, 2
    %v2172 = vmax.f32 %v2170, %v2171
    %v2173 = vrot.slane %v2172, 1
    %v2174 = vmax.f32 %v2172, %v2173
    %vm2183 = vcmask 1041409
    %v2184 = vsel %vm2183, %v1952, %v1915
    %vm2185 = vcmask 1042434
    %v2186 = vsel %vm2185, %v1989, %v2184
    %vm2187 = vcmask 1043459
    %v2188 = vsel %vm2187, %v2026, %v2186
    %vm2189 = vcmask 1044484
    %v2190 = vsel %vm2189, %v2063, %v2188
    %vm2191 = vcmask 1045509
    %v2192 = vsel %vm2191, %v2100, %v2190
    %vm2193 = vcmask 1046534
    %v2194 = vsel %vm2193, %v2137, %v2192
    %vm2195 = vcmask 1047559
    %v2196 = vsel %vm2195, %v2174, %v2194
    %v2198 = vmax.f32 %v1494, %v2196
    %2199 = vst.msk [vmem:[#allocation4] sm:$0xff] %vm249, %v2198
    %v2200 = vld [vmem:[#allocation3] sm:$0xff]
    %v2201 = vsel %vm1623, %v643, 1e+30
    %v2202 = vsel %vm1624, %v644, 1e+30
    %v2203 = vsel %vm1625, %v645, 1e+30
    %v2204 = vsel %vm1626, %v646, 1e+30
    %v2205 = vsel %vm1627, %v647, 1e+30
    %v2206 = vsel %vm1628, %v648, 1e+30
    %v2207 = vsel %vm1629, %v649, 1e+30
    %v2208 = vsel %vm1630, %v650, 1e+30
    %v2209 = vsel %vm1631, %v651, 1e+30
    %v2210 = vsel %vm1632, %v652, 1e+30
    %v2211 = vsel %vm1633, %v653, 1e+30
    %v2212 = vsel %vm1634, %v654, 1e+30
    %v2213 = vsel %vm1635, %v655, 1e+30
    %v2214 = vsel %vm1636, %v656, 1e+30
    %v2215 = vsel %vm1637, %v657, 1e+30
    %v2216 = vsel %vm1638, %v658, 1e+30
    %v2217 = vsel %vm1639, %v643, 1e+30
    %v2218 = vsel %vm1640, %v644, 1e+30
    %v2219 = vsel %vm1641, %v645, 1e+30
    %v2220 = vsel %vm1642, %v646, 1e+30
    %v2221 = vsel %vm1643, %v647, 1e+30
    %v2222 = vsel %vm1644, %v648, 1e+30
    %v2223 = vsel %vm1645, %v649, 1e+30
    %v2224 = vsel %vm1646, %v650, 1e+30
    %v2225 = vsel %vm1647, %v651, 1e+30
    %v2226 = vsel %vm1648, %v652, 1e+30
    %v2227 = vsel %vm1649, %v653, 1e+30
    %v2228 = vsel %vm1650, %v654, 1e+30
    %v2229 = vsel %vm1651, %v655, 1e+30
    %v2230 = vsel %vm1652, %v656, 1e+30
    %v2231 = vsel %vm1653, %v657, 1e+30
    %v2232 = vsel %vm1654, %v658, 1e+30
    %v2233 = vsel %vm1655, %v643, 1e+30
    %v2234 = vsel %vm1656, %v644, 1e+30
    %v2235 = vsel %vm1657, %v645, 1e+30
    %v2236 = vsel %vm1658, %v646, 1e+30
    %v2237 = vsel %vm1659, %v647, 1e+30
    %v2238 = vsel %vm1660, %v648, 1e+30
    %v2239 = vsel %vm1661, %v649, 1e+30
    %v2240 = vsel %vm1662, %v650, 1e+30
    %v2241 = vsel %vm1663, %v651, 1e+30
    %v2242 = vsel %vm1664, %v652, 1e+30
    %v2243 = vsel %vm1665, %v653, 1e+30
    %v2244 = vsel %vm1666, %v654, 1e+30
    %v2245 = vsel %vm1667, %v655, 1e+30
    %v2246 = vsel %vm1668, %v656, 1e+30
    %v2247 = vsel %vm1669, %v657, 1e+30
    %v2248 = vsel %vm1670, %v658, 1e+30
    %v2249 = vsel %vm1671, %v643, 1e+30
    %v2250 = vsel %vm1672, %v644, 1e+30
    %v2251 = vsel %vm1673, %v645, 1e+30
    %v2252 = vsel %vm1674, %v646, 1e+30
    %v2253 = vsel %vm1675, %v647, 1e+30
    %v2254 = vsel %vm1676, %v648, 1e+30
    %v2255 = vsel %vm1677, %v649, 1e+30
    %v2256 = vsel %vm1678, %v650, 1e+30
    %v2257 = vsel %vm1679, %v651, 1e+30
    %v2258 = vsel %vm1680, %v652, 1e+30
    %v2259 = vsel %vm1681, %v653, 1e+30
    %v2260 = vsel %vm1682, %v654, 1e+30
    %v2261 = vsel %vm1683, %v655, 1e+30
    %v2262 = vsel %vm1684, %v656, 1e+30
    %v2263 = vsel %vm1685, %v657, 1e+30
    %v2264 = vsel %vm1686, %v658, 1e+30
    %v2265 = vsel %vm1687, %v643, 1e+30
    %v2266 = vsel %vm1688, %v644, 1e+30
    %v2267 = vsel %vm1689, %v645, 1e+30
    %v2268 = vsel %vm1690, %v646, 1e+30
    %v2269 = vsel %vm1691, %v647, 1e+30
    %v2270 = vsel %vm1692, %v648, 1e+30
    %v2271 = vsel %vm1693, %v649, 1e+30
    %v2272 = vsel %vm1694, %v650, 1e+30
    %v2273 = vsel %vm1695, %v651, 1e+30
    %v2274 = vsel %vm1696, %v652, 1e+30
    %v2275 = vsel %vm1697, %v653, 1e+30
    %v2276 = vsel %vm1698, %v654, 1e+30
    %v2277 = vsel %vm1699, %v655, 1e+30
    %v2278 = vsel %vm1700, %v656, 1e+30
    %v2279 = vsel %vm1701, %v657, 1e+30
    %v2280 = vsel %vm1702, %v658, 1e+30
    %v2281 = vsel %vm1703, %v643, 1e+30
    %v2282 = vsel %vm1704, %v644, 1e+30
    %v2283 = vsel %vm1705, %v645, 1e+30
    %v2284 = vsel %vm1706, %v646, 1e+30
    %v2285 = vsel %vm1707, %v647, 1e+30
    %v2286 = vsel %vm1708, %v648, 1e+30
    %v2287 = vsel %vm1709, %v649, 1e+30
    %v2288 = vsel %vm1710, %v650, 1e+30
    %v2289 = vsel %vm1711, %v651, 1e+30
    %v2290 = vsel %vm1712, %v652, 1e+30
    %v2291 = vsel %vm1713, %v653, 1e+30
    %v2292 = vsel %vm1714, %v654, 1e+30
    %v2293 = vsel %vm1715, %v655, 1e+30
    %v2294 = vsel %vm1716, %v656, 1e+30
    %v2295 = vsel %vm1717, %v657, 1e+30
    %v2296 = vsel %vm1718, %v658, 1e+30
    %v2297 = vsel %vm1719, %v643, 1e+30
    %v2298 = vsel %vm1720, %v644, 1e+30
    %v2299 = vsel %vm1721, %v645, 1e+30
    %v2300 = vsel %vm1722, %v646, 1e+30
    %v2301 = vsel %vm1723, %v647, 1e+30
    %v2302 = vsel %vm1724, %v648, 1e+30
    %v2303 = vsel %vm1725, %v649, 1e+30
    %v2304 = vsel %vm1726, %v650, 1e+30
    %v2305 = vsel %vm1727, %v651, 1e+30
    %v2306 = vsel %vm1728, %v652, 1e+30
    %v2307 = vsel %vm1729, %v653, 1e+30
    %v2308 = vsel %vm1730, %v654, 1e+30
    %v2309 = vsel %vm1731, %v655, 1e+30
    %v2310 = vsel %vm1732, %v656, 1e+30
    %v2311 = vsel %vm1733, %v657, 1e+30
    %v2312 = vsel %vm1734, %v658, 1e+30
    %v2313 = vsel %vm1735, %v643, 1e+30
    %v2314 = vsel %vm1736, %v644, 1e+30
    %v2315 = vsel %vm1737, %v645, 1e+30
    %v2316 = vsel %vm1738, %v646, 1e+30
    %v2317 = vsel %vm1739, %v647, 1e+30
    %v2318 = vsel %vm1740, %v648, 1e+30
    %v2319 = vsel %vm1741, %v649, 1e+30
    %v2320 = vsel %vm1742, %v650, 1e+30
    %v2321 = vsel %vm1743, %v651, 1e+30
    %v2322 = vsel %vm1744, %v652, 1e+30
    %v2323 = vsel %vm1745, %v653, 1e+30
    %v2324 = vsel %vm1746, %v654, 1e+30
    %v2325 = vsel %vm1747, %v655, 1e+30
    %v2326 = vsel %vm1748, %v656, 1e+30
    %v2327 = vsel %vm1749, %v657, 1e+30
    %v2328 = vsel %vm1750, %v658, 1e+30
    %v2329 = vsel %vm249, %v2201, inf
    %v2330 = vsel %vm249, %v2202, inf
    %v2331 = vmin.f32 %v2329, %v2330
    %v2332 = vsel %vm249, %v2203, inf
    %v2333 = vmin.f32 %v2331, %v2332
    %v2334 = vsel %vm249, %v2204, inf
    %v2335 = vmin.f32 %v2333, %v2334
    %v2336 = vsel %vm249, %v2205, inf
    %v2337 = vmin.f32 %v2335, %v2336
    %v2338 = vsel %vm249, %v2206, inf
    %v2339 = vmin.f32 %v2337, %v2338
    %v2340 = vsel %vm249, %v2207, inf
    %v2341 = vmin.f32 %v2339, %v2340
    %v2342 = vsel %vm249, %v2208, inf
    %v2343 = vmin.f32 %v2341, %v2342
    %v2344 = vsel %vm249, %v2209, inf
    %v2345 = vmin.f32 %v2343, %v2344
    %v2346 = vsel %vm249, %v2210, inf
    %v2347 = vmin.f32 %v2345, %v2346
    %v2348 = vsel %vm249, %v2211, inf
    %v2349 = vmin.f32 %v2347, %v2348
    %v2350 = vsel %vm249, %v2212, inf
    %v2351 = vmin.f32 %v2349, %v2350
    %v2352 = vsel %vm249, %v2213, inf
    %v2353 = vmin.f32 %v2351, %v2352
    %v2354 = vsel %vm249, %v2214, inf
    %v2355 = vmin.f32 %v2353, %v2354
    %v2356 = vsel %vm249, %v2215, inf
    %v2357 = vmin.f32 %v2355, %v2356
    %v2358 = vsel %vm249, %v2216, inf
    %v2359 = vmin.f32 %v2357, %v2358
    %v2360 = vrot.slane %v2359, 4
    %v2361 = vmin.f32 %v2359, %v2360
    %v2362 = vrot.slane %v2361, 2
    %v2363 = vmin.f32 %v2361, %v2362
    %v2364 = vrot.slane %v2363, 1
    %v2365 = vmin.f32 %v2363, %v2364
    %v2366 = vsel %vm249, %v2217, inf
    %v2367 = vsel %vm249, %v2218, inf
    %v2368 = vmin.f32 %v2366, %v2367
    %v2369 = vsel %vm249, %v2219, inf
    %v2370 = vmin.f32 %v2368, %v2369
    %v2371 = vsel %vm249, %v2220, inf
    %v2372 = vmin.f32 %v2370, %v2371
    %v2373 = vsel %vm249, %v2221, inf
    %v2374 = vmin.f32 %v2372, %v2373
    %v2375 = vsel %vm249, %v2222, inf
    %v2376 = vmin.f32 %v2374, %v2375
    %v2377 = vsel %vm249, %v2223, inf
    %v2378 = vmin.f32 %v2376, %v2377
    %v2379 = vsel %vm249, %v2224, inf
    %v2380 = vmin.f32 %v2378, %v2379
    %v2381 = vsel %vm249, %v2225, inf
    %v2382 = vmin.f32 %v2380, %v2381
    %v2383 = vsel %vm249, %v2226, inf
    %v2384 = vmin.f32 %v2382, %v2383
    %v2385 = vsel %vm249, %v2227, inf
    %v2386 = vmin.f32 %v2384, %v2385
    %v2387 = vsel %vm249, %v2228, inf
    %v2388 = vmin.f32 %v2386, %v2387
    %v2389 = vsel %vm249, %v2229, inf
    %v2390 = vmin.f32 %v2388, %v2389
    %v2391 = vsel %vm249, %v2230, inf
    %v2392 = vmin.f32 %v2390, %v2391
    %v2393 = vsel %vm249, %v2231, inf
    %v2394 = vmin.f32 %v2392, %v2393
    %v2395 = vsel %vm249, %v2232, inf
    %v2396 = vmin.f32 %v2394, %v2395
    %v2397 = vrot.slane %v2396, 4
    %v2398 = vmin.f32 %v2396, %v2397
    %v2399 = vrot.slane %v2398, 2
    %v2400 = vmin.f32 %v2398, %v2399
    %v2401 = vrot.slane %v2400, 1
    %v2402 = vmin.f32 %v2400, %v2401
    %v2403 = vsel %vm249, %v2233, inf
    %v2404 = vsel %vm249, %v2234, inf
    %v2405 = vmin.f32 %v2403, %v2404
    %v2406 = vsel %vm249, %v2235, inf
    %v2407 = vmin.f32 %v2405, %v2406
    %v2408 = vsel %vm249, %v2236, inf
    %v2409 = vmin.f32 %v2407, %v2408
    %v2410 = vsel %vm249, %v2237, inf
    %v2411 = vmin.f32 %v2409, %v2410
    %v2412 = vsel %vm249, %v2238, inf
    %v2413 = vmin.f32 %v2411, %v2412
    %v2414 = vsel %vm249, %v2239, inf
    %v2415 = vmin.f32 %v2413, %v2414
    %v2416 = vsel %vm249, %v2240, inf
    %v2417 = vmin.f32 %v2415, %v2416
    %v2418 = vsel %vm249, %v2241, inf
    %v2419 = vmin.f32 %v2417, %v2418
    %v2420 = vsel %vm249, %v2242, inf
    %v2421 = vmin.f32 %v2419, %v2420
    %v2422 = vsel %vm249, %v2243, inf
    %v2423 = vmin.f32 %v2421, %v2422
    %v2424 = vsel %vm249, %v2244, inf
    %v2425 = vmin.f32 %v2423, %v2424
    %v2426 = vsel %vm249, %v2245, inf
    %v2427 = vmin.f32 %v2425, %v2426
    %v2428 = vsel %vm249, %v2246, inf
    %v2429 = vmin.f32 %v2427, %v2428
    %v2430 = vsel %vm249, %v2247, inf
    %v2431 = vmin.f32 %v2429, %v2430
    %v2432 = vsel %vm249, %v2248, inf
    %v2433 = vmin.f32 %v2431, %v2432
    %v2434 = vrot.slane %v2433, 4
    %v2435 = vmin.f32 %v2433, %v2434
    %v2436 = vrot.slane %v2435, 2
    %v2437 = vmin.f32 %v2435, %v2436
    %v2438 = vrot.slane %v2437, 1
    %v2439 = vmin.f32 %v2437, %v2438
    %v2440 = vsel %vm249, %v2249, inf
    %v2441 = vsel %vm249, %v2250, inf
    %v2442 = vmin.f32 %v2440, %v2441
    %v2443 = vsel %vm249, %v2251, inf
    %v2444 = vmin.f32 %v2442, %v2443
    %v2445 = vsel %vm249, %v2252, inf
    %v2446 = vmin.f32 %v2444, %v2445
    %v2447 = vsel %vm249, %v2253, inf
    %v2448 = vmin.f32 %v2446, %v2447
    %v2449 = vsel %vm249, %v2254, inf
    %v2450 = vmin.f32 %v2448, %v2449
    %v2451 = vsel %vm249, %v2255, inf
    %v2452 = vmin.f32 %v2450, %v2451
    %v2453 = vsel %vm249, %v2256, inf
    %v2454 = vmin.f32 %v2452, %v2453
    %v2455 = vsel %vm249, %v2257, inf
    %v2456 = vmin.f32 %v2454, %v2455
    %v2457 = vsel %vm249, %v2258, inf
    %v2458 = vmin.f32 %v2456, %v2457
    %v2459 = vsel %vm249, %v2259, inf
    %v2460 = vmin.f32 %v2458, %v2459
    %v2461 = vsel %vm249, %v2260, inf
    %v2462 = vmin.f32 %v2460, %v2461
    %v2463 = vsel %vm249, %v2261, inf
    %v2464 = vmin.f32 %v2462, %v2463
    %v2465 = vsel %vm249, %v2262, inf
    %v2466 = vmin.f32 %v2464, %v2465
    %v2467 = vsel %vm249, %v2263, inf
    %v2468 = vmin.f32 %v2466, %v2467
    %v2469 = vsel %vm249, %v2264, inf
    %v2470 = vmin.f32 %v2468, %v2469
    %v2471 = vrot.slane %v2470, 4
    %v2472 = vmin.f32 %v2470, %v2471
    %v2473 = vrot.slane %v2472, 2
    %v2474 = vmin.f32 %v2472, %v2473
    %v2475 = vrot.slane %v2474, 1
    %v2476 = vmin.f32 %v2474, %v2475
    %v2477 = vsel %vm249, %v2265, inf
    %v2478 = vsel %vm249, %v2266, inf
    %v2479 = vmin.f32 %v2477, %v2478
    %v2480 = vsel %vm249, %v2267, inf
    %v2481 = vmin.f32 %v2479, %v2480
    %v2482 = vsel %vm249, %v2268, inf
    %v2483 = vmin.f32 %v2481, %v2482
    %v2484 = vsel %vm249, %v2269, inf
    %v2485 = vmin.f32 %v2483, %v2484
    %v2486 = vsel %vm249, %v2270, inf
    %v2487 = vmin.f32 %v2485, %v2486
    %v2488 = vsel %vm249, %v2271, inf
    %v2489 = vmin.f32 %v2487, %v2488
    %v2490 = vsel %vm249, %v2272, inf
    %v2491 = vmin.f32 %v2489, %v2490
    %v2492 = vsel %vm249, %v2273, inf
    %v2493 = vmin.f32 %v2491, %v2492
    %v2494 = vsel %vm249, %v2274, inf
    %v2495 = vmin.f32 %v2493, %v2494
    %v2496 = vsel %vm249, %v2275, inf
    %v2497 = vmin.f32 %v2495, %v2496
    %v2498 = vsel %vm249, %v2276, inf
    %v2499 = vmin.f32 %v2497, %v2498
    %v2500 = vsel %vm249, %v2277, inf
    %v2501 = vmin.f32 %v2499, %v2500
    %v2502 = vsel %vm249, %v2278, inf
    %v2503 = vmin.f32 %v2501, %v2502
    %v2504 = vsel %vm249, %v2279, inf
    %v2505 = vmin.f32 %v2503, %v2504
    %v2506 = vsel %vm249, %v2280, inf
    %v2507 = vmin.f32 %v2505, %v2506
    %v2508 = vrot.slane %v2507, 4
    %v2509 = vmin.f32 %v2507, %v2508
    %v2510 = vrot.slane %v2509, 2
    %v2511 = vmin.f32 %v2509, %v2510
    %v2512 = vrot.slane %v2511, 1
    %v2513 = vmin.f32 %v2511, %v2512
    %v2514 = vsel %vm249, %v2281, inf
    %v2515 = vsel %vm249, %v2282, inf
    %v2516 = vmin.f32 %v2514, %v2515
    %v2517 = vsel %vm249, %v2283, inf
    %v2518 = vmin.f32 %v2516, %v2517
    %v2519 = vsel %vm249, %v2284, inf
    %v2520 = vmin.f32 %v2518, %v2519
    %v2521 = vsel %vm249, %v2285, inf
    %v2522 = vmin.f32 %v2520, %v2521
    %v2523 = vsel %vm249, %v2286, inf
    %v2524 = vmin.f32 %v2522, %v2523
    %v2525 = vsel %vm249, %v2287, inf
    %v2526 = vmin.f32 %v2524, %v2525
    %v2527 = vsel %vm249, %v2288, inf
    %v2528 = vmin.f32 %v2526, %v2527
    %v2529 = vsel %vm249, %v2289, inf
    %v2530 = vmin.f32 %v2528, %v2529
    %v2531 = vsel %vm249, %v2290, inf
    %v2532 = vmin.f32 %v2530, %v2531
    %v2533 = vsel %vm249, %v2291, inf
    %v2534 = vmin.f32 %v2532, %v2533
    %v2535 = vsel %vm249, %v2292, inf
    %v2536 = vmin.f32 %v2534, %v2535
    %v2537 = vsel %vm249, %v2293, inf
    %v2538 = vmin.f32 %v2536, %v2537
    %v2539 = vsel %vm249, %v2294, inf
    %v2540 = vmin.f32 %v2538, %v2539
    %v2541 = vsel %vm249, %v2295, inf
    %v2542 = vmin.f32 %v2540, %v2541
    %v2543 = vsel %vm249, %v2296, inf
    %v2544 = vmin.f32 %v2542, %v2543
    %v2545 = vrot.slane %v2544, 4
    %v2546 = vmin.f32 %v2544, %v2545
    %v2547 = vrot.slane %v2546, 2
    %v2548 = vmin.f32 %v2546, %v2547
    %v2549 = vrot.slane %v2548, 1
    %v2550 = vmin.f32 %v2548, %v2549
    %v2551 = vsel %vm249, %v2297, inf
    %v2552 = vsel %vm249, %v2298, inf
    %v2553 = vmin.f32 %v2551, %v2552
    %v2554 = vsel %vm249, %v2299, inf
    %v2555 = vmin.f32 %v2553, %v2554
    %v2556 = vsel %vm249, %v2300, inf
    %v2557 = vmin.f32 %v2555, %v2556
    %v2558 = vsel %vm249, %v2301, inf
    %v2559 = vmin.f32 %v2557, %v2558
    %v2560 = vsel %vm249, %v2302, inf
    %v2561 = vmin.f32 %v2559, %v2560
    %v2562 = vsel %vm249, %v2303, inf
    %v2563 = vmin.f32 %v2561, %v2562
    %v2564 = vsel %vm249, %v2304, inf
    %v2565 = vmin.f32 %v2563, %v2564
    %v2566 = vsel %vm249, %v2305, inf
    %v2567 = vmin.f32 %v2565, %v2566
    %v2568 = vsel %vm249, %v2306, inf
    %v2569 = vmin.f32 %v2567, %v2568
    %v2570 = vsel %vm249, %v2307, inf
    %v2571 = vmin.f32 %v2569, %v2570
    %v2572 = vsel %vm249, %v2308, inf
    %v2573 = vmin.f32 %v2571, %v2572
    %v2574 = vsel %vm249, %v2309, inf
    %v2575 = vmin.f32 %v2573, %v2574
    %v2576 = vsel %vm249, %v2310, inf
    %v2577 = vmin.f32 %v2575, %v2576
    %v2578 = vsel %vm249, %v2311, inf
    %v2579 = vmin.f32 %v2577, %v2578
    %v2580 = vsel %vm249, %v2312, inf
    %v2581 = vmin.f32 %v2579, %v2580
    %v2582 = vrot.slane %v2581, 4
    %v2583 = vmin.f32 %v2581, %v2582
    %v2584 = vrot.slane %v2583, 2
    %v2585 = vmin.f32 %v2583, %v2584
    %v2586 = vrot.slane %v2585, 1
    %v2587 = vmin.f32 %v2585, %v2586
    %v2588 = vsel %vm249, %v2313, inf
    %v2589 = vsel %vm249, %v2314, inf
    %v2590 = vmin.f32 %v2588, %v2589
    %v2591 = vsel %vm249, %v2315, inf
    %v2592 = vmin.f32 %v2590, %v2591
    %v2593 = vsel %vm249, %v2316, inf
    %v2594 = vmin.f32 %v2592, %v2593
    %v2595 = vsel %vm249, %v2317, inf
    %v2596 = vmin.f32 %v2594, %v2595
    %v2597 = vsel %vm249, %v2318, inf
    %v2598 = vmin.f32 %v2596, %v2597
    %v2599 = vsel %vm249, %v2319, inf
    %v2600 = vmin.f32 %v2598, %v2599
    %v2601 = vsel %vm249, %v2320, inf
    %v2602 = vmin.f32 %v2600, %v2601
    %v2603 = vsel %vm249, %v2321, inf
    %v2604 = vmin.f32 %v2602, %v2603
    %v2605 = vsel %vm249, %v2322, inf
    %v2606 = vmin.f32 %v2604, %v2605
    %v2607 = vsel %vm249, %v2323, inf
    %v2608 = vmin.f32 %v2606, %v2607
    %v2609 = vsel %vm249, %v2324, inf
    %v2610 = vmin.f32 %v2608, %v2609
    %v2611 = vsel %vm249, %v2325, inf
    %v2612 = vmin.f32 %v2610, %v2611
    %v2613 = vsel %vm249, %v2326, inf
    %v2614 = vmin.f32 %v2612, %v2613
    %v2615 = vsel %vm249, %v2327, inf
    %v2616 = vmin.f32 %v2614, %v2615
    %v2617 = vsel %vm249, %v2328, inf
    %v2618 = vmin.f32 %v2616, %v2617
    %v2619 = vrot.slane %v2618, 4
    %v2620 = vmin.f32 %v2618, %v2619
    %v2621 = vrot.slane %v2620, 2
    %v2622 = vmin.f32 %v2620, %v2621
    %v2623 = vrot.slane %v2622, 1
    %v2624 = vmin.f32 %v2622, %v2623
    %v2633 = vsel %vm2183, %v2402, %v2365
    %v2634 = vsel %vm2185, %v2439, %v2633
    %v2635 = vsel %vm2187, %v2476, %v2634
    %v2636 = vsel %vm2189, %v2513, %v2635
    %v2637 = vsel %vm2191, %v2550, %v2636
    %v2638 = vsel %vm2193, %v2587, %v2637
    %v2639 = vsel %vm2195, %v2624, %v2638
    %v2641 = vmin.f32 %v2200, %v2639
    %2642 = vst.msk [vmem:[#allocation3] sm:$0xff] %vm249, %v2641
    // Predicated region
    $region70: #{tpu_custom_call.1} parent=1 // pred_check
      %p2643 = pneg %p54
    $region71: #{tpu_custom_call.1} parent=1 // pred_check_branch
      %2645 = sbr.rel (%p2643) target = $region73
    $region72: #{tpu_custom_call.1} parent=1 // pred_region
      %v2646 = vld [vmem:[%s4] sm:$0xff]
      %v2647 = vld [vmem:[#allocation2] sm:$0xff]
      %2649 = vset.pattern.permute.xlu0 0
      %2650 = vperm.xlu0 %2649, %v2646
      %v2651 = vpop.permute.xlu0 %2650
      %v2653 = vrcp.pop %v2651
      %v2654 = vmul.f32 %v2647, %v2653
      %v2655 = vmul.f32 %v2654, %v2654
      %2657 = vrot.lane.b32.xlu0 %v2655, 8
      %v2658 = vpop.permute.xlu0 %2657
      %v2660 = vsub.f32 %v2654, %v2658
      %v2661 = vmax.f32 %v2660, 0.0
      %v2662 = vadd.f32 %v2661, 1e-05
      %v2663 = vrsqrt.pop %v2662
      %v2664 = vmul.f32 %v2662, %v2663
      %vm2665 = vcmp.eq.f32.partialorder %v2662, inf
      %v2666 = vsel %vm2665, %v2662, %v2664
      %vm2667 = vcmp.eq.f32.partialorder %v2662, 0.0
      %v2668 = vand.u32 %v2662, 2147483648
      %v2669 = vsel %vm2667, %v2668, %v2666
      %v2670 = vld [vmem:[#allocation3] sm:$0xff]
      %v2671 = vld [vmem:[#allocation4] sm:$0xff]
      %2673 = vrot.lane.b32.xlu0 %v2670, 8
      %v2674 = vpop.permute.xlu0 %2673
      %2677 = vrot.lane.b32.xlu0 %v2671, 16
      %v2678 = vpop.permute.xlu0 %2677
      %2681 = vrot.lane.b32.xlu0 %v2669, 16
      %v2682 = vpop.permute.xlu0 %2681
      %v2684 = vsel %vm249, %v2654, %v2674
      %v2685 = vsel %vm828, %v2684, %v2678
      %vm2686 = vcmask 195584
      %v2687 = vsel %vm2686, %v2685, %v2682
      %v2688 = vadd.f32 %v2646, 1.0
      %v2689 = vlog2.pop %v2688
      %v2690 = vmul.f32 %v2689, 0.6931472
      %v2691 = vmul.f32 %v2690, 0.8048592
      %v2692 = vrcp.pop %v2690
      %v2693 = vmul.f32 1.2424533, %v2692
      %v2694 = vld [vmem:[%s0] sm:$0xff]
      %2696 = vset.pattern.permute.xlu0 0
      %2697 = vperm.xlu0 %2696, %v2691
      %v2698 = vpop.permute.xlu0 %2697
      %v2700 = vmul.f32 %v2687, %v2698
      %2702 = vset.pattern.permute.xlu0 0
      %2703 = vperm.xlu0 %2702, %v2693
      %v2704 = vpop.permute.xlu0 %2703
      %v2706 = vmul.f32 %v2687, %v2704
      %2708 = vrot.lane.b32.xlu0 %v2687, 8
      %v2709 = vpop.permute.xlu0 %2708
      %2712 = vrot.lane.b32.xlu0 %v2700, 40
      %v2713 = vpop.permute.xlu0 %2712
      %2716 = vrot.lane.b32.xlu0 %v2706, 72
      %v2717 = vpop.permute.xlu0 %2716
      %v2719 = vsel %vm249, %v2694, %v2709
      %vm2720 = vcmask 326656
      %v2721 = vsel %vm2720, %v2719, %v2713
      %vm2722 = vcmask 588800
      %v2723 = vsel %vm2722, %v2721, %v2717
      %v2724 = vld [vmem:[%s8] sm:$0xff]
      %v2725 = vld [vmem:[%s8 + $0x8] sm:$0xff]
      %v2726 = vld [vmem:[%s8 + $0x10] sm:$0xff]
      %v2727 = vld [vmem:[%s8 + $0x18] sm:$0xff]
      %v2728 = vld [vmem:[%s8 + $0x20] sm:$0xff]
      %v2729 = vld [vmem:[%s8 + $0x28] sm:$0xff]
      %v2730 = vld [vmem:[%s8 + $0x30] sm:$0xff]
      %v2731 = vld [vmem:[%s8 + $0x38] sm:$0xff]
      %v2732 = vld [vmem:[%s8 + $0x40] sm:$0xff]
      %v2733 = vld [vmem:[%s8 + $0x48] sm:$0xff]
      %v2734 = vld [vmem:[%s8 + $0x50] sm:$0xff]
      %v2735 = vld [vmem:[%s8 + $0x58] sm:$0xff]
      %v2736 = vld [vmem:[%s8 + $0x60] sm:$0xff]
      %v2737 = vld [vmem:[%s9] sm:$0x1]
      %v2739 = vlaneseq
      %v2740 = vshrl.u32 %v2739, 7
      %v2741 = vsub.s32 0, %v2740
      %v2742 = vrot.slane %v2737, %v2741
      %vm2744 = vcmask 850944
      %v2746 = vsel %vm2744, %v2723, 0
      %2748 = vmatprep.subr.mxu0 0.0
      %2749 = vmatpush1.msra.mxu0 %v2724
      %2750 = vmatprep.subr.mxu0 0.0
      %2751 = vmatpush1.msra.mxu0 %v2725
      %2752 = vmatprep.subr.mxu0 0.0
      %2753 = vmatpush1.msra.mxu0 %v2726
      %2754 = vmatprep.subr.mxu0 0.0
      %2755 = vmatpush1.msra.mxu0 %v2727
      %2756 = vmatprep.subr.mxu0 0.0
      %2757 = vmatpush1.msra.mxu0 %v2728
      %2758 = vmatprep.subr.mxu0 0.0
      %2759 = vmatpush1.msra.mxu0 %v2729
      %2760 = vmatprep.subr.mxu0 0.0
      %2761 = vmatpush1.msra.mxu0 %v2730
      %2762 = vmatprep.subr.mxu0 0.0
      %2763 = vmatpush1.msra.mxu0 %v2731
      %2764 = vmatprep.subr.mxu0 0.0
      %2765 = vmatpush1.msra.mxu0 %v2732
      %2766 = vmatprep.subr.mxu0 0.0
      %2767 = vmatpush1.msra.mxu0 %v2733
      %2768 = vmatprep.subr.mxu0 0.0
      %2769 = vmatpush1.msra.mxu0 %v2734
      %2770 = vmatprep.subr.mxu0 0.0
      %2771 = vmatpush1.msra.mxu0 %v2735
      %2772 = vmatprep.subr.mxu0 0.0
      %2773 = vmatpush1.msra.mxu0 %v2736
      %2774 = vmatprep.subr.mxu0 0.0
      %2775 = vmatpush1.msra.mxu0 0.0
      %2776 = vmatprep.subr.mxu0 0.0
      %2777 = vmatpush1.msra.mxu0 0.0
      %2778 = vmatprep.subr.mxu0 0.0
      %2779 = vmatpush1.msra.mxu0 0.0
      %2780 = vmatprep.subr.mxu0 0.0
      %2781 = vmatpush1.msra.mxu0 0.0
      %2782 = vmatprep.subr.mxu0 0.0
      %2783 = vmatpush1.msra.mxu0 0.0
      %2784 = vmatprep.subr.mxu0 0.0
      %2785 = vmatpush1.msra.mxu0 0.0
      %2786 = vmatprep.subr.mxu0 0.0
      %2787 = vmatpush1.msra.mxu0 0.0
      %2788 = vmatprep.subr.mxu0 0.0
      %2789 = vmatpush1.msra.mxu0 0.0
      %2790 = vmatprep.subr.mxu0 0.0
      %2791 = vmatpush1.msra.mxu0 0.0
      %2792 = vmatprep.subr.mxu0 0.0
      %2793 = vmatpush1.msra.mxu0 0.0
      %2794 = vmatprep.subr.mxu0 0.0
      %2795 = vmatpush1.msra.mxu0 0.0
      %2796 = vmatprep.subr.mxu0 0.0
      %2797 = vmatpush1.msra.mxu0 0.0
      %2798 = vmatprep.subr.mxu0 0.0
      %2799 = vmatpush1.msra.mxu0 0.0
      %2800 = vmatprep.subr.mxu0 0.0
      %2801 = vmatpush1.msra.mxu0 0.0
      %2802 = vmatprep.subr.mxu0 0.0
      %2803 = vmatpush1.msra.mxu0 0.0
      %2804 = vmatprep.subr.mxu0 0.0
      %2805 = vmatpush1.msra.mxu0 0.0
      %2806 = vmatprep.subr.mxu0 0.0
      %2807 = vmatpush1.msra.mxu0 0.0
      %2808 = vmatprep.subr.mxu0 0.0
      %2809 = vmatpush1.msra.mxu0 0.0
      %2810 = vmatprep.subr.mxu0 0.0
      %2811 = vmatpush1.msra.mxu0 0.0
      %2812 = vmatprep.mubr.f32.mxu0 0.0
      %2813 = vmatmul.mubr.f32.gmra.mrb[0].mxu0 %v2746
      %v2814 = vpop.f32.mrb[0].mxu0
      %v2815 = vadd.f32 %v2742, %v2814
      %v2816 = vpop.f32.mrb[0].mxu0
      %2817 = vdwg.mxu0
      %v2818 = vld [vmem:[%s10] sm:$0xff]
      %v2819 = vld [vmem:[%s10 + $0x8] sm:$0xff]
      %v2820 = vld [vmem:[%s10 + $0x10] sm:$0xf]
      %v2821 = vld [vmem:[%s11] sm:$0x1]
      %v2823 = vlaneseq
      %v2824 = vshrl.u32 %v2823, 7
      %v2825 = vsub.s32 0, %v2824
      %v2826 = vrot.slane %v2821, %v2825
      %vm2828 = vcmask 162816
      %v2830 = vsel %vm2828, %v2815, 0
      %vm2832 = vcmask 1043456
      %v2834 = vsel %vm2832, %v2820, 0
      %2836 = vmatprep.subr.mxu0 0.0
      %2837 = vmatpush1.msra.mxu0 %v2818
      %2838 = vmatprep.subr.mxu0 0.0
      %2839 = vmatpush1.msra.mxu0 %v2819
      %2840 = vmatprep.subr.mxu0 0.0
      %2841 = vmatpush1.msra.mxu0 %v2834
      %2842 = vmatprep.subr.mxu0 0.0
      %2843 = vmatpush1.msra.mxu0 0.0
      %2844 = vmatprep.subr.mxu0 0.0
      %2845 = vmatpush1.msra.mxu0 0.0
      %2846 = vmatprep.subr.mxu0 0.0
      %2847 = vmatpush1.msra.mxu0 0.0
      %2848 = vmatprep.subr.mxu0 0.0
      %2849 = vmatpush1.msra.mxu0 0.0
      %2850 = vmatprep.subr.mxu0 0.0
      %2851 = vmatpush1.msra.mxu0 0.0
      %2852 = vmatprep.subr.mxu0 0.0
      %2853 = vmatpush1.msra.mxu0 0.0
      %2854 = vmatprep.subr.mxu0 0.0
      %2855 = vmatpush1.msra.mxu0 0.0
      %2856 = vmatprep.subr.mxu0 0.0
      %2857 = vmatpush1.msra.mxu0 0.0
      %2858 = vmatprep.subr.mxu0 0.0
      %2859 = vmatpush1.msra.mxu0 0.0
      %2860 = vmatprep.subr.mxu0 0.0
      %2861 = vmatpush1.msra.mxu0 0.0
      %2862 = vmatprep.subr.mxu0 0.0
      %2863 = vmatpush1.msra.mxu0 0.0
      %2864 = vmatprep.subr.mxu0 0.0
      %2865 = vmatpush1.msra.mxu0 0.0
      %2866 = vmatprep.subr.mxu0 0.0
      %2867 = vmatpush1.msra.mxu0 0.0
      %2868 = vmatprep.subr.mxu0 0.0
      %2869 = vmatpush1.msra.mxu0 0.0
      %2870 = vmatprep.subr.mxu0 0.0
      %2871 = vmatpush1.msra.mxu0 0.0
      %2872 = vmatprep.subr.mxu0 0.0
      %2873 = vmatpush1.msra.mxu0 0.0
      %2874 = vmatprep.subr.mxu0 0.0
      %2875 = vmatpush1.msra.mxu0 0.0
      %2876 = vmatprep.subr.mxu0 0.0
      %2877 = vmatpush1.msra.mxu0 0.0
      %2878 = vmatprep.subr.mxu0 0.0
      %2879 = vmatpush1.msra.mxu0 0.0
      %2880 = vmatprep.subr.mxu0 0.0
      %2881 = vmatpush1.msra.mxu0 0.0
      %2882 = vmatprep.subr.mxu0 0.0
      %2883 = vmatpush1.msra.mxu0 0.0
      %2884 = vmatprep.subr.mxu0 0.0
      %2885 = vmatpush1.msra.mxu0 0.0
      %2886 = vmatprep.subr.mxu0 0.0
      %2887 = vmatpush1.msra.mxu0 0.0
      %2888 = vmatprep.subr.mxu0 0.0
      %2889 = vmatpush1.msra.mxu0 0.0
      %2890 = vmatprep.subr.mxu0 0.0
      %2891 = vmatpush1.msra.mxu0 0.0
      %2892 = vmatprep.subr.mxu0 0.0
      %2893 = vmatpush1.msra.mxu0 0.0
      %2894 = vmatprep.subr.mxu0 0.0
      %2895 = vmatpush1.msra.mxu0 0.0
      %2896 = vmatprep.subr.mxu0 0.0
      %2897 = vmatpush1.msra.mxu0 0.0
      %2898 = vmatprep.subr.mxu0 0.0
      %2899 = vmatpush1.msra.mxu0 0.0
      %2900 = vmatprep.mubr.f32.mxu0 0.0
      %2901 = vmatmul.mubr.f32.gmra.mrb[0].mxu0 %v2830
      %v2902 = vpop.f32.mrb[0].mxu0
      %v2903 = vadd.f32 %v2826, %v2902
      %v2904 = vpop.f32.mrb[0].mxu0
      %2905 = vdwg.mxu0
      %2907 = vrot.lane.b32.xlu0 %v2903, 8
      %v2908 = vpop.permute.xlu0 %2907
      %v2910 = vsel %vm249, %v2694, %v2908
      %v2911 = vld [vmem:[%s12] sm:$0xff]
      %v2912 = vld [vmem:[%s12 + $0x8] sm:$0xff]
      %v2913 = vld [vmem:[%s12 + $0x10] sm:$0xff]
      %v2914 = vld [vmem:[%s12 + $0x18] sm:$0xf]
      %v2915 = vld [vmem:[%s13] sm:$0x1]
      %v2917 = vlaneseq
      %v2918 = vshrl.u32 %v2917, 7
      %v2919 = vsub.s32 0, %v2918
      %v2920 = vrot.slane %v2915, %v2919
      %vm2922 = vcmask 228352
      %v2924 = vsel %vm2922, %v2910, 0
      %v2927 = vsel %vm2832, %v2914, 0
      %2929 = vmatprep.subr.mxu0 0.0
      %2930 = vmatpush1.msra.mxu0 %v2911
      %2931 = vmatprep.subr.mxu0 0.0
      %2932 = vmatpush1.msra.mxu0 %v2912
      %2933 = vmatprep.subr.mxu0 0.0
      %2934 = vmatpush1.msra.mxu0 %v2913
      %2935 = vmatprep.subr.mxu0 0.0
      %2936 = vmatpush1.msra.mxu0 %v2927
      %2937 = vmatprep.subr.mxu0 0.0
      %2938 = vmatpush1.msra.mxu0 0.0
      %2939 = vmatprep.subr.mxu0 0.0
      %2940 = vmatpush1.msra.mxu0 0.0
      %2941 = vmatprep.subr.mxu0 0.0
      %2942 = vmatpush1.msra.mxu0 0.0
      %2943 = vmatprep.subr.mxu0 0.0
      %2944 = vmatpush1.msra.mxu0 0.0
      %2945 = vmatprep.subr.mxu0 0.0
      %2946 = vmatpush1.msra.mxu0 0.0
      %2947 = vmatprep.subr.mxu0 0.0
      %2948 = vmatpush1.msra.mxu0 0.0
      %2949 = vmatprep.subr.mxu0 0.0
      %2950 = vmatpush1.msra.mxu0 0.0
      %2951 = vmatprep.subr.mxu0 0.0
      %2952 = vmatpush1.msra.mxu0 0.0
      %2953 = vmatprep.subr.mxu0 0.0
      %2954 = vmatpush1.msra.mxu0 0.0
      %2955 = vmatprep.subr.mxu0 0.0
      %2956 = vmatpush1.msra.mxu0 0.0
      %2957 = vmatprep.subr.mxu0 0.0
      %2958 = vmatpush1.msra.mxu0 0.0
      %2959 = vmatprep.subr.mxu0 0.0
      %2960 = vmatpush1.msra.mxu0 0.0
      %2961 = vmatprep.subr.mxu0 0.0
      %2962 = vmatpush1.msra.mxu0 0.0
      %2963 = vmatprep.subr.mxu0 0.0
      %2964 = vmatpush1.msra.mxu0 0.0
      %2965 = vmatprep.subr.mxu0 0.0
      %2966 = vmatpush1.msra.mxu0 0.0
      %2967 = vmatprep.subr.mxu0 0.0
      %2968 = vmatpush1.msra.mxu0 0.0
      %2969 = vmatprep.subr.mxu0 0.0
      %2970 = vmatpush1.msra.mxu0 0.0
      %2971 = vmatprep.subr.mxu0 0.0
      %2972 = vmatpush1.msra.mxu0 0.0
      %2973 = vmatprep.subr.mxu0 0.0
      %2974 = vmatpush1.msra.mxu0 0.0
      %2975 = vmatprep.subr.mxu0 0.0
      %2976 = vmatpush1.msra.mxu0 0.0
      %2977 = vmatprep.subr.mxu0 0.0
      %2978 = vmatpush1.msra.mxu0 0.0
      %2979 = vmatprep.subr.mxu0 0.0
      %2980 = vmatpush1.msra.mxu0 0.0
      %2981 = vmatprep.subr.mxu0 0.0
      %2982 = vmatpush1.msra.mxu0 0.0
      %2983 = vmatprep.subr.mxu0 0.0
      %2984 = vmatpush1.msra.mxu0 0.0
      %2985 = vmatprep.subr.mxu0 0.0
      %2986 = vmatpush1.msra.mxu0 0.0
      %2987 = vmatprep.subr.mxu0 0.0
      %2988 = vmatpush1.msra.mxu0 0.0
      %2989 = vmatprep.subr.mxu0 0.0
      %2990 = vmatpush1.msra.mxu0 0.0
      %2991 = vmatprep.subr.mxu0 0.0
      %2992 = vmatpush1.msra.mxu0 0.0
      %2993 = vmatprep.mubr.f32.mxu0 0.0
      %2994 = vmatmul.mubr.f32.gmra.mrb[0].mxu0 %v2924
      %v2995 = vpop.f32.mrb[0].mxu0
      %v2996 = vadd.f32 %v2920, %v2995
      %v2997 = vpop.f32.mrb[0].mxu0
      %2998 = vdwg.mxu0
      %3000 = vrot.lane.b32.xlu0 %v2996, 68
      %v3001 = vpop.permute.xlu0 %3000
      %v3003 = vadd.f32 %v2996, %v3001
      %v3004 = vxor.u32 %v3003, 2147483648
      %v3005 = vmul.f32 %v3004, 1.442695
      %v3006 = vpow.pop %v3005
      %v3007 = vadd.f32 %v3006, 1.0
      %v3008 = vrcp.pop %v3007
      %v3009 = vmul.f32 1.0, %v3008
      %3010 = vrot.lane.b32.xlu0 %v2996, 28
      %v3011 = vpop.permute.xlu0 %3010
      %v3013 = vmul.f32 %v3009, %v3011
      %3015 = vrot.lane.b32.xlu0 %v3013, 40
      %v3016 = vpop.permute.xlu0 %3015
      %v3018 = vadd.f32 %v2996, %v3016
      %v3019 = vtanh.pop %v3018
      %v3020 = vsub.f32 1.0, %v3009
      %3022 = vrot.lane.b32.xlu0 %v3019, 108
      %v3023 = vpop.permute.xlu0 %3022
      %v3025 = vmul.f32 %v3020, %v3023
      %3026 = vrot.lane.b32.xlu0 %v2903, 20
      %v3027 = vpop.permute.xlu0 %3026
      %v3029 = vmul.f32 %v3009, %v3027
      %v3030 = vadd.f32 %v3025, %v3029
      %vm3031 = vcmask 326816
      %v3032 = vsel %vm3031, %v3030, 0.0
      %v3033 = vrot.slane %v3032, 4
      %v3034 = vadd.f32 %v3032, %v3033
      %v3035 = vrot.slane %v3034, 2
      %v3036 = vadd.f32 %v3034, %v3035
      %v3037 = vrot.slane %v3036, 1
      %v3038 = vadd.f32 %v3036, %v3037
      %v3039 = vrcp.pop 8.0
      %v3040 = vmul.f32 %v3038, %v3039
      %v3041 = vsub.f32 %v3030, %v3040
      %v3042 = vmul.f32 %v3041, %v3041
      %v3043 = vsel %vm3031, %v3042, 0.0
      %v3044 = vrot.slane %v3043, 4
      %v3045 = vadd.f32 %v3043, %v3044
      %v3046 = vrot.slane %v3045, 2
      %v3047 = vadd.f32 %v3045, %v3046
      %v3048 = vrot.slane %v3047, 1
      %v3049 = vadd.f32 %v3047, %v3048
      %v3050 = vmul.f32 %v3049, %v3039
      %v3051 = vadd.f32 %v3050, 1e-05
      %v3052 = vrsqrt.pop %v3051
      %v3053 = vmul.f32 %v3041, %v3052
      %v3054 = vld [vmem:[%s14] sm:$0x1]
      %v3056 = vlaneseq
      %v3057 = vshrl.u32 %v3056, 7
      %v3058 = vsub.s32 0, %v3057
      %v3059 = vrot.slane %v3054, %v3058
      %3060 = vrot.lane.b32.xlu0 %v3059, 20
      %v3061 = vpop.permute.xlu0 %3060
      %v3063 = vmul.f32 %v3053, %v3061
      %v3064 = vld [vmem:[%s15] sm:$0x1]
      %v3066 = vlaneseq
      %v3067 = vshrl.u32 %v3066, 7
      %v3068 = vsub.s32 0, %v3067
      %v3069 = vrot.slane %v3064, %v3068
      %3070 = vrot.lane.b32.xlu0 %v3069, 20
      %v3071 = vpop.permute.xlu0 %3070
      %v3073 = vadd.f32 %v3063, %v3071
      %v3074 = vmax.f32 %v3073, 0.0
      %3076 = vrot.lane.b32.xlu0 %v3074, 108
      %v3077 = vpop.permute.xlu0 %3076
      %3079 = vst.msk [vmem:[#allocation7] sm:$0xff] %vm2828, %v3077
    $region73: #{tpu_custom_call.1} parent=1 // pred_fallthru
      _
    // Predicated region
    $region74: #{tpu_custom_call.1} parent=1 // pred_check
      _
    $region75: #{tpu_custom_call.1} parent=1 // pred_check_branch
      %3081 = sbr.rel (0) target = $region77
    $region76: #{tpu_custom_call.1} parent=1 // pred_region
      %s3083 = ssub.s32 128, 128
      %3084 = vsyncadd [#allocation8], %s3083
      %s3086 = sshll.u32 [#allocation7], 4
      %s3087 = int_to_ptr.vmem [resolvable:$true] %s3086
      %3089 = dma.vmem_to_hbm [thread:$0]  %s3087, 128, %s16, [#allocation8]
    $region77: #{tpu_custom_call.1} parent=1 // pred_fallthru
      _
    // Predicated region
    $region78: #{tpu_custom_call.1} parent=1 // pred_check
      _
    $region79: #{tpu_custom_call.1} parent=1 // pred_check_branch
      %3091 = sbr.rel (0) target = $region81
    $region80: #{tpu_custom_call.1} parent=1 // pred_region
      %3092 = dma.done [#allocation8], 128
    $region81: #{tpu_custom_call.1} parent=1 // pred_fallthru
      _
    %3093 = vsyncpa [#allocation8], 1

</llo_original>
